<compile_context>
chip_gen: v7x
topology: tpu7x:2x2x1
jax: 0.10.0
libtpu: 0.0.40
codegen_flags: <defaults>
</compile_context>

<pallas_src>
import functools

import jax
import jax.numpy as jnp
from jax.experimental import pallas as pl
from jax.experimental.pallas import tpu as pltpu

_EPS = 1e-5          # PyTorch GroupNorm default eps
_NUM_GROUPS = 32     # nn.GroupNorm(32, in_channels)


def _group_stats_to_channels(s, sq, C, gs):
    """Per-channel sums -> per-group sums broadcast back per channel (only traced for gs > 1)."""
    f32 = jnp.float32
    ch = jax.lax.broadcasted_iota(jnp.int32, (C, _NUM_GROUPS), 0)
    gi = jax.lax.broadcasted_iota(jnp.int32, (C, _NUM_GROUPS), 1)
    m_cg = ((gi * gs <= ch) & (ch < (gi + 1) * gs)).astype(f32)       # (C, G)
    ch2 = jax.lax.broadcasted_iota(jnp.int32, (_NUM_GROUPS, C), 1)
    gi2 = jax.lax.broadcasted_iota(jnp.int32, (_NUM_GROUPS, C), 0)
    m_gc = ((gi2 * gs <= ch2) & (ch2 < (gi2 + 1) * gs)).astype(f32)   # (G, C)
    s = jnp.dot(jnp.dot(s, m_cg, preferred_element_type=f32), m_gc, preferred_element_type=f32)
    sq = jnp.dot(jnp.dot(sq, m_cg, preferred_element_type=f32), m_gc, preferred_element_type=f32)
    return s, sq


def _upblock_kernel(lhs1_ref, res_ref, w_ref, vec_ref, out_ref,
                    act2_scr, act3_scr, stg_scr,
                    *, C, gs, Wi, S, M2, M3, BN, counts):
    f32 = jnp.float32
    bf16 = jnp.bfloat16

    def vrow(i):
        # packed bias/gamma/beta rows: (1, C) f32
        return vec_ref[pl.ds(i, 1), :]

    def col_mask(M, limit):
        # 1.0 where the raster column (x = r % Wi) is a valid conv-output column; rows r < M
        # already satisfy the y constraint by construction.  Built in-kernel (no DMA'd mask).
        r = jax.lax.broadcasted_iota(jnp.int32, (M, C), 0)
        return ((r % Wi) < limit).astype(f32)

    def relu_groupnorm(y, gamma, beta, mask, count):
        y = jnp.maximum(y, 0.0)                               # ReLU (f32)
        ym = y if mask is None else y * mask                  # drop invalid border positions
        s = jnp.sum(ym, axis=0, keepdims=True)                # (1, C) per-channel sums
        sq = jnp.sum(ym * ym, axis=0, keepdims=True)
        if gs > 1:                                            # general grouped case (untraced for C=32)
            s, sq = _group_stats_to_channels(s, sq, C, gs)
        inv_n = 1.0 / count
        mean = s * inv_n
        var = jnp.maximum(sq * inv_n - mean * mean, 0.0)      # clamp tiny negative rounding
        inv = jax.lax.rsqrt(var + _EPS)                       # EUP
        return (y - mean) * (inv * gamma) + beta

    def store_shifted(dst, act_f32, rows):
        # dst[:, k*C:(k+1)*C] = act shifted up by k raster rows (k = 0, 1, 2), cast to bf16.
        # The two shift-by-{1,2} relayouts happen ONCE per stage as misaligned f32 ref reads
        # from the staging scratch (aligned store + zeroed 8-row tail keeps everything finite).
        stg_scr[pl.ds(0, rows), :] = act_f32
        stg_scr[pl.ds(rows, 8), :] = jnp.zeros((8, C), f32)
        dst[:, pl.ds(0, C)] = act_f32.astype(bf16)
        dst[:, pl.ds(C, C)] = stg_scr[pl.ds(1, rows), :].astype(bf16)
        dst[:, pl.ds(2 * C, C)] = stg_scr[pl.ds(2, rows), :].astype(bf16)

    def conv3x3(src, w_off, bias, M):
        # valid 3x3 conv: 3 accumulated (M, 3C) @ (3C, C) bf16 matmuls, reads at aligned
        # row offsets {0, Wi, 2*Wi}.  (Single deep contraction would keep partials in the
        # v7x MRB, but 3 taps + f32 adds is already cheap and portable.)
        acc = jnp.zeros((M, C), f32)
        for dy in range(3):
            a = src[pl.ds(dy * Wi, M), :]                            # (M, 3C) bf16
            w = w_ref[pl.ds(w_off + dy * 3 * C, 3 * C), :]           # (3C, C) bf16
            acc = acc + jnp.dot(a, w, preferred_element_type=f32)
        return acc + bias                                            # bias added once

    for b in range(BN):                      # BN samples per grid step (batch blocking)
        # ---- stage 1: ConvTranspose2d(k=2,s=2) + ReLU + GroupNorm, then + cropped(down) ----
        y1 = jnp.dot(lhs1_ref[b], w_ref[pl.ds(0, 4 * C), :],
                     preferred_element_type=f32) + vrow(0)
        o1 = relu_groupnorm(y1, vrow(1), vrow(2), None, counts[0]) + res_ref[b]
        store_shifted(act2_scr, o1, S)

        # ---- stage 2: Conv2d(3x3, valid) + ReLU + GroupNorm (stats over valid region) ----
        o2 = relu_groupnorm(conv3x3(act2_scr, 4 * C, vrow(3), M2),
                            vrow(4), vrow(5), col_mask(M2, Wi - 2), counts[1])
        store_shifted(act3_scr, o2, M2)

        # ---- stage 3: Conv2d(3x3, valid) + ReLU + GroupNorm ----
        o3 = relu_groupnorm(conv3x3(act3_scr, 13 * C, vrow(6), M3),
                            vrow(7), vrow(8), col_mask(M3, Wi - 4), counts[2])
        out_ref[b] = o3


def _crop(tensor, crop_height, crop_width):
    # Exact reproduction of the reference crop_tensor (including its swapped use of
    # crop_height / crop_width in the offset math; identical results for square crops).
    _, _, tensor_height, tensor_width = tensor.shape
    left = (tensor_width - crop_height) // 2
    top = (tensor_height - crop_width) // 2
    right = left + crop_width
    bottom = top + crop_height
    return tensor[:, :, top:bottom, left:right]


def up_block_forward(x_nchw, down_nchw, params):
    N, C, H, W = x_nchw.shape
    assert C % _NUM_GROUPS == 0
    gs = C // _NUM_GROUPS
    Hi, Wi = 2 * H, 2 * W
    S = Hi * Wi
    M2 = (Hi - 2) * Wi           # stage-2 conv rows that can ever be valid
    M3 = (Hi - 4) * Wi           # stage-3 conv rows that can ever be valid
    bf16, f32 = jnp.bfloat16, jnp.float32

    # Samples per grid step: amortize per-step pipeline overhead (serial grid on v5e/v6e)
    # while keeping a >=2-step "parallel" grid so both v7x TensorCores get work.
    BN = 1
    for cand in (4, 3, 2):
        if N % cand == 0 and N // cand >= 2:
            BN = cand
            break

    # Stage-1 LHS: zero-slabbed "upsample" layout so the ConvTranspose output lands directly
    # in flat raster order:  lhs[(2i+a)*Wi + 2j+b, (2a+b)*C + c] = x[i, j, c].
    x_nhwc = jnp.transpose(x_nchw, (0, 2, 3, 1))
    row_halves = []
    for a in range(2):
        col_halves = []
        for b in range(2):
            k = 2 * a + b
            col_halves.append(jnp.pad(x_nhwc, ((0, 0), (0, 0), (0, 0), (k * C, (3 - k) * C))))
        row_halves.append(jnp.stack(col_halves, axis=3).reshape(N, H, Wi, 4 * C))
    lhs1 = jnp.stack(row_halves, axis=2).reshape(N, S, 4 * C).astype(bf16)

    # Packed weights: [w1 (4C,C) | w2 (9C,C) | w3 (9C,C)] -> one (22C, C) bf16 input.
    # ConvTranspose2d weight (Cin, Cout, 2, 2) -> (4C, C): row = (2a+b)*C + cin, col = cout.
    # Conv2d weight (Cout, Cin, 3, 3) -> (9C, C): row = (3*dy+dx)*C + cin (matches dx-folded K).
    w1 = jnp.transpose(params["wt"], (2, 3, 0, 1)).reshape(4 * C, C)
    w2 = jnp.transpose(params["w2"], (2, 3, 1, 0)).reshape(9 * C, C)
    w3 = jnp.transpose(params["w3"], (2, 3, 1, 0)).reshape(9 * C, C)
    wpack = jnp.concatenate([w1, w2, w3], axis=0).astype(bf16)

    # Packed bias/gamma/beta vectors -> one (9, C) f32 input.
    vecs = jnp.stack([params["bt"], params["g1"], params["be1"],
                      params["b2"], params["g2"], params["be2"],
                      params["b3"], params["g3"], params["be3"]], axis=0).astype(f32)

    # Residual: crop(down_out) to the stage-1 spatial size, flat raster NHWC layout.
    cropped = _crop(down_nchw, Hi, Wi)
    res = jnp.transpose(cropped, (0, 2, 3, 1)).reshape(N, S, C).astype(f32)

    counts = (float(S * gs),
              float((Hi - 2) * (Wi - 2) * gs),
              float((Hi - 4) * (Wi - 4) * gs))

    kernel = functools.partial(_upblock_kernel, C=C, gs=gs, Wi=Wi, S=S,
                               M2=M2, M3=M3, BN=BN, counts=counts)

    out = pl.pallas_call(
        kernel,
        out_shape=jax.ShapeDtypeStruct((N, M3, C), f32),
        grid_spec=pltpu.PrefetchScalarGridSpec(
            num_scalar_prefetch=0,
            grid=(N // BN,),
            in_specs=[pl.BlockSpec((BN, S, 4 * C), lambda n: (n, 0, 0)),
                      pl.BlockSpec((BN, S, C), lambda n: (n, 0, 0)),
                      pl.BlockSpec((22 * C, C), lambda n: (0, 0)),
                      pl.BlockSpec((9, C), lambda n: (0, 0))],
            out_specs=pl.BlockSpec((BN, M3, C), lambda n: (n, 0, 0)),
            scratch_shapes=[pltpu.VMEM((S, 3 * C), bf16),       # dx-folded stage-2 input
                            pltpu.VMEM((M2, 3 * C), bf16),      # dx-folded stage-3 input
                            pltpu.VMEM((S + 8, C), f32)],       # f32 staging for row shifts
        ),
        compiler_params=pltpu.CompilerParams(dimension_semantics=("parallel",)),
    )(lhs1, res, wpack, vecs)

    # Final crop of the valid 3x3-conv region + back to NCHW (cheap wrapper glue).
    out = out.reshape(N, Hi - 4, Wi, C)[:, :, :Wi - 4, :]
    return jnp.transpose(out, (0, 3, 1, 2))


if __name__ == "__main__":
    key = jax.random.PRNGKey(0)
    C = 32                 # GroupNorm(32, C) requires C % 32 == 0
    N, H, W = 2, 8, 8      # x spatial
    HD, WD = 20, 20        # down_out spatial (>= 2H so the center crop is valid)

    ks = jax.random.split(key, 16)
    params = {
        "wt": 0.1 * jax.random.normal(ks[0], (C, C, 2, 2), jnp.float32),   # ConvTranspose2d weight
        "bt": 0.1 * jax.random.normal(ks[1], (C,), jnp.float32),
        "g1": 1.0 + 0.1 * jax.random.normal(ks[2], (C,), jnp.float32),
        "be1": 0.1 * jax.random.normal(ks[3], (C,), jnp.float32),
        "w2": 0.1 * jax.random.normal(ks[4], (C, C, 3, 3), jnp.float32),   # Conv2d weight (Cout,Cin,3,3)
        "b2": 0.1 * jax.random.normal(ks[5], (C,), jnp.float32),
        "g2": 1.0 + 0.1 * jax.random.normal(ks[6], (C,), jnp.float32),
        "be2": 0.1 * jax.random.normal(ks[7], (C,), jnp.float32),
        "w3": 0.1 * jax.random.normal(ks[8], (C, C, 3, 3), jnp.float32),
        "b3": 0.1 * jax.random.normal(ks[9], (C,), jnp.float32),
        "g3": 1.0 + 0.1 * jax.random.normal(ks[10], (C,), jnp.float32),
        "be3": 0.1 * jax.random.normal(ks[11], (C,), jnp.float32),
    }
    x = jax.random.normal(ks[12], (N, C, H, W), jnp.float32)
    down_out = jax.random.normal(ks[13], (N, C, HD, WD), jnp.float32)

    out = jax.jit(up_block_forward)(x, down_out, params)
    out = jax.block_until_ready(out)
    assert out.shape == (N, C, 2 * H - 4, 2 * W - 4), out.shape
    assert bool(jnp.all(jnp.isfinite(out)))
    print("KERNEL_OK")
</pallas_src>

<mosaic_0001>
module attributes {stable_mosaic.version = 11 : i64} {
  func.func @_upblock_kernel(%arg0: i32, %arg1: memref<1x256x128xbf16, #tpu.memory_space<vmem>>, %arg2: memref<1x256x32xf32, #tpu.memory_space<vmem>>, %arg3: memref<704x32xbf16, #tpu.memory_space<vmem>>, %arg4: memref<9x32xf32, #tpu.memory_space<vmem>>, %arg5: memref<1x192x32xf32, #tpu.memory_space<vmem>>, %arg6: memref<256x96xbf16, #tpu.memory_space<vmem>>, %arg7: memref<224x96xbf16, #tpu.memory_space<vmem>>, %arg8: memref<264x32xf32, #tpu.memory_space<vmem>>) attributes {dimension_semantics = [#tpu.dimension_semantics<parallel>], iteration_bounds = array<i64: 2>, scalar_prefetch = 0 : i64, scratch_operands = 3 : i64, tpu.core_type = #tpu.core_type<tc>, window_params = [{transform_indices = @transform_0, window_bounds = array<i64: 1, 256, 128>}, {transform_indices = @transform_1, window_bounds = array<i64: 1, 256, 32>}, {pipeline_mode = #tpu.pipeline_mode<synchronous>, transform_indices = @transform_2, window_bounds = array<i64: 704, 32>}, {pipeline_mode = #tpu.pipeline_mode<synchronous>, transform_indices = @transform_3, window_bounds = array<i64: 9, 32>}, {transform_indices = @transform_4, window_bounds = array<i64: 1, 192, 32>}]} {
    %c0 = arith.constant 0 : index
    %c0_0 = arith.constant 0 : index
    %c0_1 = arith.constant 0 : index
    %0 = vector.load %arg1[%c0, %c0_0, %c0_1] : memref<1x256x128xbf16, #tpu.memory_space<vmem>>, vector<1x256x128xbf16>
    %1 = vector.shape_cast %0 : vector<1x256x128xbf16> to vector<256x128xbf16>
    %c0_2 = arith.constant 0 : index
    %c0_3 = arith.constant 0 : index
    %2 = vector.load %arg3[%c0_2, %c0_3] : memref<704x32xbf16, #tpu.memory_space<vmem>>, vector<128x32xbf16>
    %cst = arith.constant dense<0.000000e+00> : vector<256x32xf32>
    %3 = tpu.matmul %1, %2, %cst {dimension_numbers = #tpu.dot_dimension_numbers<[1], [0], [0], [1], [0, 0, 1, 1], [], []>} : vector<256x128xbf16>, vector<128x32xbf16>, vector<256x32xf32> -> vector<256x32xf32>
    %c0_4 = arith.constant 0 : index
    %c0_5 = arith.constant 0 : index
    %4 = vector.load %arg4[%c0_4, %c0_5] : memref<9x32xf32, #tpu.memory_space<vmem>>, vector<1x32xf32>
    %5 = vector.broadcast %4 : vector<1x32xf32> to vector<256x32xf32>
    %6 = arith.addf %3, %5 : vector<256x32xf32>
    %c1 = arith.constant 1 : index
    %c0_6 = arith.constant 0 : index
    %7 = vector.load %arg4[%c1, %c0_6] : memref<9x32xf32, #tpu.memory_space<vmem>>, vector<1x32xf32>
    %c2 = arith.constant 2 : index
    %c0_7 = arith.constant 0 : index
    %8 = vector.load %arg4[%c2, %c0_7] : memref<9x32xf32, #tpu.memory_space<vmem>>, vector<1x32xf32>
    %cst_8 = arith.constant 0.000000e+00 : f32
    %9 = vector.broadcast %cst_8 : f32 to vector<256x32xf32>
    %10 = arith.maximumf %6, %9 : vector<256x32xf32>
    %cst_9 = arith.constant dense<0.000000e+00> : vector<32xf32>
    %11 = vector.multi_reduction <add>, %10, %cst_9 [0] : vector<256x32xf32> to vector<32xf32>
    %12 = vector.shape_cast %11 : vector<32xf32> to vector<1x32xf32>
    %13 = arith.mulf %10, %10 : vector<256x32xf32>
    %cst_10 = arith.constant dense<0.000000e+00> : vector<32xf32>
    %14 = vector.multi_reduction <add>, %13, %cst_10 [0] : vector<256x32xf32> to vector<32xf32>
    %15 = vector.shape_cast %14 : vector<32xf32> to vector<1x32xf32>
    %cst_11 = arith.constant 3.906250e-03 : f32
    %16 = vector.broadcast %cst_11 : f32 to vector<1x32xf32>
    %17 = arith.mulf %12, %16 : vector<1x32xf32>
    %cst_12 = arith.constant 3.906250e-03 : f32
    %18 = vector.broadcast %cst_12 : f32 to vector<1x32xf32>
    %19 = arith.mulf %15, %18 : vector<1x32xf32>
    %20 = arith.mulf %17, %17 : vector<1x32xf32>
    %21 = arith.subf %19, %20 : vector<1x32xf32>
    %cst_13 = arith.constant 0.000000e+00 : f32
    %22 = vector.broadcast %cst_13 : f32 to vector<1x32xf32>
    %23 = arith.maximumf %21, %22 : vector<1x32xf32>
    %cst_14 = arith.constant 9.99999974E-6 : f32
    %24 = vector.broadcast %cst_14 : f32 to vector<1x32xf32>
    %25 = arith.addf %23, %24 : vector<1x32xf32>
    %26 = math.rsqrt %25 : vector<1x32xf32>
    %27 = vector.broadcast %17 : vector<1x32xf32> to vector<256x32xf32>
    %28 = arith.subf %10, %27 : vector<256x32xf32>
    %29 = arith.mulf %26, %7 : vector<1x32xf32>
    %30 = vector.broadcast %29 : vector<1x32xf32> to vector<256x32xf32>
    %31 = arith.mulf %28, %30 : vector<256x32xf32>
    %32 = vector.broadcast %8 : vector<1x32xf32> to vector<256x32xf32>
    %33 = arith.addf %31, %32 : vector<256x32xf32>
    %c0_15 = arith.constant 0 : index
    %c0_16 = arith.constant 0 : index
    %c0_17 = arith.constant 0 : index
    %34 = vector.load %arg2[%c0_15, %c0_16, %c0_17] : memref<1x256x32xf32, #tpu.memory_space<vmem>>, vector<1x256x32xf32>
    %35 = vector.shape_cast %34 : vector<1x256x32xf32> to vector<256x32xf32>
    %36 = arith.addf %33, %35 : vector<256x32xf32>
    %c0_18 = arith.constant 0 : index
    %c0_19 = arith.constant 0 : index
    %37 = vector.load %arg8[%c0_18, %c0_19] : memref<264x32xf32, #tpu.memory_space<vmem>>, vector<256x32xf32>
    tpu.vector_store %arg8[%c0_18, %c0_19], %36 {strides = array<i32>} : memref<264x32xf32, #tpu.memory_space<vmem>>, vector<256x32xf32>,
    %cst_20 = arith.constant 0.000000e+00 : f32
    %38 = vector.broadcast %cst_20 : f32 to vector<8x32xf32>
    %c256 = arith.constant 256 : index
    %c0_21 = arith.constant 0 : index
    %39 = vector.load %arg8[%c256, %c0_21] : memref<264x32xf32, #tpu.memory_space<vmem>>, vector<8x32xf32>
    tpu.vector_store %arg8[%c256, %c0_21], %38 {strides = array<i32>} : memref<264x32xf32, #tpu.memory_space<vmem>>, vector<8x32xf32>,
    %40 = arith.truncf %36 : vector<256x32xf32> to vector<256x32xbf16>
    %c0_22 = arith.constant 0 : index
    %c0_23 = arith.constant 0 : index
    %41 = vector.load %arg6[%c0_22, %c0_23] : memref<256x96xbf16, #tpu.memory_space<vmem>>, vector<256x32xbf16>
    tpu.vector_store %arg6[%c0_22, %c0_23], %40 {strides = array<i32>} : memref<256x96xbf16, #tpu.memory_space<vmem>>, vector<256x32xbf16>,
    %c1_24 = arith.constant 1 : index
    %c0_25 = arith.constant 0 : index
    %42 = vector.load %arg8[%c1_24, %c0_25] : memref<264x32xf32, #tpu.memory_space<vmem>>, vector<256x32xf32>
    %43 = arith.truncf %42 : vector<256x32xf32> to vector<256x32xbf16>
    %c0_26 = arith.constant 0 : index
    %c32 = arith.constant 32 : index
    %44 = vector.load %arg6[%c0_26, %c32] : memref<256x96xbf16, #tpu.memory_space<vmem>>, vector<256x32xbf16>
    tpu.vector_store %arg6[%c0_26, %c32], %43 {strides = array<i32>} : memref<256x96xbf16, #tpu.memory_space<vmem>>, vector<256x32xbf16>,
    %c2_27 = arith.constant 2 : index
    %c0_28 = arith.constant 0 : index
    %45 = vector.load %arg8[%c2_27, %c0_28] : memref<264x32xf32, #tpu.memory_space<vmem>>, vector<256x32xf32>
    %46 = arith.truncf %45 : vector<256x32xf32> to vector<256x32xbf16>
    %c0_29 = arith.constant 0 : index
    %c64 = arith.constant 64 : index
    %47 = vector.load %arg6[%c0_29, %c64] : memref<256x96xbf16, #tpu.memory_space<vmem>>, vector<256x32xbf16>
    tpu.vector_store %arg6[%c0_29, %c64], %46 {strides = array<i32>} : memref<256x96xbf16, #tpu.memory_space<vmem>>, vector<256x32xbf16>,
    %c3 = arith.constant 3 : index
    %c0_30 = arith.constant 0 : index
    %48 = vector.load %arg4[%c3, %c0_30] : memref<9x32xf32, #tpu.memory_space<vmem>>, vector<1x32xf32>
    %cst_31 = arith.constant 0.000000e+00 : f32
    %49 = vector.broadcast %cst_31 : f32 to vector<224x32xf32>
    %c0_32 = arith.constant 0 : index
    %c0_33 = arith.constant 0 : index
    %50 = vector.load %arg6[%c0_32, %c0_33] : memref<256x96xbf16, #tpu.memory_space<vmem>>, vector<224x96xbf16>
    %c128 = arith.constant 128 : index
    %c0_34 = arith.constant 0 : index
    %51 = vector.load %arg3[%c128, %c0_34] : memref<704x32xbf16, #tpu.memory_space<vmem>>, vector<96x32xbf16>
    %cst_35 = arith.constant dense<0.000000e+00> : vector<224x32xf32>
    %52 = tpu.matmul %50, %51, %cst_35 {dimension_numbers = #tpu.dot_dimension_numbers<[1], [0], [0], [1], [0, 0, 1, 1], [], []>} : vector<224x96xbf16>, vector<96x32xbf16>, vector<224x32xf32> -> vector<224x32xf32>
    %53 = arith.addf %49, %52 : vector<224x32xf32>
    %c16 = arith.constant 16 : index
    %c0_36 = arith.constant 0 : index
    %54 = vector.load %arg6[%c16, %c0_36] : memref<256x96xbf16, #tpu.memory_space<vmem>>, vector<224x96xbf16>
    %c224 = arith.constant 224 : index
    %c0_37 = arith.constant 0 : index
    %55 = vector.load %arg3[%c224, %c0_37] : memref<704x32xbf16, #tpu.memory_space<vmem>>, vector<96x32xbf16>
    %cst_38 = arith.constant dense<0.000000e+00> : vector<224x32xf32>
    %56 = tpu.matmul %54, %55, %cst_38 {dimension_numbers = #tpu.dot_dimension_numbers<[1], [0], [0], [1], [0, 0, 1, 1], [], []>} : vector<224x96xbf16>, vector<96x32xbf16>, vector<224x32xf32> -> vector<224x32xf32>
    %57 = arith.addf %53, %56 : vector<224x32xf32>
    %c32_39 = arith.constant 32 : index
    %c0_40 = arith.constant 0 : index
    %58 = vector.load %arg6[%c32_39, %c0_40] : memref<256x96xbf16, #tpu.memory_space<vmem>>, vector<224x96xbf16>
    %c320 = arith.constant 320 : index
    %c0_41 = arith.constant 0 : index
    %59 = vector.load %arg3[%c320, %c0_41] : memref<704x32xbf16, #tpu.memory_space<vmem>>, vector<96x32xbf16>
    %cst_42 = arith.constant dense<0.000000e+00> : vector<224x32xf32>
    %60 = tpu.matmul %58, %59, %cst_42 {dimension_numbers = #tpu.dot_dimension_numbers<[1], [0], [0], [1], [0, 0, 1, 1], [], []>} : vector<224x96xbf16>, vector<96x32xbf16>, vector<224x32xf32> -> vector<224x32xf32>
    %61 = arith.addf %57, %60 : vector<224x32xf32>
    %62 = vector.broadcast %48 : vector<1x32xf32> to vector<224x32xf32>
    %63 = arith.addf %61, %62 : vector<224x32xf32>
    %c4 = arith.constant 4 : index
    %c0_43 = arith.constant 0 : index
    %64 = vector.load %arg4[%c4, %c0_43] : memref<9x32xf32, #tpu.memory_space<vmem>>, vector<1x32xf32>
    %c5 = arith.constant 5 : index
    %c0_44 = arith.constant 0 : index
    %65 = vector.load %arg4[%c5, %c0_44] : memref<9x32xf32, #tpu.memory_space<vmem>>, vector<1x32xf32>
    %66 = tpu.iota {dimensions = array<i32: 0>} : vector<224x32xi32>
    %c16_i32 = arith.constant 16 : i32
    %c0_i32 = arith.constant 0 : i32
    %67 = arith.cmpi eq, %c16_i32, %c0_i32 : i32
    %c1_i32 = arith.constant 1 : i32
    %68 = arith.select %67, %c1_i32, %c16_i32 : i32
    %69 = vector.broadcast %68 : i32 to vector<224x32xi32>
    %70 = arith.remsi %66, %69 : vector<224x32xi32>
    %c0_i32_45 = arith.constant 0 : i32
    %71 = vector.broadcast %c0_i32_45 : i32 to vector<224x32xi32>
    %72 = arith.cmpi ne, %70, %71 : vector<224x32xi32>
    %c0_i32_46 = arith.constant 0 : i32
    %73 = vector.broadcast %c0_i32_46 : i32 to vector<224x32xi32>
    %74 = arith.cmpi slt, %70, %73 : vector<224x32xi32>
    %c0_i32_47 = arith.constant 0 : i32
    %75 = arith.cmpi slt, %68, %c0_i32_47 : i32
    %76 = vector.broadcast %75 : i1 to vector<224x32xi1>
    %77 = vector.broadcast %76 : vector<224x32xi1> to vector<224x32xi1>
    %78 = arith.xori %74, %77 : vector<224x32xi1>
    %79 = arith.andi %78, %72 : vector<224x32xi1>
    %80 = vector.broadcast %68 : i32 to vector<224x32xi32>
    %81 = arith.addi %70, %80 : vector<224x32xi32>
    %82 = arith.select %79, %81, %70 : vector<224x32xi1>, vector<224x32xi32>
    %c14_i32 = arith.constant 14 : i32
    %83 = vector.broadcast %c14_i32 : i32 to vector<224x32xi32>
    %84 = arith.cmpi slt, %82, %83 : vector<224x32xi32>
    %85 = arith.extui %84 : vector<224x32xi1> to vector<224x32xi32>
    %86 = arith.sitofp %85 : vector<224x32xi32> to vector<224x32xf32>
    %cst_48 = arith.constant 0.000000e+00 : f32
    %87 = vector.broadcast %cst_48 : f32 to vector<224x32xf32>
    %88 = arith.maximumf %63, %87 : vector<224x32xf32>
    %89 = arith.mulf %88, %86 : vector<224x32xf32>
    %cst_49 = arith.constant dense<0.000000e+00> : vector<32xf32>
    %90 = vector.multi_reduction <add>, %89, %cst_49 [0] : vector<224x32xf32> to vector<32xf32>
    %91 = vector.shape_cast %90 : vector<32xf32> to vector<1x32xf32>
    %92 = arith.mulf %89, %89 : vector<224x32xf32>
    %cst_50 = arith.constant dense<0.000000e+00> : vector<32xf32>
    %93 = vector.multi_reduction <add>, %92, %cst_50 [0] : vector<224x32xf32> to vector<32xf32>
    %94 = vector.shape_cast %93 : vector<32xf32> to vector<1x32xf32>
    %cst_51 = arith.constant 0.00510204071 : f32
    %95 = vector.broadcast %cst_51 : f32 to vector<1x32xf32>
    %96 = arith.mulf %91, %95 : vector<1x32xf32>
    %cst_52 = arith.constant 0.00510204071 : f32
    %97 = vector.broadcast %cst_52 : f32 to vector<1x32xf32>
    %98 = arith.mulf %94, %97 : vector<1x32xf32>
    %99 = arith.mulf %96, %96 : vector<1x32xf32>
    %100 = arith.subf %98, %99 : vector<1x32xf32>
    %cst_53 = arith.constant 0.000000e+00 : f32
    %101 = vector.broadcast %cst_53 : f32 to vector<1x32xf32>
    %102 = arith.maximumf %100, %101 : vector<1x32xf32>
    %cst_54 = arith.constant 9.99999974E-6 : f32
    %103 = vector.broadcast %cst_54 : f32 to vector<1x32xf32>
    %104 = arith.addf %102, %103 : vector<1x32xf32>
    %105 = math.rsqrt %104 : vector<1x32xf32>
    %106 = vector.broadcast %96 : vector<1x32xf32> to vector<224x32xf32>
    %107 = arith.subf %88, %106 : vector<224x32xf32>
    %108 = arith.mulf %105, %64 : vector<1x32xf32>
    %109 = vector.broadcast %108 : vector<1x32xf32> to vector<224x32xf32>
    %110 = arith.mulf %107, %109 : vector<224x32xf32>
    %111 = vector.broadcast %65 : vector<1x32xf32> to vector<224x32xf32>
    %112 = arith.addf %110, %111 : vector<224x32xf32>
    %c0_55 = arith.constant 0 : index
    %c0_56 = arith.constant 0 : index
    %113 = vector.load %arg8[%c0_55, %c0_56] : memref<264x32xf32, #tpu.memory_space<vmem>>, vector<224x32xf32>
    tpu.vector_store %arg8[%c0_55, %c0_56], %112 {strides = array<i32>} : memref<264x32xf32, #tpu.memory_space<vmem>>, vector<224x32xf32>,
    %cst_57 = arith.constant 0.000000e+00 : f32
    %114 = vector.broadcast %cst_57 : f32 to vector<8x32xf32>
    %c224_58 = arith.constant 224 : index
    %c0_59 = arith.constant 0 : index
    %115 = vector.load %arg8[%c224_58, %c0_59] : memref<264x32xf32, #tpu.memory_space<vmem>>, vector<8x32xf32>
    tpu.vector_store %arg8[%c224_58, %c0_59], %114 {strides = array<i32>} : memref<264x32xf32, #tpu.memory_space<vmem>>, vector<8x32xf32>,
    %116 = arith.truncf %112 : vector<224x32xf32> to vector<224x32xbf16>
    %c0_60 = arith.constant 0 : index
    %c0_61 = arith.constant 0 : index
    %117 = vector.load %arg7[%c0_60, %c0_61] : memref<224x96xbf16, #tpu.memory_space<vmem>>, vector<224x32xbf16>
    tpu.vector_store %arg7[%c0_60, %c0_61], %116 {strides = array<i32>} : memref<224x96xbf16, #tpu.memory_space<vmem>>, vector<224x32xbf16>,
    %c1_62 = arith.constant 1 : index
    %c0_63 = arith.constant 0 : index
    %118 = vector.load %arg8[%c1_62, %c0_63] : memref<264x32xf32, #tpu.memory_space<vmem>>, vector<224x32xf32>
    %119 = arith.truncf %118 : vector<224x32xf32> to vector<224x32xbf16>
    %c0_64 = arith.constant 0 : index
    %c32_65 = arith.constant 32 : index
    %120 = vector.load %arg7[%c0_64, %c32_65] : memref<224x96xbf16, #tpu.memory_space<vmem>>, vector<224x32xbf16>
    tpu.vector_store %arg7[%c0_64, %c32_65], %119 {strides = array<i32>} : memref<224x96xbf16, #tpu.memory_space<vmem>>, vector<224x32xbf16>,
    %c2_66 = arith.constant 2 : index
    %c0_67 = arith.constant 0 : index
    %121 = vector.load %arg8[%c2_66, %c0_67] : memref<264x32xf32, #tpu.memory_space<vmem>>, vector<224x32xf32>
    %122 = arith.truncf %121 : vector<224x32xf32> to vector<224x32xbf16>
    %c0_68 = arith.constant 0 : index
    %c64_69 = arith.constant 64 : index
    %123 = vector.load %arg7[%c0_68, %c64_69] : memref<224x96xbf16, #tpu.memory_space<vmem>>, vector<224x32xbf16>
    tpu.vector_store %arg7[%c0_68, %c64_69], %122 {strides = array<i32>} : memref<224x96xbf16, #tpu.memory_space<vmem>>, vector<224x32xbf16>,
    %c6 = arith.constant 6 : index
    %c0_70 = arith.constant 0 : index
    %124 = vector.load %arg4[%c6, %c0_70] : memref<9x32xf32, #tpu.memory_space<vmem>>, vector<1x32xf32>
    %cst_71 = arith.constant 0.000000e+00 : f32
    %125 = vector.broadcast %cst_71 : f32 to vector<192x32xf32>
    %c0_72 = arith.constant 0 : index
    %c0_73 = arith.constant 0 : index
    %126 = vector.load %arg7[%c0_72, %c0_73] : memref<224x96xbf16, #tpu.memory_space<vmem>>, vector<192x96xbf16>
    %c416 = arith.constant 416 : index
    %c0_74 = arith.constant 0 : index
    %127 = vector.load %arg3[%c416, %c0_74] : memref<704x32xbf16, #tpu.memory_space<vmem>>, vector<96x32xbf16>
    %cst_75 = arith.constant dense<0.000000e+00> : vector<192x32xf32>
    %128 = tpu.matmul %126, %127, %cst_75 {dimension_numbers = #tpu.dot_dimension_numbers<[1], [0], [0], [1], [0, 0, 1, 1], [], []>} : vector<192x96xbf16>, vector<96x32xbf16>, vector<192x32xf32> -> vector<192x32xf32>
    %129 = arith.addf %125, %128 : vector<192x32xf32>
    %c16_76 = arith.constant 16 : index
    %c0_77 = arith.constant 0 : index
    %130 = vector.load %arg7[%c16_76, %c0_77] : memref<224x96xbf16, #tpu.memory_space<vmem>>, vector<192x96xbf16>
    %c512 = arith.constant 512 : index
    %c0_78 = arith.constant 0 : index
    %131 = vector.load %arg3[%c512, %c0_78] : memref<704x32xbf16, #tpu.memory_space<vmem>>, vector<96x32xbf16>
    %cst_79 = arith.constant dense<0.000000e+00> : vector<192x32xf32>
    %132 = tpu.matmul %130, %131, %cst_79 {dimension_numbers = #tpu.dot_dimension_numbers<[1], [0], [0], [1], [0, 0, 1, 1], [], []>} : vector<192x96xbf16>, vector<96x32xbf16>, vector<192x32xf32> -> vector<192x32xf32>
    %133 = arith.addf %129, %132 : vector<192x32xf32>
    %c32_80 = arith.constant 32 : index
    %c0_81 = arith.constant 0 : index
    %134 = vector.load %arg7[%c32_80, %c0_81] : memref<224x96xbf16, #tpu.memory_space<vmem>>, vector<192x96xbf16>
    %c608 = arith.constant 608 : index
    %c0_82 = arith.constant 0 : index
    %135 = vector.load %arg3[%c608, %c0_82] : memref<704x32xbf16, #tpu.memory_space<vmem>>, vector<96x32xbf16>
    %cst_83 = arith.constant dense<0.000000e+00> : vector<192x32xf32>
    %136 = tpu.matmul %134, %135, %cst_83 {dimension_numbers = #tpu.dot_dimension_numbers<[1], [0], [0], [1], [0, 0, 1, 1], [], []>} : vector<192x96xbf16>, vector<96x32xbf16>, vector<192x32xf32> -> vector<192x32xf32>
    %137 = arith.addf %133, %136 : vector<192x32xf32>
    %138 = vector.broadcast %124 : vector<1x32xf32> to vector<192x32xf32>
    %139 = arith.addf %137, %138 : vector<192x32xf32>
    %c7 = arith.constant 7 : index
    %c0_84 = arith.constant 0 : index
    %140 = vector.load %arg4[%c7, %c0_84] : memref<9x32xf32, #tpu.memory_space<vmem>>, vector<1x32xf32>
    %c8 = arith.constant 8 : index
    %c0_85 = arith.constant 0 : index
    %141 = vector.load %arg4[%c8, %c0_85] : memref<9x32xf32, #tpu.memory_space<vmem>>, vector<1x32xf32>
    %142 = tpu.iota {dimensions = array<i32: 0>} : vector<192x32xi32>
    %c16_i32_86 = arith.constant 16 : i32
    %c0_i32_87 = arith.constant 0 : i32
    %143 = arith.cmpi eq, %c16_i32_86, %c0_i32_87 : i32
    %c1_i32_88 = arith.constant 1 : i32
    %144 = arith.select %143, %c1_i32_88, %c16_i32_86 : i32
    %145 = vector.broadcast %144 : i32 to vector<192x32xi32>
    %146 = arith.remsi %142, %145 : vector<192x32xi32>
    %c0_i32_89 = arith.constant 0 : i32
    %147 = vector.broadcast %c0_i32_89 : i32 to vector<192x32xi32>
    %148 = arith.cmpi ne, %146, %147 : vector<192x32xi32>
    %c0_i32_90 = arith.constant 0 : i32
    %149 = vector.broadcast %c0_i32_90 : i32 to vector<192x32xi32>
    %150 = arith.cmpi slt, %146, %149 : vector<192x32xi32>
    %c0_i32_91 = arith.constant 0 : i32
    %151 = arith.cmpi slt, %144, %c0_i32_91 : i32
    %152 = vector.broadcast %151 : i1 to vector<192x32xi1>
    %153 = vector.broadcast %152 : vector<192x32xi1> to vector<192x32xi1>
    %154 = arith.xori %150, %153 : vector<192x32xi1>
    %155 = arith.andi %154, %148 : vector<192x32xi1>
    %156 = vector.broadcast %144 : i32 to vector<192x32xi32>
    %157 = arith.addi %146, %156 : vector<192x32xi32>
    %158 = arith.select %155, %157, %146 : vector<192x32xi1>, vector<192x32xi32>
    %c12_i32 = arith.constant 12 : i32
    %159 = vector.broadcast %c12_i32 : i32 to vector<192x32xi32>
    %160 = arith.cmpi slt, %158, %159 : vector<192x32xi32>
    %161 = arith.extui %160 : vector<192x32xi1> to vector<192x32xi32>
    %162 = arith.sitofp %161 : vector<192x32xi32> to vector<192x32xf32>
    %cst_92 = arith.constant 0.000000e+00 : f32
    %163 = vector.broadcast %cst_92 : f32 to vector<192x32xf32>
    %164 = arith.maximumf %139, %163 : vector<192x32xf32>
    %165 = arith.mulf %164, %162 : vector<192x32xf32>
    %cst_93 = arith.constant dense<0.000000e+00> : vector<32xf32>
    %166 = vector.multi_reduction <add>, %165, %cst_93 [0] : vector<192x32xf32> to vector<32xf32>
    %167 = vector.shape_cast %166 : vector<32xf32> to vector<1x32xf32>
    %168 = arith.mulf %165, %165 : vector<192x32xf32>
    %cst_94 = arith.constant dense<0.000000e+00> : vector<32xf32>
    %169 = vector.multi_reduction <add>, %168, %cst_94 [0] : vector<192x32xf32> to vector<32xf32>
    %170 = vector.shape_cast %169 : vector<32xf32> to vector<1x32xf32>
    %cst_95 = arith.constant 0.0069444445 : f32
    %171 = vector.broadcast %cst_95 : f32 to vector<1x32xf32>
    %172 = arith.mulf %167, %171 : vector<1x32xf32>
    %cst_96 = arith.constant 0.0069444445 : f32
    %173 = vector.broadcast %cst_96 : f32 to vector<1x32xf32>
    %174 = arith.mulf %170, %173 : vector<1x32xf32>
    %175 = arith.mulf %172, %172 : vector<1x32xf32>
    %176 = arith.subf %174, %175 : vector<1x32xf32>
    %cst_97 = arith.constant 0.000000e+00 : f32
    %177 = vector.broadcast %cst_97 : f32 to vector<1x32xf32>
    %178 = arith.maximumf %176, %177 : vector<1x32xf32>
    %cst_98 = arith.constant 9.99999974E-6 : f32
    %179 = vector.broadcast %cst_98 : f32 to vector<1x32xf32>
    %180 = arith.addf %178, %179 : vector<1x32xf32>
    %181 = math.rsqrt %180 : vector<1x32xf32>
    %182 = vector.broadcast %172 : vector<1x32xf32> to vector<192x32xf32>
    %183 = arith.subf %164, %182 : vector<192x32xf32>
    %184 = arith.mulf %181, %140 : vector<1x32xf32>
    %185 = vector.broadcast %184 : vector<1x32xf32> to vector<192x32xf32>
    %186 = arith.mulf %183, %185 : vector<192x32xf32>
    %187 = vector.broadcast %141 : vector<1x32xf32> to vector<192x32xf32>
    %188 = arith.addf %186, %187 : vector<192x32xf32>
    %c0_99 = arith.constant 0 : index
    %c0_100 = arith.constant 0 : index
    %c0_101 = arith.constant 0 : index
    %189 = vector.load %arg5[%c0_99, %c0_100, %c0_101] : memref<1x192x32xf32, #tpu.memory_space<vmem>>, vector<1x192x32xf32>
    %190 = vector.shape_cast %189 : vector<1x192x32xf32> to vector<192x32xf32>
    %191 = vector.shape_cast %188 : vector<192x32xf32> to vector<1x192x32xf32>
    tpu.vector_store %arg5[%c0_99, %c0_100, %c0_101], %191 {strides = array<i32>} : memref<1x192x32xf32, #tpu.memory_space<vmem>>, vector<1x192x32xf32>,
    return
  }
  func.func @transform_0(%arg0: i32) -> (i32, i32, i32) {
    %c0_i32 = arith.constant 0 : i32
    %c0_i32_0 = arith.constant 0 : i32
    %c0_i32_1 = arith.constant 0 : i32
    return %arg0, %c0_i32, %c0_i32_0 : i32, i32, i32
  }
  func.func @transform_1(%arg0: i32) -> (i32, i32, i32) {
    %c0_i32 = arith.constant 0 : i32
    %c0_i32_0 = arith.constant 0 : i32
    %c0_i32_1 = arith.constant 0 : i32
    return %arg0, %c0_i32, %c0_i32_0 : i32, i32, i32
  }
  func.func @transform_2(%arg0: i32) -> (i32, i32) {
    %c0_i32 = arith.constant 0 : i32
    %c0_i32_0 = arith.constant 0 : i32
    %c0_i32_1 = arith.constant 0 : i32
    return %c0_i32, %c0_i32_0 : i32, i32
  }
  func.func @transform_3(%arg0: i32) -> (i32, i32) {
    %c0_i32 = arith.constant 0 : i32
    %c0_i32_0 = arith.constant 0 : i32
    %c0_i32_1 = arith.constant 0 : i32
    return %c0_i32, %c0_i32_0 : i32, i32
  }
  func.func @transform_4(%arg0: i32) -> (i32, i32, i32) {
    %c0_i32 = arith.constant 0 : i32
    %c0_i32_0 = arith.constant 0 : i32
    %c0_i32_1 = arith.constant 0 : i32
    return %arg0, %c0_i32, %c0_i32_0 : i32, i32, i32
  }
}

</mosaic_0001>

<llo_original>
// kernel: up_block_forward.1
$region0: #{up_block_forward.1}
  #allocation0 [shape = 'u32[]', space=smem, size = 0x4, offset = 0x4, fixed_abs, tag = 'smem constant byte address 0x4 - core index']
  #allocation1 [shape = 'u32[144,128]{1,0:T(1,128)}', space=vmem, size = 0x12000, scoped, tag = 'internal scratch']
  #allocation2 [shape = 'bf16[256,96]{1,0:T(16,128)(2,1)}', space=vmem, size = 0x10000, scoped, tag = 'scratch operand']
  #allocation3 [shape = 'bf16[224,96]{1,0:T(16,128)(2,1)}', space=vmem, size = 0xe000, scoped, tag = 'scratch operand']
  #allocation4 [shape = 'f32[264,32]{1,0:T(8,128)}', space=vmem, size = 0x21000, scoped, tag = 'scratch operand']
  %s0 = inlined_call_operand.vmem [shape: bf16[2,256,128], index: 0, kind: input, shape index: {}]
  %s1 = inlined_call_operand.vmem [shape: f32[2,256,32], index: 1, kind: input, shape index: {}]
  %s2 = inlined_call_operand.vmem [shape: bf16[704,32], index: 2, kind: input, shape index: {}]
  %s3 = inlined_call_operand.vmem [shape: f32[9,32], index: 3, kind: input, shape index: {}]
  %s4 = inlined_call_operand.vmem [shape: f32[2,192,32], index: 4, kind: output, shape index: {}]
  %s5 = sld [smem:[#allocation0]]
  $region49: #{up_block_forward.1} parent=0
    _
  %s7 = ssub.s32 1, %s5
  %s8 = scalar_select 0, %s7, %s5
  loop: start=0, step=1, limit=4
  $region2: #{up_block_forward.1} parent=0 // loop_pre_header
    _
  $region3: #{up_block_forward.1} parent=0 // loop_header
    %s10 = sphi 0, %s14
    %p11 = scmp.ge.s32.totalorder %s10, 4
    %s20 = sphi 0, %s22
    %s23 = sphi 0, %s20
    %s24 = sphi 0, %s23
    %s40 = sphi 0, %s24
    %s46 = sphi 0, %s48
    %s49 = sphi 0, %s46
    %s50 = sphi 0, %s49
    %s66 = sphi 0, %s50
    %s70 = sphi 0, %s70
    %s72 = sphi 0, %s70
    %s73 = sphi 0, %s72
    %s87 = sphi 0, %s73
    %s91 = sphi 0, %s91
    %s93 = sphi 0, %s91
    %s94 = sphi 0, %s93
    %s108 = sphi 0, %s94
    %s114 = sphi 0, %s116
    %s117 = sphi 0, %s114
    %s118 = sphi 0, %s117
    %s134 = sphi 0, %s118
  $region4: #{up_block_forward.1} parent=0 // loop_header_branch
    %13 = sbr.rel (%p11) target = $region8
  $region5: #{up_block_forward.1} parent=0 // loop_body
    %s15 = ssub.s32 %s10, 1
    %s16 = ssub.s32 %s10, 2
    %s17 = sadd.s32 %s10, 1
    %s18 = ssub.s32 %s10, %s17
    %p19 = scmp.eq.s32.totalorder %s18, 0
    %s21 = sadd.s32 %s20, 1
    %s22 = scalar_select %p19, %s20, %s21
    %p25 = pneg %p19
    %p26 = scmp.eq.s32.totalorder %s10, 1
    %p27 = por %p25, %p26
    %p28 = scmp.ne.s32.totalorder %s20, %s23
    %p29 = scmp.eq.s32.totalorder %s10, 0
    %p30 = por %p28, %p29
    %p31 = scmp.ne.s32.totalorder %s20, %s23
    %p32 = scmp.eq.s32.totalorder %s15, 1
    %p33 = por %p31, %p32
    %p34 = scmp.ne.s32.totalorder %s23, %s24
    %p35 = scmp.eq.s32.totalorder %s15, 0
    %p36 = por %p34, %p35
    %p37 = scmp.ne.s32.totalorder %s23, %s24
    %p38 = scmp.eq.s32.totalorder %s16, 1
    %p39 = por %p37, %p38
    %p41 = scmp.ne.s32.totalorder %s24, %s40
    %p42 = scmp.eq.s32.totalorder %s16, 0
    %p43 = por %p41, %p42
    %s44 = ssub.s32 %s10, %s17
    %p45 = scmp.eq.s32.totalorder %s44, 0
    %s47 = sadd.s32 %s46, 1
    %s48 = scalar_select %p45, %s46, %s47
    %p51 = pneg %p45
    %p52 = scmp.eq.s32.totalorder %s10, 1
    %p53 = por %p51, %p52
    %p54 = scmp.ne.s32.totalorder %s46, %s49
    %p55 = scmp.eq.s32.totalorder %s10, 0
    %p56 = por %p54, %p55
    %p57 = scmp.ne.s32.totalorder %s46, %s49
    %p58 = scmp.eq.s32.totalorder %s15, 1
    %p59 = por %p57, %p58
    %p60 = scmp.ne.s32.totalorder %s49, %s50
    %p61 = scmp.eq.s32.totalorder %s15, 0
    %p62 = por %p60, %p61
    %p63 = scmp.ne.s32.totalorder %s49, %s50
    %p64 = scmp.eq.s32.totalorder %s16, 1
    %p65 = por %p63, %p64
    %p67 = scmp.ne.s32.totalorder %s50, %s66
    %p68 = scmp.eq.s32.totalorder %s16, 0
    %p69 = por %p67, %p68
    %s71 = sadd.s32 %s70, 1
    %p74 = scmp.eq.s32.totalorder %s10, 1
    %p75 = scmp.ne.s32.totalorder %s70, %s72
    %p76 = scmp.eq.s32.totalorder %s10, 0
    %p77 = por %p75, %p76
    %p78 = scmp.ne.s32.totalorder %s70, %s72
    %p79 = scmp.eq.s32.totalorder %s15, 1
    %p80 = por %p78, %p79
    %p81 = scmp.ne.s32.totalorder %s72, %s73
    %p82 = scmp.eq.s32.totalorder %s15, 0
    %p83 = por %p81, %p82
    %p84 = scmp.ne.s32.totalorder %s72, %s73
    %p85 = scmp.eq.s32.totalorder %s16, 1
    %p86 = por %p84, %p85
    %p88 = scmp.ne.s32.totalorder %s73, %s87
    %p89 = scmp.eq.s32.totalorder %s16, 0
    %p90 = por %p88, %p89
    %s92 = sadd.s32 %s91, 1
    %p95 = scmp.eq.s32.totalorder %s10, 1
    %p96 = scmp.ne.s32.totalorder %s91, %s93
    %p97 = scmp.eq.s32.totalorder %s10, 0
    %p98 = por %p96, %p97
    %p99 = scmp.ne.s32.totalorder %s91, %s93
    %p100 = scmp.eq.s32.totalorder %s15, 1
    %p101 = por %p99, %p100
    %p102 = scmp.ne.s32.totalorder %s93, %s94
    %p103 = scmp.eq.s32.totalorder %s15, 0
    %p104 = por %p102, %p103
    %p105 = scmp.ne.s32.totalorder %s93, %s94
    %p106 = scmp.eq.s32.totalorder %s16, 1
    %p107 = por %p105, %p106
    %p109 = scmp.ne.s32.totalorder %s94, %s108
    %p110 = scmp.eq.s32.totalorder %s16, 0
    %p111 = por %p109, %p110
    %s112 = ssub.s32 %s10, %s17
    %p113 = scmp.eq.s32.totalorder %s112, 0
    %s115 = sadd.s32 %s114, 1
    %s116 = scalar_select %p113, %s114, %s115
    %p119 = pneg %p113
    %p120 = scmp.eq.s32.totalorder %s10, 1
    %p121 = por %p119, %p120
    %p122 = scmp.ne.s32.totalorder %s114, %s117
    %p123 = scmp.eq.s32.totalorder %s10, 0
    %p124 = por %p122, %p123
    %p125 = scmp.ne.s32.totalorder %s114, %s117
    %p126 = scmp.eq.s32.totalorder %s15, 1
    %p127 = por %p125, %p126
    %p128 = scmp.ne.s32.totalorder %s117, %s118
    %p129 = scmp.eq.s32.totalorder %s15, 0
    %p130 = por %p128, %p129
    %p131 = scmp.ne.s32.totalorder %s117, %s118
    %p132 = scmp.eq.s32.totalorder %s16, 1
    %p133 = por %p131, %p132
    %p135 = scmp.ne.s32.totalorder %s118, %s134
    %p136 = scmp.eq.s32.totalorder %s16, 0
    %p137 = por %p135, %p136
    %p138 = scmp.le.s32.totalorder 1, %s10
    %p139 = scmp.lt.s32.totalorder %s10, 3
    %p140 = pnand %p138, %p139
    %p141 = pneg %p140
    // Predicated region
    $region9: #{up_block_forward.1} parent=5 // pred_check
      _
    $region10: #{up_block_forward.1} parent=5 // pred_check_branch
      %143 = sbr.rel (%p140) target = $region12
    $region11: #{up_block_forward.1} parent=5 // pred_region
      %s144 = ssub.s32 %s10, 1
      // Predicated region
      $region13: #{up_block_forward.1} parent=11 // pred_check
        %p145 = pneg %p83
      $region14: #{up_block_forward.1} parent=11 // pred_check_branch
        %147 = sbr.rel (%p145) target = $region16
      $region15: #{up_block_forward.1} parent=11 // pred_region
        _
      $region16: #{up_block_forward.1} parent=11 // pred_fallthru
        _
      // Predicated region
      $region17: #{up_block_forward.1} parent=11 // pred_check
        %p148 = pneg %p104
      $region18: #{up_block_forward.1} parent=11 // pred_check_branch
        %150 = sbr.rel (%p148) target = $region20
      $region19: #{up_block_forward.1} parent=11 // pred_region
        _
      $region20: #{up_block_forward.1} parent=11 // pred_fallthru
        _
    $region12: #{up_block_forward.1} parent=5 // pred_fallthru
      _
    %p151 = scmp.lt.s32.totalorder %s10, 2
    // Predicated region
    $region21: #{up_block_forward.1} parent=5 // pred_check
      %p152 = pneg %p151
    $region22: #{up_block_forward.1} parent=5 // pred_check_branch
      %154 = sbr.rel (%p152) target = $region24
    $region23: #{up_block_forward.1} parent=5 // pred_region
      // Predicated region
      $region25: #{up_block_forward.1} parent=23 // pred_check
        %p155 = pneg %p30
      $region26: #{up_block_forward.1} parent=23 // pred_check_branch
        %157 = sbr.rel (%p155) target = $region28
      $region27: #{up_block_forward.1} parent=23 // pred_region
        %p158 = scmp.lt.s32.totalorder %s10, 1
        %s159 = scalar_select %p158, %s10, 1
        %s160 = smul.addr %s159, 32
        %s161 = smul.addr %s160, 4
        %s162 = scalar_lea.vmem %s0, %s161
      $region28: #{up_block_forward.1} parent=23 // pred_fallthru
        _
      // Predicated region
      $region29: #{up_block_forward.1} parent=23 // pred_check
        %p163 = pneg %p56
      $region30: #{up_block_forward.1} parent=23 // pred_check_branch
        %165 = sbr.rel (%p163) target = $region32
      $region31: #{up_block_forward.1} parent=23 // pred_region
        %p166 = scmp.lt.s32.totalorder %s10, 1
        %s167 = scalar_select %p166, %s10, 1
        %s168 = smul.addr %s167, 32
        %s169 = smul.addr %s168, 8
        %s170 = scalar_lea.vmem %s1, %s169
      $region32: #{up_block_forward.1} parent=23 // pred_fallthru
        _
    $region24: #{up_block_forward.1} parent=5 // pred_fallthru
      _
    %p171 = scmp.le.s32.totalorder 1, %s10
    %p172 = scmp.lt.s32.totalorder %s10, 3
    %p173 = pnand %p171, %p172
    %p174 = pneg %p173
    // Predicated region
    $region33: #{up_block_forward.1} parent=5 // pred_check
      _
    $region34: #{up_block_forward.1} parent=5 // pred_check_branch
      %176 = sbr.rel (%p173) target = $region36
    $region35: #{up_block_forward.1} parent=5 // pred_region
      %s177 = ssub.s32 %s10, 1
      %p178 = scmp.lt.s32.totalorder %s15, 1
      %s179 = scalar_select %p178, %s15, 1
      %s180 = smul.addr %s179, 32
      %s181 = smul.addr %s180, 4
      %s182 = scalar_lea.vmem %s0, %s181
      %p183 = pneg %p36
      %p184 = pneg %p33
      %p185 = scmp.lt.s32.totalorder %s15, 1
      %s186 = scalar_select %p185, %s15, 1
      %s187 = smul.addr %s186, 32
      %s188 = smul.addr %s187, 8
      %s189 = scalar_lea.vmem %s1, %s188
      %p190 = pneg %p62
      %p191 = pneg %p59
      %p192 = pneg %p83
      %p193 = pneg %p80
      %p194 = pneg %p104
      %p195 = pneg %p101
      %p196 = pneg %p130
      %p197 = pneg %p127
      %p198 = scmp.lt.s32.totalorder %s15, 1
      %s199 = scalar_select %p198, %s15, 1
      %s200 = smul.addr %s199, 24
      %s201 = smul.addr %s200, 8
      %s202 = scalar_lea.vmem %s4, %s201
      %p203 = scmp.lt.s32.totalorder %s15, 1
      %s204 = scalar_select %p203, %s15, 1
      %s205 = smul.addr %s204, 32
      %s206 = smul.addr %s205, 4
      %s207 = scalar_lea.vmem %s0, %s206
      %p208 = scmp.lt.s32.totalorder %s15, 1
      %s209 = scalar_select %p208, %s15, 1
      %s210 = smul.addr %s209, 32
      %s211 = smul.addr %s210, 8
      %s212 = scalar_lea.vmem %s1, %s211
      %p213 = scmp.lt.s32.totalorder %s15, 1
      %s214 = scalar_select %p213, %s15, 1
      %s215 = smul.addr %s214, 24
      %s216 = smul.addr %s215, 8
      %s217 = scalar_lea.vmem %s4, %s216
      %v219 = vld [vmem:[%s207] sm:$0xf]
      %v220 = vld [vmem:[%s207 + $0x4] sm:$0xf]
      %v221 = vld [vmem:[%s207 + $0x8] sm:$0xf]
      %v222 = vld [vmem:[%s207 + $0xc] sm:$0xf]
      %v223 = vld [vmem:[%s207 + $0x10] sm:$0xf]
      %v224 = vld [vmem:[%s207 + $0x14] sm:$0xf]
      %v225 = vld [vmem:[%s207 + $0x18] sm:$0xf]
      %v226 = vld [vmem:[%s207 + $0x1c] sm:$0xf]
      %v227 = vld [vmem:[%s207 + $0x20] sm:$0xf]
      %v228 = vld [vmem:[%s207 + $0x24] sm:$0xf]
      %v229 = vld [vmem:[%s207 + $0x28] sm:$0xf]
      %v230 = vld [vmem:[%s207 + $0x2c] sm:$0xf]
      %v231 = vld [vmem:[%s207 + $0x30] sm:$0xf]
      %v232 = vld [vmem:[%s207 + $0x34] sm:$0xf]
      %v233 = vld [vmem:[%s207 + $0x38] sm:$0xf]
      %v234 = vld [vmem:[%s207 + $0x3c] sm:$0xf]
      %v235 = vld [vmem:[%s207 + $0x40] sm:$0xf]
      %v236 = vld [vmem:[%s207 + $0x44] sm:$0xf]
      %v237 = vld [vmem:[%s207 + $0x48] sm:$0xf]
      %v238 = vld [vmem:[%s207 + $0x4c] sm:$0xf]
      %v239 = vld [vmem:[%s207 + $0x50] sm:$0xf]
      %v240 = vld [vmem:[%s207 + $0x54] sm:$0xf]
      %v241 = vld [vmem:[%s207 + $0x58] sm:$0xf]
      %v242 = vld [vmem:[%s207 + $0x5c] sm:$0xf]
      %v243 = vld [vmem:[%s207 + $0x60] sm:$0xf]
      %v244 = vld [vmem:[%s207 + $0x64] sm:$0xf]
      %v245 = vld [vmem:[%s207 + $0x68] sm:$0xf]
      %v246 = vld [vmem:[%s207 + $0x6c] sm:$0xf]
      %v247 = vld [vmem:[%s207 + $0x70] sm:$0xf]
      %v248 = vld [vmem:[%s207 + $0x74] sm:$0xf]
      %v249 = vld [vmem:[%s207 + $0x78] sm:$0xf]
      %v250 = vld [vmem:[%s207 + $0x7c] sm:$0xf]
      %v251 = vld [vmem:[%s2] sm:$0xf]
      %v252 = vld [vmem:[%s2 + $0x4] sm:$0xf]
      %v253 = vld [vmem:[%s2 + $0x8] sm:$0xf]
      %v254 = vld [vmem:[%s2 + $0xc] sm:$0xf]
      %v255 = vld [vmem:[%s2 + $0x10] sm:$0xf]
      %v256 = vld [vmem:[%s2 + $0x14] sm:$0xf]
      %v257 = vld [vmem:[%s2 + $0x18] sm:$0xf]
      %v258 = vld [vmem:[%s2 + $0x1c] sm:$0xf]
      %v259 = vld [vmem:[%s2 + $0x20] sm:$0xf]
      %v260 = vld [vmem:[%s2 + $0x24] sm:$0xf]
      %v261 = vld [vmem:[%s2 + $0x28] sm:$0xf]
      %v262 = vld [vmem:[%s2 + $0x2c] sm:$0xf]
      %v263 = vld [vmem:[%s2 + $0x30] sm:$0xf]
      %v264 = vld [vmem:[%s2 + $0x34] sm:$0xf]
      %v265 = vld [vmem:[%s2 + $0x38] sm:$0xf]
      %v266 = vld [vmem:[%s2 + $0x3c] sm:$0xf]
      %v267 = vld [vmem:[%s3] sm:$0x1]
      %v268 = vlaneseq
      %v269 = vshrl.u32 %v268, 7
      %v270 = vsub.s32 0, %v269
      %v271 = vrot.slane %v267, %v270
      %v304 = vunpack.c.l.b16 %v219
      %v305 = vunpack.c.l.b16 %v220
      %v306 = vunpack.c.l.b16 %v221
      %v307 = vunpack.c.l.b16 %v222
      %v308 = vunpack.c.l.b16 %v223
      %v309 = vunpack.c.l.b16 %v224
      %v310 = vunpack.c.l.b16 %v225
      %v311 = vunpack.c.l.b16 %v226
      %v312 = vunpack.c.l.b16 %v227
      %v313 = vunpack.c.l.b16 %v228
      %v314 = vunpack.c.l.b16 %v229
      %v315 = vunpack.c.l.b16 %v230
      %v316 = vunpack.c.l.b16 %v231
      %v317 = vunpack.c.l.b16 %v232
      %v318 = vunpack.c.l.b16 %v233
      %v319 = vunpack.c.l.b16 %v234
      %v320 = vunpack.c.l.b16 %v235
      %v321 = vunpack.c.l.b16 %v236
      %v322 = vunpack.c.l.b16 %v237
      %v323 = vunpack.c.l.b16 %v238
      %v324 = vunpack.c.l.b16 %v239
      %v325 = vunpack.c.l.b16 %v240
      %v326 = vunpack.c.l.b16 %v241
      %v327 = vunpack.c.l.b16 %v242
      %v328 = vunpack.c.l.b16 %v243
      %v329 = vunpack.c.l.b16 %v244
      %v330 = vunpack.c.l.b16 %v245
      %v331 = vunpack.c.l.b16 %v246
      %v332 = vunpack.c.l.b16 %v247
      %v333 = vunpack.c.l.b16 %v248
      %v334 = vunpack.c.l.b16 %v249
      %v335 = vunpack.c.l.b16 %v250
      %v336 = vpack.c.b16 %v305, %v304
      %v337 = vpack.c.b16 %v307, %v306
      %v338 = vpack.c.b16 %v309, %v308
      %v339 = vpack.c.b16 %v311, %v310
      %v340 = vpack.c.b16 %v313, %v312
      %v341 = vpack.c.b16 %v315, %v314
      %v342 = vpack.c.b16 %v317, %v316
      %v343 = vpack.c.b16 %v319, %v318
      %v344 = vpack.c.b16 %v321, %v320
      %v345 = vpack.c.b16 %v323, %v322
      %v346 = vpack.c.b16 %v325, %v324
      %v347 = vpack.c.b16 %v327, %v326
      %v348 = vpack.c.b16 %v329, %v328
      %v349 = vpack.c.b16 %v331, %v330
      %v350 = vpack.c.b16 %v333, %v332
      %v351 = vpack.c.b16 %v335, %v334
      %v384 = vunpack.c.l.b16 %v251
      %v385 = vunpack.c.l.b16 %v252
      %v386 = vunpack.c.l.b16 %v253
      %v387 = vunpack.c.l.b16 %v254
      %v388 = vunpack.c.l.b16 %v255
      %v389 = vunpack.c.l.b16 %v256
      %v390 = vunpack.c.l.b16 %v257
      %v391 = vunpack.c.l.b16 %v258
      %v392 = vunpack.c.l.b16 %v259
      %v393 = vunpack.c.l.b16 %v260
      %v394 = vunpack.c.l.b16 %v261
      %v395 = vunpack.c.l.b16 %v262
      %v396 = vunpack.c.l.b16 %v263
      %v397 = vunpack.c.l.b16 %v264
      %v398 = vunpack.c.l.b16 %v265
      %v399 = vunpack.c.l.b16 %v266
      %v400 = vpack.c.b16 %v385, %v384
      %v401 = vpack.c.b16 %v387, %v386
      %v402 = vpack.c.b16 %v389, %v388
      %v403 = vpack.c.b16 %v391, %v390
      %v404 = vpack.c.b16 %v393, %v392
      %v405 = vpack.c.b16 %v395, %v394
      %v406 = vpack.c.b16 %v397, %v396
      %v407 = vpack.c.b16 %v399, %v398
      %416 = vmatprep.subr.bf16.mxu0 0
      %417 = vmatpush1.bf16.msra.mxu0 %v400
      %418 = vmatprep.subr.bf16.mxu0 0
      %419 = vmatpush1.bf16.msra.mxu0 %v401
      %420 = vmatprep.subr.bf16.mxu0 0
      %421 = vmatpush1.bf16.msra.mxu0 %v402
      %422 = vmatprep.subr.bf16.mxu0 0
      %423 = vmatpush1.bf16.msra.mxu0 %v403
      %424 = vmatprep.subr.bf16.mxu0 0
      %425 = vmatpush1.bf16.msra.mxu0 %v404
      %426 = vmatprep.subr.bf16.mxu0 0
      %427 = vmatpush1.bf16.msra.mxu0 %v405
      %428 = vmatprep.subr.bf16.mxu0 0
      %429 = vmatpush1.bf16.msra.mxu0 %v406
      %430 = vmatprep.subr.bf16.mxu0 0
      %431 = vmatpush1.bf16.msra.mxu0 %v407
      %432 = vmatprep.subr.bf16.mxu0 0
      %433 = vmatpush1.bf16.msra.mxu0 0
      %434 = vmatprep.subr.bf16.mxu0 0
      %435 = vmatpush1.bf16.msra.mxu0 0
      %436 = vmatprep.subr.bf16.mxu0 0
      %437 = vmatpush1.bf16.msra.mxu0 0
      %438 = vmatprep.subr.bf16.mxu0 0
      %439 = vmatpush1.bf16.msra.mxu0 0
      %440 = vmatprep.subr.bf16.mxu0 0
      %441 = vmatpush1.bf16.msra.mxu0 0
      %442 = vmatprep.subr.bf16.mxu0 0
      %443 = vmatpush1.bf16.msra.mxu0 0
      %444 = vmatprep.subr.bf16.mxu0 0
      %445 = vmatpush1.bf16.msra.mxu0 0
      %446 = vmatprep.subr.bf16.mxu0 0
      %447 = vmatpush1.bf16.msra.mxu0 0
      %448 = vmatprep.mubr.bf16.mxu0 0
      %449 = vmatmul.mubr.bf16.gmra.mrb[0].mxu0 %v336
      %v450 = vpop.f32.mrb[0].mxu0
      %v451 = vadd.f32 %v271, %v450
      %v452 = vpop.f32.mrb[0].mxu0
      %v453 = vpop.f32.mrb[0].mxu0
      %v454 = vadd.f32 %v271, %v453
      %v455 = vpop.f32.mrb[0].mxu0
      %456 = vmatprep.mubr.bf16.mxu0 0
      %457 = vmatmul.mubr.bf16.gmra.mrb[0].mxu0 %v337
      %v458 = vpop.f32.mrb[0].mxu0
      %v459 = vadd.f32 %v271, %v458
      %v460 = vpop.f32.mrb[0].mxu0
      %v461 = vpop.f32.mrb[0].mxu0
      %v462 = vadd.f32 %v271, %v461
      %v463 = vpop.f32.mrb[0].mxu0
      %464 = vmatprep.mubr.bf16.mxu0 0
      %465 = vmatmul.mubr.bf16.gmra.mrb[0].mxu0 %v338
      %v466 = vpop.f32.mrb[0].mxu0
      %v467 = vadd.f32 %v271, %v466
      %v468 = vpop.f32.mrb[0].mxu0
      %v469 = vpop.f32.mrb[0].mxu0
      %v470 = vadd.f32 %v271, %v469
      %v471 = vpop.f32.mrb[0].mxu0
      %472 = vmatprep.mubr.bf16.mxu0 0
      %473 = vmatmul.mubr.bf16.gmra.mrb[0].mxu0 %v339
      %v474 = vpop.f32.mrb[0].mxu0
      %v475 = vadd.f32 %v271, %v474
      %v476 = vpop.f32.mrb[0].mxu0
      %v477 = vpop.f32.mrb[0].mxu0
      %v478 = vadd.f32 %v271, %v477
      %v479 = vpop.f32.mrb[0].mxu0
      %480 = vmatprep.mubr.bf16.mxu0 0
      %481 = vmatmul.mubr.bf16.gmra.mrb[0].mxu0 %v340
      %v482 = vpop.f32.mrb[0].mxu0
      %v483 = vadd.f32 %v271, %v482
      %v484 = vpop.f32.mrb[0].mxu0
      %v485 = vpop.f32.mrb[0].mxu0
      %v486 = vadd.f32 %v271, %v485
      %v487 = vpop.f32.mrb[0].mxu0
      %488 = vmatprep.mubr.bf16.mxu0 0
      %489 = vmatmul.mubr.bf16.gmra.mrb[0].mxu0 %v341
      %v490 = vpop.f32.mrb[0].mxu0
      %v491 = vadd.f32 %v271, %v490
      %v492 = vpop.f32.mrb[0].mxu0
      %v493 = vpop.f32.mrb[0].mxu0
      %v494 = vadd.f32 %v271, %v493
      %v495 = vpop.f32.mrb[0].mxu0
      %496 = vmatprep.mubr.bf16.mxu0 0
      %497 = vmatmul.mubr.bf16.gmra.mrb[0].mxu0 %v342
      %v498 = vpop.f32.mrb[0].mxu0
      %v499 = vadd.f32 %v271, %v498
      %v500 = vpop.f32.mrb[0].mxu0
      %v501 = vpop.f32.mrb[0].mxu0
      %v502 = vadd.f32 %v271, %v501
      %v503 = vpop.f32.mrb[0].mxu0
      %504 = vmatprep.mubr.bf16.mxu0 0
      %505 = vmatmul.mubr.bf16.gmra.mrb[0].mxu0 %v343
      %v506 = vpop.f32.mrb[0].mxu0
      %v507 = vadd.f32 %v271, %v506
      %v508 = vpop.f32.mrb[0].mxu0
      %v509 = vpop.f32.mrb[0].mxu0
      %v510 = vadd.f32 %v271, %v509
      %v511 = vpop.f32.mrb[0].mxu0
      %512 = vmatprep.mubr.bf16.mxu0 0
      %513 = vmatmul.mubr.bf16.gmra.mrb[0].mxu0 %v344
      %v514 = vpop.f32.mrb[0].mxu0
      %v515 = vadd.f32 %v271, %v514
      %v516 = vpop.f32.mrb[0].mxu0
      %v517 = vpop.f32.mrb[0].mxu0
      %v518 = vadd.f32 %v271, %v517
      %v519 = vpop.f32.mrb[0].mxu0
      %520 = vmatprep.mubr.bf16.mxu0 0
      %521 = vmatmul.mubr.bf16.gmra.mrb[0].mxu0 %v345
      %v522 = vpop.f32.mrb[0].mxu0
      %v523 = vadd.f32 %v271, %v522
      %v524 = vpop.f32.mrb[0].mxu0
      %v525 = vpop.f32.mrb[0].mxu0
      %v526 = vadd.f32 %v271, %v525
      %v527 = vpop.f32.mrb[0].mxu0
      %528 = vmatprep.mubr.bf16.mxu0 0
      %529 = vmatmul.mubr.bf16.gmra.mrb[0].mxu0 %v346
      %v530 = vpop.f32.mrb[0].mxu0
      %v531 = vadd.f32 %v271, %v530
      %v532 = vpop.f32.mrb[0].mxu0
      %v533 = vpop.f32.mrb[0].mxu0
      %v534 = vadd.f32 %v271, %v533
      %v535 = vpop.f32.mrb[0].mxu0
      %536 = vmatprep.mubr.bf16.mxu0 0
      %537 = vmatmul.mubr.bf16.gmra.mrb[0].mxu0 %v347
      %v538 = vpop.f32.mrb[0].mxu0
      %v539 = vadd.f32 %v271, %v538
      %v540 = vpop.f32.mrb[0].mxu0
      %v541 = vpop.f32.mrb[0].mxu0
      %v542 = vadd.f32 %v271, %v541
      %v543 = vpop.f32.mrb[0].mxu0
      %544 = vmatprep.mubr.bf16.mxu0 0
      %545 = vmatmul.mubr.bf16.gmra.mrb[0].mxu0 %v348
      %v546 = vpop.f32.mrb[0].mxu0
      %v547 = vadd.f32 %v271, %v546
      %v548 = vpop.f32.mrb[0].mxu0
      %v549 = vpop.f32.mrb[0].mxu0
      %v550 = vadd.f32 %v271, %v549
      %v551 = vpop.f32.mrb[0].mxu0
      %552 = vmatprep.mubr.bf16.mxu0 0
      %553 = vmatmul.mubr.bf16.gmra.mrb[0].mxu0 %v349
      %v554 = vpop.f32.mrb[0].mxu0
      %v555 = vadd.f32 %v271, %v554
      %v556 = vpop.f32.mrb[0].mxu0
      %v557 = vpop.f32.mrb[0].mxu0
      %v558 = vadd.f32 %v271, %v557
      %v559 = vpop.f32.mrb[0].mxu0
      %560 = vmatprep.mubr.bf16.mxu0 0
      %561 = vmatmul.mubr.bf16.gmra.mrb[0].mxu0 %v350
      %v562 = vpop.f32.mrb[0].mxu0
      %v563 = vadd.f32 %v271, %v562
      %v564 = vpop.f32.mrb[0].mxu0
      %v565 = vpop.f32.mrb[0].mxu0
      %v566 = vadd.f32 %v271, %v565
      %v567 = vpop.f32.mrb[0].mxu0
      %568 = vmatprep.mubr.bf16.mxu0 0
      %569 = vmatmul.mubr.bf16.gmra.mrb[0].mxu0 %v351
      %v570 = vpop.f32.mrb[0].mxu0
      %v571 = vadd.f32 %v271, %v570
      %v572 = vpop.f32.mrb[0].mxu0
      %v573 = vpop.f32.mrb[0].mxu0
      %v574 = vadd.f32 %v271, %v573
      %v575 = vpop.f32.mrb[0].mxu0
      %576 = vdwg.mxu0
      %v577 = vld [vmem:[%s3 + $0x1] sm:$0x1]
      %v578 = vld [vmem:[%s3 + $0x2] sm:$0x1]
      %v579 = vmax.f32 %v451, 0.0
      %v580 = vmax.f32 %v454, 0.0
      %v581 = vmax.f32 %v459, 0.0
      %v582 = vmax.f32 %v462, 0.0
      %v583 = vmax.f32 %v467, 0.0
      %v584 = vmax.f32 %v470, 0.0
      %v585 = vmax.f32 %v475, 0.0
      %v586 = vmax.f32 %v478, 0.0
      %v587 = vmax.f32 %v483, 0.0
      %v588 = vmax.f32 %v486, 0.0
      %v589 = vmax.f32 %v491, 0.0
      %v590 = vmax.f32 %v494, 0.0
      %v591 = vmax.f32 %v499, 0.0
      %v592 = vmax.f32 %v502, 0.0
      %v593 = vmax.f32 %v507, 0.0
      %v594 = vmax.f32 %v510, 0.0
      %v595 = vmax.f32 %v515, 0.0
      %v596 = vmax.f32 %v518, 0.0
      %v597 = vmax.f32 %v523, 0.0
      %v598 = vmax.f32 %v526, 0.0
      %v599 = vmax.f32 %v531, 0.0
      %v600 = vmax.f32 %v534, 0.0
      %v601 = vmax.f32 %v539, 0.0
      %v602 = vmax.f32 %v542, 0.0
      %v603 = vmax.f32 %v547, 0.0
      %v604 = vmax.f32 %v550, 0.0
      %v605 = vmax.f32 %v555, 0.0
      %v606 = vmax.f32 %v558, 0.0
      %v607 = vmax.f32 %v563, 0.0
      %v608 = vmax.f32 %v566, 0.0
      %v609 = vmax.f32 %v571, 0.0
      %v610 = vmax.f32 %v574, 0.0
      %vm611 = vcmask 261120
      %v612 = vsel %vm611, %v579, 0.0
      %v613 = vsel %vm611, %v580, 0.0
      %v614 = vadd.f32 %v612, %v613
      %v615 = vsel %vm611, %v581, 0.0
      %v616 = vadd.f32 %v614, %v615
      %v617 = vsel %vm611, %v582, 0.0
      %v618 = vadd.f32 %v616, %v617
      %v619 = vsel %vm611, %v583, 0.0
      %v620 = vadd.f32 %v618, %v619
      %v621 = vsel %vm611, %v584, 0.0
      %v622 = vadd.f32 %v620, %v621
      %v623 = vsel %vm611, %v585, 0.0
      %v624 = vadd.f32 %v622, %v623
      %v625 = vsel %vm611, %v586, 0.0
      %v626 = vadd.f32 %v624, %v625
      %v627 = vsel %vm611, %v587, 0.0
      %v628 = vadd.f32 %v626, %v627
      %v629 = vsel %vm611, %v588, 0.0
      %v630 = vadd.f32 %v628, %v629
      %v631 = vsel %vm611, %v589, 0.0
      %v632 = vadd.f32 %v630, %v631
      %v633 = vsel %vm611, %v590, 0.0
      %v634 = vadd.f32 %v632, %v633
      %v635 = vsel %vm611, %v591, 0.0
      %v636 = vadd.f32 %v634, %v635
      %v637 = vsel %vm611, %v592, 0.0
      %v638 = vadd.f32 %v636, %v637
      %v639 = vsel %vm611, %v593, 0.0
      %v640 = vadd.f32 %v638, %v639
      %v641 = vsel %vm611, %v594, 0.0
      %v642 = vadd.f32 %v640, %v641
      %v643 = vsel %vm611, %v595, 0.0
      %v644 = vadd.f32 %v642, %v643
      %v645 = vsel %vm611, %v596, 0.0
      %v646 = vadd.f32 %v644, %v645
      %v647 = vsel %vm611, %v597, 0.0
      %v648 = vadd.f32 %v646, %v647
      %v649 = vsel %vm611, %v598, 0.0
      %v650 = vadd.f32 %v648, %v649
      %v651 = vsel %vm611, %v599, 0.0
      %v652 = vadd.f32 %v650, %v651
      %v653 = vsel %vm611, %v600, 0.0
      %v654 = vadd.f32 %v652, %v653
      %v655 = vsel %vm611, %v601, 0.0
      %v656 = vadd.f32 %v654, %v655
      %v657 = vsel %vm611, %v602, 0.0
      %v658 = vadd.f32 %v656, %v657
      %v659 = vsel %vm611, %v603, 0.0
      %v660 = vadd.f32 %v658, %v659
      %v661 = vsel %vm611, %v604, 0.0
      %v662 = vadd.f32 %v660, %v661
      %v663 = vsel %vm611, %v605, 0.0
      %v664 = vadd.f32 %v662, %v663
      %v665 = vsel %vm611, %v606, 0.0
      %v666 = vadd.f32 %v664, %v665
      %v667 = vsel %vm611, %v607, 0.0
      %v668 = vadd.f32 %v666, %v667
      %v669 = vsel %vm611, %v608, 0.0
      %v670 = vadd.f32 %v668, %v669
      %v671 = vsel %vm611, %v609, 0.0
      %v672 = vadd.f32 %v670, %v671
      %v673 = vsel %vm611, %v610, 0.0
      %v674 = vadd.f32 %v672, %v673
      %v675 = vrot.slane %v674, 4
      %v676 = vadd.f32 %v674, %v675
      %v677 = vrot.slane %v676, 2
      %v678 = vadd.f32 %v676, %v677
      %v679 = vrot.slane %v678, 1
      %v680 = vadd.f32 %v678, %v679
      %v681 = vmul.f32 %v579, %v579
      %v682 = vmul.f32 %v580, %v580
      %v683 = vmul.f32 %v581, %v581
      %v684 = vmul.f32 %v582, %v582
      %v685 = vmul.f32 %v583, %v583
      %v686 = vmul.f32 %v584, %v584
      %v687 = vmul.f32 %v585, %v585
      %v688 = vmul.f32 %v586, %v586
      %v689 = vmul.f32 %v587, %v587
      %v690 = vmul.f32 %v588, %v588
      %v691 = vmul.f32 %v589, %v589
      %v692 = vmul.f32 %v590, %v590
      %v693 = vmul.f32 %v591, %v591
      %v694 = vmul.f32 %v592, %v592
      %v695 = vmul.f32 %v593, %v593
      %v696 = vmul.f32 %v594, %v594
      %v697 = vmul.f32 %v595, %v595
      %v698 = vmul.f32 %v596, %v596
      %v699 = vmul.f32 %v597, %v597
      %v700 = vmul.f32 %v598, %v598
      %v701 = vmul.f32 %v599, %v599
      %v702 = vmul.f32 %v600, %v600
      %v703 = vmul.f32 %v601, %v601
      %v704 = vmul.f32 %v602, %v602
      %v705 = vmul.f32 %v603, %v603
      %v706 = vmul.f32 %v604, %v604
      %v707 = vmul.f32 %v605, %v605
      %v708 = vmul.f32 %v606, %v606
      %v709 = vmul.f32 %v607, %v607
      %v710 = vmul.f32 %v608, %v608
      %v711 = vmul.f32 %v609, %v609
      %v712 = vmul.f32 %v610, %v610
      %v713 = vsel %vm611, %v681, 0.0
      %v714 = vsel %vm611, %v682, 0.0
      %v715 = vadd.f32 %v713, %v714
      %v716 = vsel %vm611, %v683, 0.0
      %v717 = vadd.f32 %v715, %v716
      %v718 = vsel %vm611, %v684, 0.0
      %v719 = vadd.f32 %v717, %v718
      %v720 = vsel %vm611, %v685, 0.0
      %v721 = vadd.f32 %v719, %v720
      %v722 = vsel %vm611, %v686, 0.0
      %v723 = vadd.f32 %v721, %v722
      %v724 = vsel %vm611, %v687, 0.0
      %v725 = vadd.f32 %v723, %v724
      %v726 = vsel %vm611, %v688, 0.0
      %v727 = vadd.f32 %v725, %v726
      %v728 = vsel %vm611, %v689, 0.0
      %v729 = vadd.f32 %v727, %v728
      %v730 = vsel %vm611, %v690, 0.0
      %v731 = vadd.f32 %v729, %v730
      %v732 = vsel %vm611, %v691, 0.0
      %v733 = vadd.f32 %v731, %v732
      %v734 = vsel %vm611, %v692, 0.0
      %v735 = vadd.f32 %v733, %v734
      %v736 = vsel %vm611, %v693, 0.0
      %v737 = vadd.f32 %v735, %v736
      %v738 = vsel %vm611, %v694, 0.0
      %v739 = vadd.f32 %v737, %v738
      %v740 = vsel %vm611, %v695, 0.0
      %v741 = vadd.f32 %v739, %v740
      %v742 = vsel %vm611, %v696, 0.0
      %v743 = vadd.f32 %v741, %v742
      %v744 = vsel %vm611, %v697, 0.0
      %v745 = vadd.f32 %v743, %v744
      %v746 = vsel %vm611, %v698, 0.0
      %v747 = vadd.f32 %v745, %v746
      %v748 = vsel %vm611, %v699, 0.0
      %v749 = vadd.f32 %v747, %v748
      %v750 = vsel %vm611, %v700, 0.0
      %v751 = vadd.f32 %v749, %v750
      %v752 = vsel %vm611, %v701, 0.0
      %v753 = vadd.f32 %v751, %v752
      %v754 = vsel %vm611, %v702, 0.0
      %v755 = vadd.f32 %v753, %v754
      %v756 = vsel %vm611, %v703, 0.0
      %v757 = vadd.f32 %v755, %v756
      %v758 = vsel %vm611, %v704, 0.0
      %v759 = vadd.f32 %v757, %v758
      %v760 = vsel %vm611, %v705, 0.0
      %v761 = vadd.f32 %v759, %v760
      %v762 = vsel %vm611, %v706, 0.0
      %v763 = vadd.f32 %v761, %v762
      %v764 = vsel %vm611, %v707, 0.0
      %v765 = vadd.f32 %v763, %v764
      %v766 = vsel %vm611, %v708, 0.0
      %v767 = vadd.f32 %v765, %v766
      %v768 = vsel %vm611, %v709, 0.0
      %v769 = vadd.f32 %v767, %v768
      %v770 = vsel %vm611, %v710, 0.0
      %v771 = vadd.f32 %v769, %v770
      %v772 = vsel %vm611, %v711, 0.0
      %v773 = vadd.f32 %v771, %v772
      %v774 = vsel %vm611, %v712, 0.0
      %v775 = vadd.f32 %v773, %v774
      %v776 = vrot.slane %v775, 4
      %v777 = vadd.f32 %v775, %v776
      %v778 = vrot.slane %v777, 2
      %v779 = vadd.f32 %v777, %v778
      %v780 = vrot.slane %v779, 1
      %v781 = vadd.f32 %v779, %v780
      %v782 = vmul.f32 %v680, 0.00390625
      %v783 = vmul.f32 %v781, 0.00390625
      %v784 = vmul.f32 %v782, %v782
      %v785 = vsub.f32 %v783, %v784
      %v786 = vmax.f32 %v785, 0.0
      %v787 = vadd.f32 %v786, 1e-05
      %v788 = vrsqrt.pop %v787
      %v789 = vsub.f32 %v579, %v782
      %v790 = vsub.f32 %v580, %v782
      %v791 = vsub.f32 %v581, %v782
      %v792 = vsub.f32 %v582, %v782
      %v793 = vsub.f32 %v583, %v782
      %v794 = vsub.f32 %v584, %v782
      %v795 = vsub.f32 %v585, %v782
      %v796 = vsub.f32 %v586, %v782
      %v797 = vsub.f32 %v587, %v782
      %v798 = vsub.f32 %v588, %v782
      %v799 = vsub.f32 %v589, %v782
      %v800 = vsub.f32 %v590, %v782
      %v801 = vsub.f32 %v591, %v782
      %v802 = vsub.f32 %v592, %v782
      %v803 = vsub.f32 %v593, %v782
      %v804 = vsub.f32 %v594, %v782
      %v805 = vsub.f32 %v595, %v782
      %v806 = vsub.f32 %v596, %v782
      %v807 = vsub.f32 %v597, %v782
      %v808 = vsub.f32 %v598, %v782
      %v809 = vsub.f32 %v599, %v782
      %v810 = vsub.f32 %v600, %v782
      %v811 = vsub.f32 %v601, %v782
      %v812 = vsub.f32 %v602, %v782
      %v813 = vsub.f32 %v603, %v782
      %v814 = vsub.f32 %v604, %v782
      %v815 = vsub.f32 %v605, %v782
      %v816 = vsub.f32 %v606, %v782
      %v817 = vsub.f32 %v607, %v782
      %v818 = vsub.f32 %v608, %v782
      %v819 = vsub.f32 %v609, %v782
      %v820 = vsub.f32 %v610, %v782
      %v821 = vmul.f32 %v788, %v577
      %v822 = vlaneseq
      %v823 = vshrl.u32 %v822, 7
      %v824 = vsub.s32 0, %v823
      %v825 = vrot.slane %v821, %v824
      %v826 = vmul.f32 %v789, %v825
      %v827 = vmul.f32 %v790, %v825
      %v828 = vmul.f32 %v791, %v825
      %v829 = vmul.f32 %v792, %v825
      %v830 = vmul.f32 %v793, %v825
      %v831 = vmul.f32 %v794, %v825
      %v832 = vmul.f32 %v795, %v825
      %v833 = vmul.f32 %v796, %v825
      %v834 = vmul.f32 %v797, %v825
      %v835 = vmul.f32 %v798, %v825
      %v836 = vmul.f32 %v799, %v825
      %v837 = vmul.f32 %v800, %v825
      %v838 = vmul.f32 %v801, %v825
      %v839 = vmul.f32 %v802, %v825
      %v840 = vmul.f32 %v803, %v825
      %v841 = vmul.f32 %v804, %v825
      %v842 = vmul.f32 %v805, %v825
      %v843 = vmul.f32 %v806, %v825
      %v844 = vmul.f32 %v807, %v825
      %v845 = vmul.f32 %v808, %v825
      %v846 = vmul.f32 %v809, %v825
      %v847 = vmul.f32 %v810, %v825
      %v848 = vmul.f32 %v811, %v825
      %v849 = vmul.f32 %v812, %v825
      %v850 = vmul.f32 %v813, %v825
      %v851 = vmul.f32 %v814, %v825
      %v852 = vmul.f32 %v815, %v825
      %v853 = vmul.f32 %v816, %v825
      %v854 = vmul.f32 %v817, %v825
      %v855 = vmul.f32 %v818, %v825
      %v856 = vmul.f32 %v819, %v825
      %v857 = vmul.f32 %v820, %v825
      %v858 = vlaneseq
      %v859 = vshrl.u32 %v858, 7
      %v860 = vsub.s32 0, %v859
      %v861 = vrot.slane %v578, %v860
      %v862 = vadd.f32 %v826, %v861
      %v863 = vadd.f32 %v827, %v861
      %v864 = vadd.f32 %v828, %v861
      %v865 = vadd.f32 %v829, %v861
      %v866 = vadd.f32 %v830, %v861
      %v867 = vadd.f32 %v831, %v861
      %v868 = vadd.f32 %v832, %v861
      %v869 = vadd.f32 %v833, %v861
      %v870 = vadd.f32 %v834, %v861
      %v871 = vadd.f32 %v835, %v861
      %v872 = vadd.f32 %v836, %v861
      %v873 = vadd.f32 %v837, %v861
      %v874 = vadd.f32 %v838, %v861
      %v875 = vadd.f32 %v839, %v861
      %v876 = vadd.f32 %v840, %v861
      %v877 = vadd.f32 %v841, %v861
      %v878 = vadd.f32 %v842, %v861
      %v879 = vadd.f32 %v843, %v861
      %v880 = vadd.f32 %v844, %v861
      %v881 = vadd.f32 %v845, %v861
      %v882 = vadd.f32 %v846, %v861
      %v883 = vadd.f32 %v847, %v861
      %v884 = vadd.f32 %v848, %v861
      %v885 = vadd.f32 %v849, %v861
      %v886 = vadd.f32 %v850, %v861
      %v887 = vadd.f32 %v851, %v861
      %v888 = vadd.f32 %v852, %v861
      %v889 = vadd.f32 %v853, %v861
      %v890 = vadd.f32 %v854, %v861
      %v891 = vadd.f32 %v855, %v861
      %v892 = vadd.f32 %v856, %v861
      %v893 = vadd.f32 %v857, %v861
      %v894 = vld [vmem:[%s212] sm:$0xff]
      %v895 = vld [vmem:[%s212 + $0x8] sm:$0xff]
      %v896 = vld [vmem:[%s212 + $0x10] sm:$0xff]
      %v897 = vld [vmem:[%s212 + $0x18] sm:$0xff]
      %v898 = vld [vmem:[%s212 + $0x20] sm:$0xff]
      %v899 = vld [vmem:[%s212 + $0x28] sm:$0xff]
      %v900 = vld [vmem:[%s212 + $0x30] sm:$0xff]
      %v901 = vld [vmem:[%s212 + $0x38] sm:$0xff]
      %v902 = vld [vmem:[%s212 + $0x40] sm:$0xff]
      %v903 = vld [vmem:[%s212 + $0x48] sm:$0xff]
      %v904 = vld [vmem:[%s212 + $0x50] sm:$0xff]
      %v905 = vld [vmem:[%s212 + $0x58] sm:$0xff]
      %v906 = vld [vmem:[%s212 + $0x60] sm:$0xff]
      %v907 = vld [vmem:[%s212 + $0x68] sm:$0xff]
      %v908 = vld [vmem:[%s212 + $0x70] sm:$0xff]
      %v909 = vld [vmem:[%s212 + $0x78] sm:$0xff]
      %v910 = vld [vmem:[%s212 + $0x80] sm:$0xff]
      %v911 = vld [vmem:[%s212 + $0x88] sm:$0xff]
      %v912 = vld [vmem:[%s212 + $0x90] sm:$0xff]
      %v913 = vld [vmem:[%s212 + $0x98] sm:$0xff]
      %v914 = vld [vmem:[%s212 + $0xa0] sm:$0xff]
      %v915 = vld [vmem:[%s212 + $0xa8] sm:$0xff]
      %v916 = vld [vmem:[%s212 + $0xb0] sm:$0xff]
      %v917 = vld [vmem:[%s212 + $0xb8] sm:$0xff]
      %v918 = vld [vmem:[%s212 + $0xc0] sm:$0xff]
      %v919 = vld [vmem:[%s212 + $0xc8] sm:$0xff]
      %v920 = vld [vmem:[%s212 + $0xd0] sm:$0xff]
      %v921 = vld [vmem:[%s212 + $0xd8] sm:$0xff]
      %v922 = vld [vmem:[%s212 + $0xe0] sm:$0xff]
      %v923 = vld [vmem:[%s212 + $0xe8] sm:$0xff]
      %v924 = vld [vmem:[%s212 + $0xf0] sm:$0xff]
      %v925 = vld [vmem:[%s212 + $0xf8] sm:$0xff]
      %v926 = vadd.f32 %v862, %v894
      %v927 = vadd.f32 %v863, %v895
      %v928 = vadd.f32 %v864, %v896
      %v929 = vadd.f32 %v865, %v897
      %v930 = vadd.f32 %v866, %v898
      %v931 = vadd.f32 %v867, %v899
      %v932 = vadd.f32 %v868, %v900
      %v933 = vadd.f32 %v869, %v901
      %v934 = vadd.f32 %v870, %v902
      %v935 = vadd.f32 %v871, %v903
      %v936 = vadd.f32 %v872, %v904
      %v937 = vadd.f32 %v873, %v905
      %v938 = vadd.f32 %v874, %v906
      %v939 = vadd.f32 %v875, %v907
      %v940 = vadd.f32 %v876, %v908
      %v941 = vadd.f32 %v877, %v909
      %v942 = vadd.f32 %v878, %v910
      %v943 = vadd.f32 %v879, %v911
      %v944 = vadd.f32 %v880, %v912
      %v945 = vadd.f32 %v881, %v913
      %v946 = vadd.f32 %v882, %v914
      %v947 = vadd.f32 %v883, %v915
      %v948 = vadd.f32 %v884, %v916
      %v949 = vadd.f32 %v885, %v917
      %v950 = vadd.f32 %v886, %v918
      %v951 = vadd.f32 %v887, %v919
      %v952 = vadd.f32 %v888, %v920
      %v953 = vadd.f32 %v889, %v921
      %v954 = vadd.f32 %v890, %v922
      %v955 = vadd.f32 %v891, %v923
      %v956 = vadd.f32 %v892, %v924
      %v957 = vadd.f32 %v893, %v925
      %958 = vst.msk [vmem:[#allocation4] sm:$0xff] %vm611, %v926
      %959 = vst.msk [vmem:[#allocation4 + $0x8] sm:$0xff] %vm611, %v927
      %960 = vst.msk [vmem:[#allocation4 + $0x10] sm:$0xff] %vm611, %v928
      %961 = vst.msk [vmem:[#allocation4 + $0x18] sm:$0xff] %vm611, %v929
      %962 = vst.msk [vmem:[#allocation4 + $0x20] sm:$0xff] %vm611, %v930
      %963 = vst.msk [vmem:[#allocation4 + $0x28] sm:$0xff] %vm611, %v931
      %964 = vst.msk [vmem:[#allocation4 + $0x30] sm:$0xff] %vm611, %v932
      %965 = vst.msk [vmem:[#allocation4 + $0x38] sm:$0xff] %vm611, %v933
      %966 = vst.msk [vmem:[#allocation4 + $0x40] sm:$0xff] %vm611, %v934
      %967 = vst.msk [vmem:[#allocation4 + $0x48] sm:$0xff] %vm611, %v935
      %968 = vst.msk [vmem:[#allocation4 + $0x50] sm:$0xff] %vm611, %v936
      %969 = vst.msk [vmem:[#allocation4 + $0x58] sm:$0xff] %vm611, %v937
      %970 = vst.msk [vmem:[#allocation4 + $0x60] sm:$0xff] %vm611, %v938
      %971 = vst.msk [vmem:[#allocation4 + $0x68] sm:$0xff] %vm611, %v939
      %972 = vst.msk [vmem:[#allocation4 + $0x70] sm:$0xff] %vm611, %v940
      %973 = vst.msk [vmem:[#allocation4 + $0x78] sm:$0xff] %vm611, %v941
      %974 = vst.msk [vmem:[#allocation4 + $0x80] sm:$0xff] %vm611, %v942
      %975 = vst.msk [vmem:[#allocation4 + $0x88] sm:$0xff] %vm611, %v943
      %976 = vst.msk [vmem:[#allocation4 + $0x90] sm:$0xff] %vm611, %v944
      %977 = vst.msk [vmem:[#allocation4 + $0x98] sm:$0xff] %vm611, %v945
      %978 = vst.msk [vmem:[#allocation4 + $0xa0] sm:$0xff] %vm611, %v946
      %979 = vst.msk [vmem:[#allocation4 + $0xa8] sm:$0xff] %vm611, %v947
      %980 = vst.msk [vmem:[#allocation4 + $0xb0] sm:$0xff] %vm611, %v948
      %981 = vst.msk [vmem:[#allocation4 + $0xb8] sm:$0xff] %vm611, %v949
      %982 = vst.msk [vmem:[#allocation4 + $0xc0] sm:$0xff] %vm611, %v950
      %983 = vst.msk [vmem:[#allocation4 + $0xc8] sm:$0xff] %vm611, %v951
      %984 = vst.msk [vmem:[#allocation4 + $0xd0] sm:$0xff] %vm611, %v952
      %985 = vst.msk [vmem:[#allocation4 + $0xd8] sm:$0xff] %vm611, %v953
      %986 = vst.msk [vmem:[#allocation4 + $0xe0] sm:$0xff] %vm611, %v954
      %987 = vst.msk [vmem:[#allocation4 + $0xe8] sm:$0xff] %vm611, %v955
      %988 = vst.msk [vmem:[#allocation4 + $0xf0] sm:$0xff] %vm611, %v956
      %989 = vst.msk [vmem:[#allocation4 + $0xf8] sm:$0xff] %vm611, %v957
      %990 = vst.msk [vmem:[#allocation4 + $0x100] sm:$0xff] %vm611, 0.0
      %v991 = vpack.c.bf16 %v927, %v926
      %v992 = vpack.c.bf16 %v929, %v928
      %v993 = vpack.c.bf16 %v931, %v930
      %v994 = vpack.c.bf16 %v933, %v932
      %v995 = vpack.c.bf16 %v935, %v934
      %v996 = vpack.c.bf16 %v937, %v936
      %v997 = vpack.c.bf16 %v939, %v938
      %v998 = vpack.c.bf16 %v941, %v940
      %v999 = vpack.c.bf16 %v943, %v942
      %v1000 = vpack.c.bf16 %v945, %v944
      %v1001 = vpack.c.bf16 %v947, %v946
      %v1002 = vpack.c.bf16 %v949, %v948
      %v1003 = vpack.c.bf16 %v951, %v950
      %v1004 = vpack.c.bf16 %v953, %v952
      %v1005 = vpack.c.bf16 %v955, %v954
      %v1006 = vpack.c.bf16 %v957, %v956
      %1007 = vst.msk [vmem:[#allocation2] sm:$0xff] %vm611, %v991
      %1008 = vst.msk [vmem:[#allocation2 + $0x8] sm:$0xff] %vm611, %v992
      %1009 = vst.msk [vmem:[#allocation2 + $0x10] sm:$0xff] %vm611, %v993
      %1010 = vst.msk [vmem:[#allocation2 + $0x18] sm:$0xff] %vm611, %v994
      %1011 = vst.msk [vmem:[#allocation2 + $0x20] sm:$0xff] %vm611, %v995
      %1012 = vst.msk [vmem:[#allocation2 + $0x28] sm:$0xff] %vm611, %v996
      %1013 = vst.msk [vmem:[#allocation2 + $0x30] sm:$0xff] %vm611, %v997
      %1014 = vst.msk [vmem:[#allocation2 + $0x38] sm:$0xff] %vm611, %v998
      %1015 = vst.msk [vmem:[#allocation2 + $0x40] sm:$0xff] %vm611, %v999
      %1016 = vst.msk [vmem:[#allocation2 + $0x48] sm:$0xff] %vm611, %v1000
      %1017 = vst.msk [vmem:[#allocation2 + $0x50] sm:$0xff] %vm611, %v1001
      %1018 = vst.msk [vmem:[#allocation2 + $0x58] sm:$0xff] %vm611, %v1002
      %1019 = vst.msk [vmem:[#allocation2 + $0x60] sm:$0xff] %vm611, %v1003
      %1020 = vst.msk [vmem:[#allocation2 + $0x68] sm:$0xff] %vm611, %v1004
      %1021 = vst.msk [vmem:[#allocation2 + $0x70] sm:$0xff] %vm611, %v1005
      %1022 = vst.msk [vmem:[#allocation2 + $0x78] sm:$0xff] %vm611, %v1006
      %v1023 = vld [vmem:[#allocation4 + $0x1] sm:$0xff]
      %v1024 = vld [vmem:[#allocation4 + $0x9] sm:$0xff]
      %v1025 = vld [vmem:[#allocation4 + $0x11] sm:$0xff]
      %v1026 = vld [vmem:[#allocation4 + $0x19] sm:$0xff]
      %v1027 = vld [vmem:[#allocation4 + $0x21] sm:$0xff]
      %v1028 = vld [vmem:[#allocation4 + $0x29] sm:$0xff]
      %v1029 = vld [vmem:[#allocation4 + $0x31] sm:$0xff]
      %v1030 = vld [vmem:[#allocation4 + $0x39] sm:$0xff]
      %v1031 = vld [vmem:[#allocation4 + $0x41] sm:$0xff]
      %v1032 = vld [vmem:[#allocation4 + $0x49] sm:$0xff]
      %v1033 = vld [vmem:[#allocation4 + $0x51] sm:$0xff]
      %v1034 = vld [vmem:[#allocation4 + $0x59] sm:$0xff]
      %v1035 = vld [vmem:[#allocation4 + $0x61] sm:$0xff]
      %v1036 = vld [vmem:[#allocation4 + $0x69] sm:$0xff]
      %v1037 = vld [vmem:[#allocation4 + $0x71] sm:$0xff]
      %v1038 = vld [vmem:[#allocation4 + $0x79] sm:$0xff]
      %v1039 = vld [vmem:[#allocation4 + $0x81] sm:$0xff]
      %v1040 = vld [vmem:[#allocation4 + $0x89] sm:$0xff]
      %v1041 = vld [vmem:[#allocation4 + $0x91] sm:$0xff]
      %v1042 = vld [vmem:[#allocation4 + $0x99] sm:$0xff]
      %v1043 = vld [vmem:[#allocation4 + $0xa1] sm:$0xff]
      %v1044 = vld [vmem:[#allocation4 + $0xa9] sm:$0xff]
      %v1045 = vld [vmem:[#allocation4 + $0xb1] sm:$0xff]
      %v1046 = vld [vmem:[#allocation4 + $0xb9] sm:$0xff]
      %v1047 = vld [vmem:[#allocation4 + $0xc1] sm:$0xff]
      %v1048 = vld [vmem:[#allocation4 + $0xc9] sm:$0xff]
      %v1049 = vld [vmem:[#allocation4 + $0xd1] sm:$0xff]
      %v1050 = vld [vmem:[#allocation4 + $0xd9] sm:$0xff]
      %v1051 = vld [vmem:[#allocation4 + $0xe1] sm:$0xff]
      %v1052 = vld [vmem:[#allocation4 + $0xe9] sm:$0xff]
      %v1053 = vld [vmem:[#allocation4 + $0xf1] sm:$0xff]
      %v1054 = vld [vmem:[#allocation4 + $0xf9] sm:$0xff]
      %v1055 = vpack.c.bf16 %v1024, %v1023
      %v1056 = vpack.c.bf16 %v1026, %v1025
      %v1057 = vpack.c.bf16 %v1028, %v1027
      %v1058 = vpack.c.bf16 %v1030, %v1029
      %v1059 = vpack.c.bf16 %v1032, %v1031
      %v1060 = vpack.c.bf16 %v1034, %v1033
      %v1061 = vpack.c.bf16 %v1036, %v1035
      %v1062 = vpack.c.bf16 %v1038, %v1037
      %v1063 = vpack.c.bf16 %v1040, %v1039
      %v1064 = vpack.c.bf16 %v1042, %v1041
      %v1065 = vpack.c.bf16 %v1044, %v1043
      %v1066 = vpack.c.bf16 %v1046, %v1045
      %v1067 = vpack.c.bf16 %v1048, %v1047
      %v1068 = vpack.c.bf16 %v1050, %v1049
      %v1069 = vpack.c.bf16 %v1052, %v1051
      %v1070 = vpack.c.bf16 %v1054, %v1053
      %1087 = vrot.lane.b32.xlu0 %v1055, 32
      %v1088 = vpop.permute.xlu0 %1087
      %1089 = vrot.lane.b32.xlu0 %v1056, 32
      %v1090 = vpop.permute.xlu0 %1089
      %1091 = vrot.lane.b32.xlu0 %v1057, 32
      %v1092 = vpop.permute.xlu0 %1091
      %1093 = vrot.lane.b32.xlu0 %v1058, 32
      %v1094 = vpop.permute.xlu0 %1093
      %1095 = vrot.lane.b32.xlu0 %v1059, 32
      %v1096 = vpop.permute.xlu0 %1095
      %1097 = vrot.lane.b32.xlu0 %v1060, 32
      %v1098 = vpop.permute.xlu0 %1097
      %1099 = vrot.lane.b32.xlu0 %v1061, 32
      %v1100 = vpop.permute.xlu0 %1099
      %1101 = vrot.lane.b32.xlu0 %v1062, 32
      %v1102 = vpop.permute.xlu0 %1101
      %1103 = vrot.lane.b32.xlu0 %v1063, 32
      %v1104 = vpop.permute.xlu0 %1103
      %1105 = vrot.lane.b32.xlu0 %v1064, 32
      %v1106 = vpop.permute.xlu0 %1105
      %1107 = vrot.lane.b32.xlu0 %v1065, 32
      %v1108 = vpop.permute.xlu0 %1107
      %1109 = vrot.lane.b32.xlu0 %v1066, 32
      %v1110 = vpop.permute.xlu0 %1109
      %1111 = vrot.lane.b32.xlu0 %v1067, 32
      %v1112 = vpop.permute.xlu0 %1111
      %1113 = vrot.lane.b32.xlu0 %v1068, 32
      %v1114 = vpop.permute.xlu0 %1113
      %1115 = vrot.lane.b32.xlu0 %v1069, 32
      %v1116 = vpop.permute.xlu0 %1115
      %1117 = vrot.lane.b32.xlu0 %v1070, 32
      %v1118 = vpop.permute.xlu0 %1117
      %vm1135 = vcmask 523520
      %1136 = vst.msk [vmem:[#allocation2] sm:$0xff] %vm1135, %v1088
      %1137 = vst.msk [vmem:[#allocation2 + $0x8] sm:$0xff] %vm1135, %v1090
      %1138 = vst.msk [vmem:[#allocation2 + $0x10] sm:$0xff] %vm1135, %v1092
      %1139 = vst.msk [vmem:[#allocation2 + $0x18] sm:$0xff] %vm1135, %v1094
      %1140 = vst.msk [vmem:[#allocation2 + $0x20] sm:$0xff] %vm1135, %v1096
      %1141 = vst.msk [vmem:[#allocation2 + $0x28] sm:$0xff] %vm1135, %v1098
      %1142 = vst.msk [vmem:[#allocation2 + $0x30] sm:$0xff] %vm1135, %v1100
      %1143 = vst.msk [vmem:[#allocation2 + $0x38] sm:$0xff] %vm1135, %v1102
      %1144 = vst.msk [vmem:[#allocation2 + $0x40] sm:$0xff] %vm1135, %v1104
      %1145 = vst.msk [vmem:[#allocation2 + $0x48] sm:$0xff] %vm1135, %v1106
      %1146 = vst.msk [vmem:[#allocation2 + $0x50] sm:$0xff] %vm1135, %v1108
      %1147 = vst.msk [vmem:[#allocation2 + $0x58] sm:$0xff] %vm1135, %v1110
      %1148 = vst.msk [vmem:[#allocation2 + $0x60] sm:$0xff] %vm1135, %v1112
      %1149 = vst.msk [vmem:[#allocation2 + $0x68] sm:$0xff] %vm1135, %v1114
      %1150 = vst.msk [vmem:[#allocation2 + $0x70] sm:$0xff] %vm1135, %v1116
      %1151 = vst.msk [vmem:[#allocation2 + $0x78] sm:$0xff] %vm1135, %v1118
      %v1152 = vld [vmem:[#allocation4 + $0x2] sm:$0xff]
      %v1153 = vld [vmem:[#allocation4 + $0xa] sm:$0xff]
      %v1154 = vld [vmem:[#allocation4 + $0x12] sm:$0xff]
      %v1155 = vld [vmem:[#allocation4 + $0x1a] sm:$0xff]
      %v1156 = vld [vmem:[#allocation4 + $0x22] sm:$0xff]
      %v1157 = vld [vmem:[#allocation4 + $0x2a] sm:$0xff]
      %v1158 = vld [vmem:[#allocation4 + $0x32] sm:$0xff]
      %v1159 = vld [vmem:[#allocation4 + $0x3a] sm:$0xff]
      %v1160 = vld [vmem:[#allocation4 + $0x42] sm:$0xff]
      %v1161 = vld [vmem:[#allocation4 + $0x4a] sm:$0xff]
      %v1162 = vld [vmem:[#allocation4 + $0x52] sm:$0xff]
      %v1163 = vld [vmem:[#allocation4 + $0x5a] sm:$0xff]
      %v1164 = vld [vmem:[#allocation4 + $0x62] sm:$0xff]
      %v1165 = vld [vmem:[#allocation4 + $0x6a] sm:$0xff]
      %v1166 = vld [vmem:[#allocation4 + $0x72] sm:$0xff]
      %v1167 = vld [vmem:[#allocation4 + $0x7a] sm:$0xff]
      %v1168 = vld [vmem:[#allocation4 + $0x82] sm:$0xff]
      %v1169 = vld [vmem:[#allocation4 + $0x8a] sm:$0xff]
      %v1170 = vld [vmem:[#allocation4 + $0x92] sm:$0xff]
      %v1171 = vld [vmem:[#allocation4 + $0x9a] sm:$0xff]
      %v1172 = vld [vmem:[#allocation4 + $0xa2] sm:$0xff]
      %v1173 = vld [vmem:[#allocation4 + $0xaa] sm:$0xff]
      %v1174 = vld [vmem:[#allocation4 + $0xb2] sm:$0xff]
      %v1175 = vld [vmem:[#allocation4 + $0xba] sm:$0xff]
      %v1176 = vld [vmem:[#allocation4 + $0xc2] sm:$0xff]
      %v1177 = vld [vmem:[#allocation4 + $0xca] sm:$0xff]
      %v1178 = vld [vmem:[#allocation4 + $0xd2] sm:$0xff]
      %v1179 = vld [vmem:[#allocation4 + $0xda] sm:$0xff]
      %v1180 = vld [vmem:[#allocation4 + $0xe2] sm:$0xff]
      %v1181 = vld [vmem:[#allocation4 + $0xea] sm:$0xff]
      %v1182 = vld [vmem:[#allocation4 + $0xf2] sm:$0xff]
      %v1183 = vld [vmem:[#allocation4 + $0xfa] sm:$0xff]
      %v1184 = vpack.c.bf16 %v1153, %v1152
      %v1185 = vpack.c.bf16 %v1155, %v1154
      %v1186 = vpack.c.bf16 %v1157, %v1156
      %v1187 = vpack.c.bf16 %v1159, %v1158
      %v1188 = vpack.c.bf16 %v1161, %v1160
      %v1189 = vpack.c.bf16 %v1163, %v1162
      %v1190 = vpack.c.bf16 %v1165, %v1164
      %v1191 = vpack.c.bf16 %v1167, %v1166
      %v1192 = vpack.c.bf16 %v1169, %v1168
      %v1193 = vpack.c.bf16 %v1171, %v1170
      %v1194 = vpack.c.bf16 %v1173, %v1172
      %v1195 = vpack.c.bf16 %v1175, %v1174
      %v1196 = vpack.c.bf16 %v1177, %v1176
      %v1197 = vpack.c.bf16 %v1179, %v1178
      %v1198 = vpack.c.bf16 %v1181, %v1180
      %v1199 = vpack.c.bf16 %v1183, %v1182
      %1216 = vrot.lane.b32.xlu0 %v1184, 64
      %v1217 = vpop.permute.xlu0 %1216
      %1218 = vrot.lane.b32.xlu0 %v1185, 64
      %v1219 = vpop.permute.xlu0 %1218
      %1220 = vrot.lane.b32.xlu0 %v1186, 64
      %v1221 = vpop.permute.xlu0 %1220
      %1222 = vrot.lane.b32.xlu0 %v1187, 64
      %v1223 = vpop.permute.xlu0 %1222
      %1224 = vrot.lane.b32.xlu0 %v1188, 64
      %v1225 = vpop.permute.xlu0 %1224
      %1226 = vrot.lane.b32.xlu0 %v1189, 64
      %v1227 = vpop.permute.xlu0 %1226
      %1228 = vrot.lane.b32.xlu0 %v1190, 64
      %v1229 = vpop.permute.xlu0 %1228
      %1230 = vrot.lane.b32.xlu0 %v1191, 64
      %v1231 = vpop.permute.xlu0 %1230
      %1232 = vrot.lane.b32.xlu0 %v1192, 64
      %v1233 = vpop.permute.xlu0 %1232
      %1234 = vrot.lane.b32.xlu0 %v1193, 64
      %v1235 = vpop.permute.xlu0 %1234
      %1236 = vrot.lane.b32.xlu0 %v1194, 64
      %v1237 = vpop.permute.xlu0 %1236
      %1238 = vrot.lane.b32.xlu0 %v1195, 64
      %v1239 = vpop.permute.xlu0 %1238
      %1240 = vrot.lane.b32.xlu0 %v1196, 64
      %v1241 = vpop.permute.xlu0 %1240
      %1242 = vrot.lane.b32.xlu0 %v1197, 64
      %v1243 = vpop.permute.xlu0 %1242
      %1244 = vrot.lane.b32.xlu0 %v1198, 64
      %v1245 = vpop.permute.xlu0 %1244
      %1246 = vrot.lane.b32.xlu0 %v1199, 64
      %v1247 = vpop.permute.xlu0 %1246
      %vm1264 = vcmask 785920
      %1265 = vst.msk [vmem:[#allocation2] sm:$0xff] %vm1264, %v1217
      %1266 = vst.msk [vmem:[#allocation2 + $0x8] sm:$0xff] %vm1264, %v1219
      %1267 = vst.msk [vmem:[#allocation2 + $0x10] sm:$0xff] %vm1264, %v1221
      %1268 = vst.msk [vmem:[#allocation2 + $0x18] sm:$0xff] %vm1264, %v1223
      %1269 = vst.msk [vmem:[#allocation2 + $0x20] sm:$0xff] %vm1264, %v1225
      %1270 = vst.msk [vmem:[#allocation2 + $0x28] sm:$0xff] %vm1264, %v1227
      %1271 = vst.msk [vmem:[#allocation2 + $0x30] sm:$0xff] %vm1264, %v1229
      %1272 = vst.msk [vmem:[#allocation2 + $0x38] sm:$0xff] %vm1264, %v1231
      %1273 = vst.msk [vmem:[#allocation2 + $0x40] sm:$0xff] %vm1264, %v1233
      %1274 = vst.msk [vmem:[#allocation2 + $0x48] sm:$0xff] %vm1264, %v1235
      %1275 = vst.msk [vmem:[#allocation2 + $0x50] sm:$0xff] %vm1264, %v1237
      %1276 = vst.msk [vmem:[#allocation2 + $0x58] sm:$0xff] %vm1264, %v1239
      %1277 = vst.msk [vmem:[#allocation2 + $0x60] sm:$0xff] %vm1264, %v1241
      %1278 = vst.msk [vmem:[#allocation2 + $0x68] sm:$0xff] %vm1264, %v1243
      %1279 = vst.msk [vmem:[#allocation2 + $0x70] sm:$0xff] %vm1264, %v1245
      %1280 = vst.msk [vmem:[#allocation2 + $0x78] sm:$0xff] %vm1264, %v1247
      %v1281 = vld [vmem:[%s3 + $0x3] sm:$0x1]
      %v1282 = vld [vmem:[#allocation2] sm:$0xff]
      %v1283 = vld [vmem:[#allocation2 + $0x8] sm:$0xff]
      %v1284 = vld [vmem:[#allocation2 + $0x10] sm:$0xff]
      %v1285 = vld [vmem:[#allocation2 + $0x18] sm:$0xff]
      %v1286 = vld [vmem:[#allocation2 + $0x20] sm:$0xff]
      %v1287 = vld [vmem:[#allocation2 + $0x28] sm:$0xff]
      %v1288 = vld [vmem:[#allocation2 + $0x30] sm:$0xff]
      %v1289 = vld [vmem:[#allocation2 + $0x38] sm:$0xff]
      %v1290 = vld [vmem:[#allocation2 + $0x40] sm:$0xff]
      %v1291 = vld [vmem:[#allocation2 + $0x48] sm:$0xff]
      %v1292 = vld [vmem:[#allocation2 + $0x50] sm:$0xff]
      %v1293 = vld [vmem:[#allocation2 + $0x58] sm:$0xff]
      %v1294 = vld [vmem:[#allocation2 + $0x60] sm:$0xff]
      %v1295 = vld [vmem:[#allocation2 + $0x68] sm:$0xff]
      %v1296 = vld [vmem:[%s2 + $0x40] sm:$0xf]
      %v1297 = vld [vmem:[%s2 + $0x44] sm:$0xf]
      %v1298 = vld [vmem:[%s2 + $0x48] sm:$0xf]
      %v1299 = vld [vmem:[%s2 + $0x4c] sm:$0xf]
      %v1300 = vld [vmem:[%s2 + $0x50] sm:$0xf]
      %v1301 = vld [vmem:[%s2 + $0x54] sm:$0xf]
      %v1302 = vld [vmem:[%s2 + $0x58] sm:$0xf]
      %v1303 = vld [vmem:[%s2 + $0x5c] sm:$0xf]
      %v1304 = vld [vmem:[%s2 + $0x60] sm:$0xf]
      %v1305 = vld [vmem:[%s2 + $0x64] sm:$0xf]
      %v1306 = vld [vmem:[%s2 + $0x68] sm:$0xf]
      %v1307 = vld [vmem:[%s2 + $0x6c] sm:$0xf]
      %v1308 = vld [vmem:[#allocation2 + $0x70] sm:$0xff]
      %v1309 = vld [vmem:[%s2 + $0x70] sm:$0xf]
      %v1310 = vld [vmem:[%s2 + $0x74] sm:$0xf]
      %v1311 = vld [vmem:[%s2 + $0x78] sm:$0xf]
      %v1312 = vld [vmem:[%s2 + $0x7c] sm:$0xf]
      %v1313 = vld [vmem:[%s2 + $0x80] sm:$0xf]
      %v1314 = vld [vmem:[%s2 + $0x84] sm:$0xf]
      %v1315 = vld [vmem:[%s2 + $0x88] sm:$0xf]
      %v1316 = vld [vmem:[%s2 + $0x8c] sm:$0xf]
      %v1317 = vld [vmem:[%s2 + $0x90] sm:$0xf]
      %v1318 = vld [vmem:[%s2 + $0x94] sm:$0xf]
      %v1319 = vld [vmem:[%s2 + $0x98] sm:$0xf]
      %v1320 = vld [vmem:[%s2 + $0x9c] sm:$0xf]
      %v1333 = vunpack.c.l.b16 %v1309
      %v1334 = vunpack.c.l.b16 %v1310
      %v1335 = vunpack.c.l.b16 %v1311
      %v1336 = vunpack.c.l.b16 %v1312
      %v1337 = vunpack.c.l.b16 %v1313
      %v1338 = vunpack.c.l.b16 %v1314
      %v1339 = vunpack.c.l.b16 %v1315
      %v1340 = vunpack.c.l.b16 %v1316
      %v1341 = vunpack.c.l.b16 %v1317
      %v1342 = vunpack.c.l.b16 %v1318
      %v1343 = vunpack.c.l.b16 %v1319
      %v1344 = vunpack.c.l.b16 %v1320
      %v1345 = vpack.c.b16 %v1334, %v1333
      %v1346 = vpack.c.b16 %v1336, %v1335
      %v1347 = vpack.c.b16 %v1338, %v1337
      %v1348 = vpack.c.b16 %v1340, %v1339
      %v1349 = vpack.c.b16 %v1342, %v1341
      %v1350 = vpack.c.b16 %v1344, %v1343
      %vm1357 = vcmask 785408
      %v1359 = vsel %vm1357, %v1283, 0
      %v1362 = vsel %vm1357, %v1284, 0
      %v1365 = vsel %vm1357, %v1285, 0
      %v1368 = vsel %vm1357, %v1286, 0
      %v1371 = vsel %vm1357, %v1287, 0
      %v1374 = vsel %vm1357, %v1288, 0
      %v1377 = vsel %vm1357, %v1289, 0
      %v1380 = vsel %vm1357, %v1290, 0
      %v1383 = vsel %vm1357, %v1291, 0
      %v1386 = vsel %vm1357, %v1292, 0
      %v1389 = vsel %vm1357, %v1293, 0
      %v1392 = vsel %vm1357, %v1294, 0
      %v1395 = vsel %vm1357, %v1295, 0
      %v1398 = vsel %vm1357, %v1308, 0
      %1400 = vmatprep.subr.bf16.mxu0 0
      %1401 = vmatpush1.bf16.msra.mxu0 %v1345
      %1402 = vmatprep.subr.bf16.mxu0 0
      %1403 = vmatpush1.bf16.msra.mxu0 %v1346
      %1404 = vmatprep.subr.bf16.mxu0 0
      %1405 = vmatpush1.bf16.msra.mxu0 %v1347
      %1406 = vmatprep.subr.bf16.mxu0 0
      %1407 = vmatpush1.bf16.msra.mxu0 %v1348
      %1408 = vmatprep.subr.bf16.mxu0 0
      %1409 = vmatpush1.bf16.msra.mxu0 %v1349
      %1410 = vmatprep.subr.bf16.mxu0 0
      %1411 = vmatpush1.bf16.msra.mxu0 %v1350
      %1412 = vmatprep.subr.bf16.mxu0 0
      %1413 = vmatpush1.bf16.msra.mxu0 0
      %1414 = vmatprep.subr.bf16.mxu0 0
      %1415 = vmatpush1.bf16.msra.mxu0 0
      %1416 = vmatprep.subr.bf16.mxu0 0
      %1417 = vmatpush1.bf16.msra.mxu0 0
      %1418 = vmatprep.subr.bf16.mxu0 0
      %1419 = vmatpush1.bf16.msra.mxu0 0
      %1420 = vmatprep.subr.bf16.mxu0 0
      %1421 = vmatpush1.bf16.msra.mxu0 0
      %1422 = vmatprep.subr.bf16.mxu0 0
      %1423 = vmatpush1.bf16.msra.mxu0 0
      %1424 = vmatprep.subr.bf16.mxu0 0
      %1425 = vmatpush1.bf16.msra.mxu0 0
      %1426 = vmatprep.subr.bf16.mxu0 0
      %1427 = vmatpush1.bf16.msra.mxu0 0
      %1428 = vmatprep.subr.bf16.mxu0 0
      %1429 = vmatpush1.bf16.msra.mxu0 0
      %1430 = vmatprep.subr.bf16.mxu0 0
      %1431 = vmatpush1.bf16.msra.mxu0 0
      %1432 = vmatprep.mubr.bf16.mxu0 0
      %1433 = vmatmul.mubr.bf16.gmra.mrb[0].mxu0 %v1359
      %v1434 = vpop.f32.mrb[0].mxu0
      %v1435 = vadd.f32 0.0, %v1434
      %v1436 = vpop.f32.mrb[0].mxu0
      %v1437 = vpop.f32.mrb[0].mxu0
      %v1438 = vadd.f32 0.0, %v1437
      %v1439 = vpop.f32.mrb[0].mxu0
      %1440 = vmatprep.mubr.bf16.mxu0 0
      %1441 = vmatmul.mubr.bf16.gmra.mrb[0].mxu0 %v1362
      %v1442 = vpop.f32.mrb[0].mxu0
      %v1443 = vadd.f32 0.0, %v1442
      %v1444 = vpop.f32.mrb[0].mxu0
      %v1445 = vpop.f32.mrb[0].mxu0
      %v1446 = vadd.f32 0.0, %v1445
      %v1447 = vpop.f32.mrb[0].mxu0
      %1448 = vmatprep.mubr.bf16.mxu0 0
      %1449 = vmatmul.mubr.bf16.gmra.mrb[0].mxu0 %v1365
      %v1450 = vpop.f32.mrb[0].mxu0
      %v1451 = vadd.f32 0.0, %v1450
      %v1452 = vpop.f32.mrb[0].mxu0
      %v1453 = vpop.f32.mrb[0].mxu0
      %v1454 = vadd.f32 0.0, %v1453
      %v1455 = vpop.f32.mrb[0].mxu0
      %1456 = vmatprep.mubr.bf16.mxu0 0
      %1457 = vmatmul.mubr.bf16.gmra.mrb[0].mxu0 %v1368
      %v1458 = vpop.f32.mrb[0].mxu0
      %v1459 = vadd.f32 0.0, %v1458
      %v1460 = vpop.f32.mrb[0].mxu0
      %v1461 = vpop.f32.mrb[0].mxu0
      %v1462 = vadd.f32 0.0, %v1461
      %v1463 = vpop.f32.mrb[0].mxu0
      %1464 = vmatprep.mubr.bf16.mxu0 0
      %1465 = vmatmul.mubr.bf16.gmra.mrb[0].mxu0 %v1371
      %v1466 = vpop.f32.mrb[0].mxu0
      %v1467 = vadd.f32 0.0, %v1466
      %v1468 = vpop.f32.mrb[0].mxu0
      %v1469 = vpop.f32.mrb[0].mxu0
      %v1470 = vadd.f32 0.0, %v1469
      %v1471 = vpop.f32.mrb[0].mxu0
      %1472 = vmatprep.mubr.bf16.mxu0 0
      %1473 = vmatmul.mubr.bf16.gmra.mrb[0].mxu0 %v1374
      %v1474 = vpop.f32.mrb[0].mxu0
      %v1475 = vadd.f32 0.0, %v1474
      %v1476 = vpop.f32.mrb[0].mxu0
      %v1477 = vpop.f32.mrb[0].mxu0
      %v1478 = vadd.f32 0.0, %v1477
      %v1479 = vpop.f32.mrb[0].mxu0
      %1480 = vmatprep.mubr.bf16.mxu0 0
      %1481 = vmatmul.mubr.bf16.gmra.mrb[0].mxu0 %v1377
      %v1482 = vpop.f32.mrb[0].mxu0
      %v1483 = vadd.f32 0.0, %v1482
      %v1484 = vpop.f32.mrb[0].mxu0
      %v1485 = vpop.f32.mrb[0].mxu0
      %v1486 = vadd.f32 0.0, %v1485
      %v1487 = vpop.f32.mrb[0].mxu0
      %1488 = vmatprep.mubr.bf16.mxu0 0
      %1489 = vmatmul.mubr.bf16.gmra.mrb[0].mxu0 %v1380
      %v1490 = vpop.f32.mrb[0].mxu0
      %v1491 = vadd.f32 0.0, %v1490
      %v1492 = vpop.f32.mrb[0].mxu0
      %v1493 = vpop.f32.mrb[0].mxu0
      %v1494 = vadd.f32 0.0, %v1493
      %v1495 = vpop.f32.mrb[0].mxu0
      %1496 = vmatprep.mubr.bf16.mxu0 0
      %1497 = vmatmul.mubr.bf16.gmra.mrb[0].mxu0 %v1383
      %v1498 = vpop.f32.mrb[0].mxu0
      %v1499 = vadd.f32 0.0, %v1498
      %v1500 = vpop.f32.mrb[0].mxu0
      %v1501 = vpop.f32.mrb[0].mxu0
      %v1502 = vadd.f32 0.0, %v1501
      %v1503 = vpop.f32.mrb[0].mxu0
      %1504 = vmatprep.mubr.bf16.mxu0 0
      %1505 = vmatmul.mubr.bf16.gmra.mrb[0].mxu0 %v1386
      %v1506 = vpop.f32.mrb[0].mxu0
      %v1507 = vadd.f32 0.0, %v1506
      %v1508 = vpop.f32.mrb[0].mxu0
      %v1509 = vpop.f32.mrb[0].mxu0
      %v1510 = vadd.f32 0.0, %v1509
      %v1511 = vpop.f32.mrb[0].mxu0
      %1512 = vmatprep.mubr.bf16.mxu0 0
      %1513 = vmatmul.mubr.bf16.gmra.mrb[0].mxu0 %v1389
      %v1514 = vpop.f32.mrb[0].mxu0
      %v1515 = vadd.f32 0.0, %v1514
      %v1516 = vpop.f32.mrb[0].mxu0
      %v1517 = vpop.f32.mrb[0].mxu0
      %v1518 = vadd.f32 0.0, %v1517
      %v1519 = vpop.f32.mrb[0].mxu0
      %1520 = vmatprep.mubr.bf16.mxu0 0
      %1521 = vmatmul.mubr.bf16.gmra.mrb[0].mxu0 %v1392
      %v1522 = vpop.f32.mrb[0].mxu0
      %v1523 = vadd.f32 0.0, %v1522
      %v1524 = vpop.f32.mrb[0].mxu0
      %v1525 = vpop.f32.mrb[0].mxu0
      %v1526 = vadd.f32 0.0, %v1525
      %v1527 = vpop.f32.mrb[0].mxu0
      %1528 = vmatprep.mubr.bf16.mxu0 0
      %1529 = vmatmul.mubr.bf16.gmra.mrb[0].mxu0 %v1395
      %v1530 = vpop.f32.mrb[0].mxu0
      %v1531 = vadd.f32 0.0, %v1530
      %v1532 = vpop.f32.mrb[0].mxu0
      %v1533 = vpop.f32.mrb[0].mxu0
      %v1534 = vadd.f32 0.0, %v1533
      %v1535 = vpop.f32.mrb[0].mxu0
      %1536 = vmatprep.mubr.bf16.mxu0 0
      %1537 = vmatmul.mubr.bf16.gmra.mrb[0].mxu0 %v1398
      %v1538 = vpop.f32.mrb[0].mxu0
      %v1539 = vadd.f32 0.0, %v1538
      %v1540 = vpop.f32.mrb[0].mxu0
      %v1541 = vpop.f32.mrb[0].mxu0
      %v1542 = vadd.f32 0.0, %v1541
      %v1543 = vpop.f32.mrb[0].mxu0
      %1544 = vdwg.mxu0
      %v1557 = vunpack.c.l.b16 %v1296
      %v1558 = vunpack.c.l.b16 %v1297
      %v1559 = vunpack.c.l.b16 %v1298
      %v1560 = vunpack.c.l.b16 %v1299
      %v1561 = vunpack.c.l.b16 %v1300
      %v1562 = vunpack.c.l.b16 %v1301
      %v1563 = vunpack.c.l.b16 %v1302
      %v1564 = vunpack.c.l.b16 %v1303
      %v1565 = vunpack.c.l.b16 %v1304
      %v1566 = vunpack.c.l.b16 %v1305
      %v1567 = vunpack.c.l.b16 %v1306
      %v1568 = vunpack.c.l.b16 %v1307
      %v1569 = vpack.c.b16 %v1558, %v1557
      %v1570 = vpack.c.b16 %v1560, %v1559
      %v1571 = vpack.c.b16 %v1562, %v1561
      %v1572 = vpack.c.b16 %v1564, %v1563
      %v1573 = vpack.c.b16 %v1566, %v1565
      %v1574 = vpack.c.b16 %v1568, %v1567
      %v1582 = vsel %vm1357, %v1282, 0
      %1584 = vmatprep.subr.bf16.mxu0 0
      %1585 = vmatpush1.bf16.msra.mxu0 %v1569
      %1586 = vmatprep.subr.bf16.mxu0 0
      %1587 = vmatpush1.bf16.msra.mxu0 %v1570
      %1588 = vmatprep.subr.bf16.mxu0 0
      %1589 = vmatpush1.bf16.msra.mxu0 %v1571
      %1590 = vmatprep.subr.bf16.mxu0 0
      %1591 = vmatpush1.bf16.msra.mxu0 %v1572
      %1592 = vmatprep.subr.bf16.mxu0 0
      %1593 = vmatpush1.bf16.msra.mxu0 %v1573
      %1594 = vmatprep.subr.bf16.mxu0 0
      %1595 = vmatpush1.bf16.msra.mxu0 %v1574
      %1596 = vmatprep.subr.bf16.mxu0 0
      %1597 = vmatpush1.bf16.msra.mxu0 0
      %1598 = vmatprep.subr.bf16.mxu0 0
      %1599 = vmatpush1.bf16.msra.mxu0 0
      %1600 = vmatprep.subr.bf16.mxu0 0
      %1601 = vmatpush1.bf16.msra.mxu0 0
      %1602 = vmatprep.subr.bf16.mxu0 0
      %1603 = vmatpush1.bf16.msra.mxu0 0
      %1604 = vmatprep.subr.bf16.mxu0 0
      %1605 = vmatpush1.bf16.msra.mxu0 0
      %1606 = vmatprep.subr.bf16.mxu0 0
      %1607 = vmatpush1.bf16.msra.mxu0 0
      %1608 = vmatprep.subr.bf16.mxu0 0
      %1609 = vmatpush1.bf16.msra.mxu0 0
      %1610 = vmatprep.subr.bf16.mxu0 0
      %1611 = vmatpush1.bf16.msra.mxu0 0
      %1612 = vmatprep.subr.bf16.mxu0 0
      %1613 = vmatpush1.bf16.msra.mxu0 0
      %1614 = vmatprep.subr.bf16.mxu0 0
      %1615 = vmatpush1.bf16.msra.mxu0 0
      %1616 = vmatprep.mubr.bf16.mxu0 0
      %1617 = vmatmul.mubr.bf16.gmra.mrb[0].mxu0 %v1582
      %v1618 = vpop.f32.mrb[0].mxu0
      %v1619 = vadd.f32 %v1435, %v1618
      %v1620 = vpop.f32.mrb[0].mxu0
      %v1621 = vpop.f32.mrb[0].mxu0
      %v1622 = vadd.f32 %v1438, %v1621
      %v1623 = vpop.f32.mrb[0].mxu0
      %1624 = vmatprep.mubr.bf16.mxu0 0
      %1625 = vmatmul.mubr.bf16.gmra.mrb[0].mxu0 %v1359
      %v1626 = vpop.f32.mrb[0].mxu0
      %v1627 = vadd.f32 %v1443, %v1626
      %v1628 = vpop.f32.mrb[0].mxu0
      %v1629 = vpop.f32.mrb[0].mxu0
      %v1630 = vadd.f32 %v1446, %v1629
      %v1631 = vpop.f32.mrb[0].mxu0
      %1632 = vmatprep.mubr.bf16.mxu0 0
      %1633 = vmatmul.mubr.bf16.gmra.mrb[0].mxu0 %v1362
      %v1634 = vpop.f32.mrb[0].mxu0
      %v1635 = vadd.f32 %v1451, %v1634
      %v1636 = vpop.f32.mrb[0].mxu0
      %v1637 = vpop.f32.mrb[0].mxu0
      %v1638 = vadd.f32 %v1454, %v1637
      %v1639 = vpop.f32.mrb[0].mxu0
      %1640 = vmatprep.mubr.bf16.mxu0 0
      %1641 = vmatmul.mubr.bf16.gmra.mrb[0].mxu0 %v1365
      %v1642 = vpop.f32.mrb[0].mxu0
      %v1643 = vadd.f32 %v1459, %v1642
      %v1644 = vpop.f32.mrb[0].mxu0
      %v1645 = vpop.f32.mrb[0].mxu0
      %v1646 = vadd.f32 %v1462, %v1645
      %v1647 = vpop.f32.mrb[0].mxu0
      %1648 = vmatprep.mubr.bf16.mxu0 0
      %1649 = vmatmul.mubr.bf16.gmra.mrb[0].mxu0 %v1368
      %v1650 = vpop.f32.mrb[0].mxu0
      %v1651 = vadd.f32 %v1467, %v1650
      %v1652 = vpop.f32.mrb[0].mxu0
      %v1653 = vpop.f32.mrb[0].mxu0
      %v1654 = vadd.f32 %v1470, %v1653
      %v1655 = vpop.f32.mrb[0].mxu0
      %1656 = vmatprep.mubr.bf16.mxu0 0
      %1657 = vmatmul.mubr.bf16.gmra.mrb[0].mxu0 %v1371
      %v1658 = vpop.f32.mrb[0].mxu0
      %v1659 = vadd.f32 %v1475, %v1658
      %v1660 = vpop.f32.mrb[0].mxu0
      %v1661 = vpop.f32.mrb[0].mxu0
      %v1662 = vadd.f32 %v1478, %v1661
      %v1663 = vpop.f32.mrb[0].mxu0
      %1664 = vmatprep.mubr.bf16.mxu0 0
      %1665 = vmatmul.mubr.bf16.gmra.mrb[0].mxu0 %v1374
      %v1666 = vpop.f32.mrb[0].mxu0
      %v1667 = vadd.f32 %v1483, %v1666
      %v1668 = vpop.f32.mrb[0].mxu0
      %v1669 = vpop.f32.mrb[0].mxu0
      %v1670 = vadd.f32 %v1486, %v1669
      %v1671 = vpop.f32.mrb[0].mxu0
      %1672 = vmatprep.mubr.bf16.mxu0 0
      %1673 = vmatmul.mubr.bf16.gmra.mrb[0].mxu0 %v1377
      %v1674 = vpop.f32.mrb[0].mxu0
      %v1675 = vadd.f32 %v1491, %v1674
      %v1676 = vpop.f32.mrb[0].mxu0
      %v1677 = vpop.f32.mrb[0].mxu0
      %v1678 = vadd.f32 %v1494, %v1677
      %v1679 = vpop.f32.mrb[0].mxu0
      %1680 = vmatprep.mubr.bf16.mxu0 0
      %1681 = vmatmul.mubr.bf16.gmra.mrb[0].mxu0 %v1380
      %v1682 = vpop.f32.mrb[0].mxu0
      %v1683 = vadd.f32 %v1499, %v1682
      %v1684 = vpop.f32.mrb[0].mxu0
      %v1685 = vpop.f32.mrb[0].mxu0
      %v1686 = vadd.f32 %v1502, %v1685
      %v1687 = vpop.f32.mrb[0].mxu0
      %1688 = vmatprep.mubr.bf16.mxu0 0
      %1689 = vmatmul.mubr.bf16.gmra.mrb[0].mxu0 %v1383
      %v1690 = vpop.f32.mrb[0].mxu0
      %v1691 = vadd.f32 %v1507, %v1690
      %v1692 = vpop.f32.mrb[0].mxu0
      %v1693 = vpop.f32.mrb[0].mxu0
      %v1694 = vadd.f32 %v1510, %v1693
      %v1695 = vpop.f32.mrb[0].mxu0
      %1696 = vmatprep.mubr.bf16.mxu0 0
      %1697 = vmatmul.mubr.bf16.gmra.mrb[0].mxu0 %v1386
      %v1698 = vpop.f32.mrb[0].mxu0
      %v1699 = vadd.f32 %v1515, %v1698
      %v1700 = vpop.f32.mrb[0].mxu0
      %v1701 = vpop.f32.mrb[0].mxu0
      %v1702 = vadd.f32 %v1518, %v1701
      %v1703 = vpop.f32.mrb[0].mxu0
      %1704 = vmatprep.mubr.bf16.mxu0 0
      %1705 = vmatmul.mubr.bf16.gmra.mrb[0].mxu0 %v1389
      %v1706 = vpop.f32.mrb[0].mxu0
      %v1707 = vadd.f32 %v1523, %v1706
      %v1708 = vpop.f32.mrb[0].mxu0
      %v1709 = vpop.f32.mrb[0].mxu0
      %v1710 = vadd.f32 %v1526, %v1709
      %v1711 = vpop.f32.mrb[0].mxu0
      %1712 = vmatprep.mubr.bf16.mxu0 0
      %1713 = vmatmul.mubr.bf16.gmra.mrb[0].mxu0 %v1392
      %v1714 = vpop.f32.mrb[0].mxu0
      %v1715 = vadd.f32 %v1531, %v1714
      %v1716 = vpop.f32.mrb[0].mxu0
      %v1717 = vpop.f32.mrb[0].mxu0
      %v1718 = vadd.f32 %v1534, %v1717
      %v1719 = vpop.f32.mrb[0].mxu0
      %1720 = vmatprep.mubr.bf16.mxu0 0
      %1721 = vmatmul.mubr.bf16.gmra.mrb[0].mxu0 %v1395
      %v1722 = vpop.f32.mrb[0].mxu0
      %v1723 = vadd.f32 %v1539, %v1722
      %v1724 = vpop.f32.mrb[0].mxu0
      %v1725 = vpop.f32.mrb[0].mxu0
      %v1726 = vadd.f32 %v1542, %v1725
      %v1727 = vpop.f32.mrb[0].mxu0
      %1728 = vdwg.mxu0
      %v1729 = vld [vmem:[#allocation2 + $0x10] sm:$0xff]
      %v1730 = vld [vmem:[#allocation2 + $0x18] sm:$0xff]
      %v1731 = vld [vmem:[#allocation2 + $0x20] sm:$0xff]
      %v1732 = vld [vmem:[#allocation2 + $0x28] sm:$0xff]
      %v1733 = vld [vmem:[#allocation2 + $0x30] sm:$0xff]
      %v1734 = vld [vmem:[#allocation2 + $0x38] sm:$0xff]
      %v1735 = vld [vmem:[#allocation2 + $0x40] sm:$0xff]
      %v1736 = vld [vmem:[#allocation2 + $0x48] sm:$0xff]
      %v1737 = vld [vmem:[#allocation2 + $0x50] sm:$0xff]
      %v1738 = vld [vmem:[#allocation2 + $0x58] sm:$0xff]
      %v1739 = vld [vmem:[#allocation2 + $0x60] sm:$0xff]
      %v1740 = vld [vmem:[#allocation2 + $0x68] sm:$0xff]
      %v1741 = vld [vmem:[#allocation2 + $0x70] sm:$0xff]
      %v1742 = vld [vmem:[#allocation2 + $0x78] sm:$0xff]
      %v1743 = vld [vmem:[%s2 + $0xa0] sm:$0xf]
      %v1744 = vld [vmem:[%s2 + $0xa4] sm:$0xf]
      %v1745 = vld [vmem:[%s2 + $0xa8] sm:$0xf]
      %v1746 = vld [vmem:[%s2 + $0xac] sm:$0xf]
      %v1747 = vld [vmem:[%s2 + $0xb0] sm:$0xf]
      %v1748 = vld [vmem:[%s2 + $0xb4] sm:$0xf]
      %v1749 = vld [vmem:[%s2 + $0xb8] sm:$0xf]
      %v1750 = vld [vmem:[%s2 + $0xbc] sm:$0xf]
      %v1751 = vld [vmem:[%s2 + $0xc0] sm:$0xf]
      %v1752 = vld [vmem:[%s2 + $0xc4] sm:$0xf]
      %v1753 = vld [vmem:[%s2 + $0xc8] sm:$0xf]
      %v1754 = vld [vmem:[%s2 + $0xcc] sm:$0xf]
      %v1767 = vunpack.c.l.b16 %v1743
      %v1768 = vunpack.c.l.b16 %v1744
      %v1769 = vunpack.c.l.b16 %v1745
      %v1770 = vunpack.c.l.b16 %v1746
      %v1771 = vunpack.c.l.b16 %v1747
      %v1772 = vunpack.c.l.b16 %v1748
      %v1773 = vunpack.c.l.b16 %v1749
      %v1774 = vunpack.c.l.b16 %v1750
      %v1775 = vunpack.c.l.b16 %v1751
      %v1776 = vunpack.c.l.b16 %v1752
      %v1777 = vunpack.c.l.b16 %v1753
      %v1778 = vunpack.c.l.b16 %v1754
      %v1779 = vpack.c.b16 %v1768, %v1767
      %v1780 = vpack.c.b16 %v1770, %v1769
      %v1781 = vpack.c.b16 %v1772, %v1771
      %v1782 = vpack.c.b16 %v1774, %v1773
      %v1783 = vpack.c.b16 %v1776, %v1775
      %v1784 = vpack.c.b16 %v1778, %v1777
      %v1792 = vsel %vm1357, %v1729, 0
      %v1795 = vsel %vm1357, %v1730, 0
      %v1798 = vsel %vm1357, %v1731, 0
      %v1801 = vsel %vm1357, %v1732, 0
      %v1804 = vsel %vm1357, %v1733, 0
      %v1807 = vsel %vm1357, %v1734, 0
      %v1810 = vsel %vm1357, %v1735, 0
      %v1813 = vsel %vm1357, %v1736, 0
      %v1816 = vsel %vm1357, %v1737, 0
      %v1819 = vsel %vm1357, %v1738, 0
      %v1822 = vsel %vm1357, %v1739, 0
      %v1825 = vsel %vm1357, %v1740, 0
      %v1828 = vsel %vm1357, %v1741, 0
      %v1831 = vsel %vm1357, %v1742, 0
      %1833 = vmatprep.subr.bf16.mxu0 0
      %1834 = vmatpush1.bf16.msra.mxu0 %v1779
      %1835 = vmatprep.subr.bf16.mxu0 0
      %1836 = vmatpush1.bf16.msra.mxu0 %v1780
      %1837 = vmatprep.subr.bf16.mxu0 0
      %1838 = vmatpush1.bf16.msra.mxu0 %v1781
      %1839 = vmatprep.subr.bf16.mxu0 0
      %1840 = vmatpush1.bf16.msra.mxu0 %v1782
      %1841 = vmatprep.subr.bf16.mxu0 0
      %1842 = vmatpush1.bf16.msra.mxu0 %v1783
      %1843 = vmatprep.subr.bf16.mxu0 0
      %1844 = vmatpush1.bf16.msra.mxu0 %v1784
      %1845 = vmatprep.subr.bf16.mxu0 0
      %1846 = vmatpush1.bf16.msra.mxu0 0
      %1847 = vmatprep.subr.bf16.mxu0 0
      %1848 = vmatpush1.bf16.msra.mxu0 0
      %1849 = vmatprep.subr.bf16.mxu0 0
      %1850 = vmatpush1.bf16.msra.mxu0 0
      %1851 = vmatprep.subr.bf16.mxu0 0
      %1852 = vmatpush1.bf16.msra.mxu0 0
      %1853 = vmatprep.subr.bf16.mxu0 0
      %1854 = vmatpush1.bf16.msra.mxu0 0
      %1855 = vmatprep.subr.bf16.mxu0 0
      %1856 = vmatpush1.bf16.msra.mxu0 0
      %1857 = vmatprep.subr.bf16.mxu0 0
      %1858 = vmatpush1.bf16.msra.mxu0 0
      %1859 = vmatprep.subr.bf16.mxu0 0
      %1860 = vmatpush1.bf16.msra.mxu0 0
      %1861 = vmatprep.subr.bf16.mxu0 0
      %1862 = vmatpush1.bf16.msra.mxu0 0
      %1863 = vmatprep.subr.bf16.mxu0 0
      %1864 = vmatpush1.bf16.msra.mxu0 0
      %1865 = vmatprep.mubr.bf16.mxu0 0
      %1866 = vmatmul.mubr.bf16.gmra.mrb[0].mxu0 %v1792
      %v1867 = vpop.f32.mrb[0].mxu0
      %v1868 = vadd.f32 0.0, %v1867
      %v1869 = vpop.f32.mrb[0].mxu0
      %v1870 = vpop.f32.mrb[0].mxu0
      %v1871 = vadd.f32 0.0, %v1870
      %v1872 = vpop.f32.mrb[0].mxu0
      %1873 = vmatprep.mubr.bf16.mxu0 0
      %1874 = vmatmul.mubr.bf16.gmra.mrb[0].mxu0 %v1795
      %v1875 = vpop.f32.mrb[0].mxu0
      %v1876 = vadd.f32 0.0, %v1875
      %v1877 = vpop.f32.mrb[0].mxu0
      %v1878 = vpop.f32.mrb[0].mxu0
      %v1879 = vadd.f32 0.0, %v1878
      %v1880 = vpop.f32.mrb[0].mxu0
      %1881 = vmatprep.mubr.bf16.mxu0 0
      %1882 = vmatmul.mubr.bf16.gmra.mrb[0].mxu0 %v1798
      %v1883 = vpop.f32.mrb[0].mxu0
      %v1884 = vadd.f32 0.0, %v1883
      %v1885 = vpop.f32.mrb[0].mxu0
      %v1886 = vpop.f32.mrb[0].mxu0
      %v1887 = vadd.f32 0.0, %v1886
      %v1888 = vpop.f32.mrb[0].mxu0
      %1889 = vmatprep.mubr.bf16.mxu0 0
      %1890 = vmatmul.mubr.bf16.gmra.mrb[0].mxu0 %v1801
      %v1891 = vpop.f32.mrb[0].mxu0
      %v1892 = vadd.f32 0.0, %v1891
      %v1893 = vpop.f32.mrb[0].mxu0
      %v1894 = vpop.f32.mrb[0].mxu0
      %v1895 = vadd.f32 0.0, %v1894
      %v1896 = vpop.f32.mrb[0].mxu0
      %1897 = vmatprep.mubr.bf16.mxu0 0
      %1898 = vmatmul.mubr.bf16.gmra.mrb[0].mxu0 %v1804
      %v1899 = vpop.f32.mrb[0].mxu0
      %v1900 = vadd.f32 0.0, %v1899
      %v1901 = vpop.f32.mrb[0].mxu0
      %v1902 = vpop.f32.mrb[0].mxu0
      %v1903 = vadd.f32 0.0, %v1902
      %v1904 = vpop.f32.mrb[0].mxu0
      %1905 = vmatprep.mubr.bf16.mxu0 0
      %1906 = vmatmul.mubr.bf16.gmra.mrb[0].mxu0 %v1807
      %v1907 = vpop.f32.mrb[0].mxu0
      %v1908 = vadd.f32 0.0, %v1907
      %v1909 = vpop.f32.mrb[0].mxu0
      %v1910 = vpop.f32.mrb[0].mxu0
      %v1911 = vadd.f32 0.0, %v1910
      %v1912 = vpop.f32.mrb[0].mxu0
      %1913 = vmatprep.mubr.bf16.mxu0 0
      %1914 = vmatmul.mubr.bf16.gmra.mrb[0].mxu0 %v1810
      %v1915 = vpop.f32.mrb[0].mxu0
      %v1916 = vadd.f32 0.0, %v1915
      %v1917 = vpop.f32.mrb[0].mxu0
      %v1918 = vpop.f32.mrb[0].mxu0
      %v1919 = vadd.f32 0.0, %v1918
      %v1920 = vpop.f32.mrb[0].mxu0
      %1921 = vmatprep.mubr.bf16.mxu0 0
      %1922 = vmatmul.mubr.bf16.gmra.mrb[0].mxu0 %v1813
      %v1923 = vpop.f32.mrb[0].mxu0
      %v1924 = vadd.f32 0.0, %v1923
      %v1925 = vpop.f32.mrb[0].mxu0
      %v1926 = vpop.f32.mrb[0].mxu0
      %v1927 = vadd.f32 0.0, %v1926
      %v1928 = vpop.f32.mrb[0].mxu0
      %1929 = vmatprep.mubr.bf16.mxu0 0
      %1930 = vmatmul.mubr.bf16.gmra.mrb[0].mxu0 %v1816
      %v1931 = vpop.f32.mrb[0].mxu0
      %v1932 = vadd.f32 0.0, %v1931
      %v1933 = vpop.f32.mrb[0].mxu0
      %v1934 = vpop.f32.mrb[0].mxu0
      %v1935 = vadd.f32 0.0, %v1934
      %v1936 = vpop.f32.mrb[0].mxu0
      %1937 = vmatprep.mubr.bf16.mxu0 0
      %1938 = vmatmul.mubr.bf16.gmra.mrb[0].mxu0 %v1819
      %v1939 = vpop.f32.mrb[0].mxu0
      %v1940 = vadd.f32 0.0, %v1939
      %v1941 = vpop.f32.mrb[0].mxu0
      %v1942 = vpop.f32.mrb[0].mxu0
      %v1943 = vadd.f32 0.0, %v1942
      %v1944 = vpop.f32.mrb[0].mxu0
      %1945 = vmatprep.mubr.bf16.mxu0 0
      %1946 = vmatmul.mubr.bf16.gmra.mrb[0].mxu0 %v1822
      %v1947 = vpop.f32.mrb[0].mxu0
      %v1948 = vadd.f32 0.0, %v1947
      %v1949 = vpop.f32.mrb[0].mxu0
      %v1950 = vpop.f32.mrb[0].mxu0
      %v1951 = vadd.f32 0.0, %v1950
      %v1952 = vpop.f32.mrb[0].mxu0
      %1953 = vmatprep.mubr.bf16.mxu0 0
      %1954 = vmatmul.mubr.bf16.gmra.mrb[0].mxu0 %v1825
      %v1955 = vpop.f32.mrb[0].mxu0
      %v1956 = vadd.f32 0.0, %v1955
      %v1957 = vpop.f32.mrb[0].mxu0
      %v1958 = vpop.f32.mrb[0].mxu0
      %v1959 = vadd.f32 0.0, %v1958
      %v1960 = vpop.f32.mrb[0].mxu0
      %1961 = vmatprep.mubr.bf16.mxu0 0
      %1962 = vmatmul.mubr.bf16.gmra.mrb[0].mxu0 %v1828
      %v1963 = vpop.f32.mrb[0].mxu0
      %v1964 = vadd.f32 0.0, %v1963
      %v1965 = vpop.f32.mrb[0].mxu0
      %v1966 = vpop.f32.mrb[0].mxu0
      %v1967 = vadd.f32 0.0, %v1966
      %v1968 = vpop.f32.mrb[0].mxu0
      %1969 = vmatprep.mubr.bf16.mxu0 0
      %1970 = vmatmul.mubr.bf16.gmra.mrb[0].mxu0 %v1831
      %v1971 = vpop.f32.mrb[0].mxu0
      %v1972 = vadd.f32 0.0, %v1971
      %v1973 = vpop.f32.mrb[0].mxu0
      %v1974 = vpop.f32.mrb[0].mxu0
      %v1975 = vadd.f32 0.0, %v1974
      %v1976 = vpop.f32.mrb[0].mxu0
      %1977 = vdwg.mxu0
      %v1978 = vadd.f32 %v1619, %v1868
      %v1979 = vadd.f32 %v1622, %v1871
      %v1980 = vadd.f32 %v1627, %v1876
      %v1981 = vadd.f32 %v1630, %v1879
      %v1982 = vadd.f32 %v1635, %v1884
      %v1983 = vadd.f32 %v1638, %v1887
      %v1984 = vadd.f32 %v1643, %v1892
      %v1985 = vadd.f32 %v1646, %v1895
      %v1986 = vadd.f32 %v1651, %v1900
      %v1987 = vadd.f32 %v1654, %v1903
      %v1988 = vadd.f32 %v1659, %v1908
      %v1989 = vadd.f32 %v1662, %v1911
      %v1990 = vadd.f32 %v1667, %v1916
      %v1991 = vadd.f32 %v1670, %v1919
      %v1992 = vadd.f32 %v1675, %v1924
      %v1993 = vadd.f32 %v1678, %v1927
      %v1994 = vadd.f32 %v1683, %v1932
      %v1995 = vadd.f32 %v1686, %v1935
      %v1996 = vadd.f32 %v1691, %v1940
      %v1997 = vadd.f32 %v1694, %v1943
      %v1998 = vadd.f32 %v1699, %v1948
      %v1999 = vadd.f32 %v1702, %v1951
      %v2000 = vadd.f32 %v1707, %v1956
      %v2001 = vadd.f32 %v1710, %v1959
      %v2002 = vadd.f32 %v1715, %v1964
      %v2003 = vadd.f32 %v1718, %v1967
      %v2004 = vadd.f32 %v1723, %v1972
      %v2005 = vadd.f32 %v1726, %v1975
      %v2006 = vlaneseq
      %v2007 = vshrl.u32 %v2006, 7
      %v2008 = vsub.s32 0, %v2007
      %v2009 = vrot.slane %v1281, %v2008
      %v2010 = vadd.f32 %v1978, %v2009
      %v2011 = vadd.f32 %v1979, %v2009
      %v2012 = vadd.f32 %v1980, %v2009
      %v2013 = vadd.f32 %v1981, %v2009
      %v2014 = vadd.f32 %v1982, %v2009
      %v2015 = vadd.f32 %v1983, %v2009
      %v2016 = vadd.f32 %v1984, %v2009
      %v2017 = vadd.f32 %v1985, %v2009
      %v2018 = vadd.f32 %v1986, %v2009
      %v2019 = vadd.f32 %v1987, %v2009
      %v2020 = vadd.f32 %v1988, %v2009
      %v2021 = vadd.f32 %v1989, %v2009
      %v2022 = vadd.f32 %v1990, %v2009
      %v2023 = vadd.f32 %v1991, %v2009
      %v2024 = vadd.f32 %v1992, %v2009
      %v2025 = vadd.f32 %v1993, %v2009
      %v2026 = vadd.f32 %v1994, %v2009
      %v2027 = vadd.f32 %v1995, %v2009
      %v2028 = vadd.f32 %v1996, %v2009
      %v2029 = vadd.f32 %v1997, %v2009
      %v2030 = vadd.f32 %v1998, %v2009
      %v2031 = vadd.f32 %v1999, %v2009
      %v2032 = vadd.f32 %v2000, %v2009
      %v2033 = vadd.f32 %v2001, %v2009
      %v2034 = vadd.f32 %v2002, %v2009
      %v2035 = vadd.f32 %v2003, %v2009
      %v2036 = vadd.f32 %v2004, %v2009
      %v2037 = vadd.f32 %v2005, %v2009
      %v2038 = vld [vmem:[%s3 + $0x4] sm:$0x1]
      %v2039 = vld [vmem:[%s3 + $0x5] sm:$0x1]
      %v2040 = vlaneseq
      %v2041 = vshrl.u32 %v2040, 7
      %v2042 = vadd.s32 %v2041, 8
      %v2043 = vadd.s32 %v2041, 16
      %v2044 = vadd.s32 %v2041, 24
      %v2045 = vadd.s32 %v2041, 32
      %v2046 = vadd.s32 %v2041, 40
      %v2047 = vadd.s32 %v2041, 48
      %v2048 = vadd.s32 %v2041, 56
      %v2049 = vadd.s32 %v2041, 64
      %v2050 = vadd.s32 %v2041, 72
      %v2051 = vadd.s32 %v2041, 80
      %v2052 = vadd.s32 %v2041, 88
      %v2053 = vadd.s32 %v2041, 96
      %v2054 = vadd.s32 %v2041, 104
      %v2055 = vadd.s32 %v2041, 112
      %v2056 = vadd.s32 %v2041, 120
      %v2057 = vadd.s32 %v2041, 128
      %v2058 = vadd.s32 %v2041, 136
      %v2059 = vadd.s32 %v2041, 144
      %v2060 = vadd.s32 %v2041, 152
      %v2061 = vadd.s32 %v2041, 160
      %v2062 = vadd.s32 %v2041, 168
      %v2063 = vadd.s32 %v2041, 176
      %v2064 = vadd.s32 %v2041, 184
      %v2065 = vadd.s32 %v2041, 192
      %v2066 = vadd.s32 %v2041, 200
      %v2067 = vadd.s32 %v2041, 208
      %v2068 = vadd.s32 %v2041, 216
      %vm2069 = vcmp.lt.s32.totalorder %v2041, 0
      %v2070 = vsub.s32 0, %v2041
      %v2071 = vsel %vm2069, %v2070, %v2041
      %v2072 = vshrl.u32 %v2071, 4
      %v2073 = vand.u32 %v2071, 15
      %v2074 = vsub.s32 0, %v2073
      %v2075 = vsel %vm2069, %v2074, %v2073
      %vm2076 = vcmp.lt.s32.totalorder %v2042, 0
      %v2077 = vsub.s32 0, %v2042
      %v2078 = vsel %vm2076, %v2077, %v2042
      %v2079 = vshrl.u32 %v2078, 4
      %v2080 = vand.u32 %v2078, 15
      %v2081 = vsub.s32 0, %v2080
      %v2082 = vsel %vm2076, %v2081, %v2080
      %vm2083 = vcmp.lt.s32.totalorder %v2043, 0
      %v2084 = vsub.s32 0, %v2043
      %v2085 = vsel %vm2083, %v2084, %v2043
      %v2086 = vshrl.u32 %v2085, 4
      %v2087 = vand.u32 %v2085, 15
      %v2088 = vsub.s32 0, %v2087
      %v2089 = vsel %vm2083, %v2088, %v2087
      %vm2090 = vcmp.lt.s32.totalorder %v2044, 0
      %v2091 = vsub.s32 0, %v2044
      %v2092 = vsel %vm2090, %v2091, %v2044
      %v2093 = vshrl.u32 %v2092, 4
      %v2094 = vand.u32 %v2092, 15
      %v2095 = vsub.s32 0, %v2094
      %v2096 = vsel %vm2090, %v2095, %v2094
      %vm2097 = vcmp.lt.s32.totalorder %v2045, 0
      %v2098 = vsub.s32 0, %v2045
      %v2099 = vsel %vm2097, %v2098, %v2045
      %v2100 = vshrl.u32 %v2099, 4
      %v2101 = vand.u32 %v2099, 15
      %v2102 = vsub.s32 0, %v2101
      %v2103 = vsel %vm2097, %v2102, %v2101
      %vm2104 = vcmp.lt.s32.totalorder %v2046, 0
      %v2105 = vsub.s32 0, %v2046
      %v2106 = vsel %vm2104, %v2105, %v2046
      %v2107 = vshrl.u32 %v2106, 4
      %v2108 = vand.u32 %v2106, 15
      %v2109 = vsub.s32 0, %v2108
      %v2110 = vsel %vm2104, %v2109, %v2108
      %vm2111 = vcmp.lt.s32.totalorder %v2047, 0
      %v2112 = vsub.s32 0, %v2047
      %v2113 = vsel %vm2111, %v2112, %v2047
      %v2114 = vshrl.u32 %v2113, 4
      %v2115 = vand.u32 %v2113, 15
      %v2116 = vsub.s32 0, %v2115
      %v2117 = vsel %vm2111, %v2116, %v2115
      %vm2118 = vcmp.lt.s32.totalorder %v2048, 0
      %v2119 = vsub.s32 0, %v2048
      %v2120 = vsel %vm2118, %v2119, %v2048
      %v2121 = vshrl.u32 %v2120, 4
      %v2122 = vand.u32 %v2120, 15
      %v2123 = vsub.s32 0, %v2122
      %v2124 = vsel %vm2118, %v2123, %v2122
      %vm2125 = vcmp.lt.s32.totalorder %v2049, 0
      %v2126 = vsub.s32 0, %v2049
      %v2127 = vsel %vm2125, %v2126, %v2049
      %v2128 = vshrl.u32 %v2127, 4
      %v2129 = vand.u32 %v2127, 15
      %v2130 = vsub.s32 0, %v2129
      %v2131 = vsel %vm2125, %v2130, %v2129
      %vm2132 = vcmp.lt.s32.totalorder %v2050, 0
      %v2133 = vsub.s32 0, %v2050
      %v2134 = vsel %vm2132, %v2133, %v2050
      %v2135 = vshrl.u32 %v2134, 4
      %v2136 = vand.u32 %v2134, 15
      %v2137 = vsub.s32 0, %v2136
      %v2138 = vsel %vm2132, %v2137, %v2136
      %vm2139 = vcmp.lt.s32.totalorder %v2051, 0
      %v2140 = vsub.s32 0, %v2051
      %v2141 = vsel %vm2139, %v2140, %v2051
      %v2142 = vshrl.u32 %v2141, 4
      %v2143 = vand.u32 %v2141, 15
      %v2144 = vsub.s32 0, %v2143
      %v2145 = vsel %vm2139, %v2144, %v2143
      %vm2146 = vcmp.lt.s32.totalorder %v2052, 0
      %v2147 = vsub.s32 0, %v2052
      %v2148 = vsel %vm2146, %v2147, %v2052
      %v2149 = vshrl.u32 %v2148, 4
      %v2150 = vand.u32 %v2148, 15
      %v2151 = vsub.s32 0, %v2150
      %v2152 = vsel %vm2146, %v2151, %v2150
      %vm2153 = vcmp.lt.s32.totalorder %v2053, 0
      %v2154 = vsub.s32 0, %v2053
      %v2155 = vsel %vm2153, %v2154, %v2053
      %v2156 = vshrl.u32 %v2155, 4
      %v2157 = vand.u32 %v2155, 15
      %v2158 = vsub.s32 0, %v2157
      %v2159 = vsel %vm2153, %v2158, %v2157
      %vm2160 = vcmp.lt.s32.totalorder %v2054, 0
      %v2161 = vsub.s32 0, %v2054
      %v2162 = vsel %vm2160, %v2161, %v2054
      %v2163 = vshrl.u32 %v2162, 4
      %v2164 = vand.u32 %v2162, 15
      %v2165 = vsub.s32 0, %v2164
      %v2166 = vsel %vm2160, %v2165, %v2164
      %vm2167 = vcmp.lt.s32.totalorder %v2055, 0
      %v2168 = vsub.s32 0, %v2055
      %v2169 = vsel %vm2167, %v2168, %v2055
      %v2170 = vshrl.u32 %v2169, 4
      %v2171 = vand.u32 %v2169, 15
      %v2172 = vsub.s32 0, %v2171
      %v2173 = vsel %vm2167, %v2172, %v2171
      %vm2174 = vcmp.lt.s32.totalorder %v2056, 0
      %v2175 = vsub.s32 0, %v2056
      %v2176 = vsel %vm2174, %v2175, %v2056
      %v2177 = vshrl.u32 %v2176, 4
      %v2178 = vand.u32 %v2176, 15
      %v2179 = vsub.s32 0, %v2178
      %v2180 = vsel %vm2174, %v2179, %v2178
      %vm2181 = vcmp.lt.s32.totalorder %v2057, 0
      %v2182 = vsub.s32 0, %v2057
      %v2183 = vsel %vm2181, %v2182, %v2057
      %v2184 = vshrl.u32 %v2183, 4
      %v2185 = vand.u32 %v2183, 15
      %v2186 = vsub.s32 0, %v2185
      %v2187 = vsel %vm2181, %v2186, %v2185
      %vm2188 = vcmp.lt.s32.totalorder %v2058, 0
      %v2189 = vsub.s32 0, %v2058
      %v2190 = vsel %vm2188, %v2189, %v2058
      %v2191 = vshrl.u32 %v2190, 4
      %v2192 = vand.u32 %v2190, 15
      %v2193 = vsub.s32 0, %v2192
      %v2194 = vsel %vm2188, %v2193, %v2192
      %vm2195 = vcmp.lt.s32.totalorder %v2059, 0
      %v2196 = vsub.s32 0, %v2059
      %v2197 = vsel %vm2195, %v2196, %v2059
      %v2198 = vshrl.u32 %v2197, 4
      %v2199 = vand.u32 %v2197, 15
      %v2200 = vsub.s32 0, %v2199
      %v2201 = vsel %vm2195, %v2200, %v2199
      %vm2202 = vcmp.lt.s32.totalorder %v2060, 0
      %v2203 = vsub.s32 0, %v2060
      %v2204 = vsel %vm2202, %v2203, %v2060
      %v2205 = vshrl.u32 %v2204, 4
      %v2206 = vand.u32 %v2204, 15
      %v2207 = vsub.s32 0, %v2206
      %v2208 = vsel %vm2202, %v2207, %v2206
      %vm2209 = vcmp.lt.s32.totalorder %v2061, 0
      %v2210 = vsub.s32 0, %v2061
      %v2211 = vsel %vm2209, %v2210, %v2061
      %v2212 = vshrl.u32 %v2211, 4
      %v2213 = vand.u32 %v2211, 15
      %v2214 = vsub.s32 0, %v2213
      %v2215 = vsel %vm2209, %v2214, %v2213
      %vm2216 = vcmp.lt.s32.totalorder %v2062, 0
      %v2217 = vsub.s32 0, %v2062
      %v2218 = vsel %vm2216, %v2217, %v2062
      %v2219 = vshrl.u32 %v2218, 4
      %v2220 = vand.u32 %v2218, 15
      %v2221 = vsub.s32 0, %v2220
      %v2222 = vsel %vm2216, %v2221, %v2220
      %vm2223 = vcmp.lt.s32.totalorder %v2063, 0
      %v2224 = vsub.s32 0, %v2063
      %v2225 = vsel %vm2223, %v2224, %v2063
      %v2226 = vshrl.u32 %v2225, 4
      %v2227 = vand.u32 %v2225, 15
      %v2228 = vsub.s32 0, %v2227
      %v2229 = vsel %vm2223, %v2228, %v2227
      %vm2230 = vcmp.lt.s32.totalorder %v2064, 0
      %v2231 = vsub.s32 0, %v2064
      %v2232 = vsel %vm2230, %v2231, %v2064
      %v2233 = vshrl.u32 %v2232, 4
      %v2234 = vand.u32 %v2232, 15
      %v2235 = vsub.s32 0, %v2234
      %v2236 = vsel %vm2230, %v2235, %v2234
      %vm2237 = vcmp.lt.s32.totalorder %v2065, 0
      %v2238 = vsub.s32 0, %v2065
      %v2239 = vsel %vm2237, %v2238, %v2065
      %v2240 = vshrl.u32 %v2239, 4
      %v2241 = vand.u32 %v2239, 15
      %v2242 = vsub.s32 0, %v2241
      %v2243 = vsel %vm2237, %v2242, %v2241
      %vm2244 = vcmp.lt.s32.totalorder %v2066, 0
      %v2245 = vsub.s32 0, %v2066
      %v2246 = vsel %vm2244, %v2245, %v2066
      %v2247 = vshrl.u32 %v2246, 4
      %v2248 = vand.u32 %v2246, 15
      %v2249 = vsub.s32 0, %v2248
      %v2250 = vsel %vm2244, %v2249, %v2248
      %vm2251 = vcmp.lt.s32.totalorder %v2067, 0
      %v2252 = vsub.s32 0, %v2067
      %v2253 = vsel %vm2251, %v2252, %v2067
      %v2254 = vshrl.u32 %v2253, 4
      %v2255 = vand.u32 %v2253, 15
      %v2256 = vsub.s32 0, %v2255
      %v2257 = vsel %vm2251, %v2256, %v2255
      %vm2258 = vcmp.lt.s32.totalorder %v2068, 0
      %v2259 = vsub.s32 0, %v2068
      %v2260 = vsel %vm2258, %v2259, %v2068
      %v2261 = vshrl.u32 %v2260, 4
      %v2262 = vand.u32 %v2260, 15
      %v2263 = vsub.s32 0, %v2262
      %v2264 = vsel %vm2258, %v2263, %v2262
      %vm2265 = vcmp.ne.s32.totalorder %v2075, 0
      %vm2266 = vcmp.ne.s32.totalorder %v2082, 0
      %vm2267 = vcmp.ne.s32.totalorder %v2089, 0
      %vm2268 = vcmp.ne.s32.totalorder %v2096, 0
      %vm2269 = vcmp.ne.s32.totalorder %v2103, 0
      %vm2270 = vcmp.ne.s32.totalorder %v2110, 0
      %vm2271 = vcmp.ne.s32.totalorder %v2117, 0
      %vm2272 = vcmp.ne.s32.totalorder %v2124, 0
      %vm2273 = vcmp.ne.s32.totalorder %v2131, 0
      %vm2274 = vcmp.ne.s32.totalorder %v2138, 0
      %vm2275 = vcmp.ne.s32.totalorder %v2145, 0
      %vm2276 = vcmp.ne.s32.totalorder %v2152, 0
      %vm2277 = vcmp.ne.s32.totalorder %v2159, 0
      %vm2278 = vcmp.ne.s32.totalorder %v2166, 0
      %vm2279 = vcmp.ne.s32.totalorder %v2173, 0
      %vm2280 = vcmp.ne.s32.totalorder %v2180, 0
      %vm2281 = vcmp.ne.s32.totalorder %v2187, 0
      %vm2282 = vcmp.ne.s32.totalorder %v2194, 0
      %vm2283 = vcmp.ne.s32.totalorder %v2201, 0
      %vm2284 = vcmp.ne.s32.totalorder %v2208, 0
      %vm2285 = vcmp.ne.s32.totalorder %v2215, 0
      %vm2286 = vcmp.ne.s32.totalorder %v2222, 0
      %vm2287 = vcmp.ne.s32.totalorder %v2229, 0
      %vm2288 = vcmp.ne.s32.totalorder %v2236, 0
      %vm2289 = vcmp.ne.s32.totalorder %v2243, 0
      %vm2290 = vcmp.ne.s32.totalorder %v2250, 0
      %vm2291 = vcmp.ne.s32.totalorder %v2257, 0
      %vm2292 = vcmp.ne.s32.totalorder %v2264, 0
      %vm2293 = vcmp.lt.s32.totalorder %v2075, 0
      %vm2294 = vcmp.lt.s32.totalorder %v2082, 0
      %vm2295 = vcmp.lt.s32.totalorder %v2089, 0
      %vm2296 = vcmp.lt.s32.totalorder %v2096, 0
      %vm2297 = vcmp.lt.s32.totalorder %v2103, 0
      %vm2298 = vcmp.lt.s32.totalorder %v2110, 0
      %vm2299 = vcmp.lt.s32.totalorder %v2117, 0
      %vm2300 = vcmp.lt.s32.totalorder %v2124, 0
      %vm2301 = vcmp.lt.s32.totalorder %v2131, 0
      %vm2302 = vcmp.lt.s32.totalorder %v2138, 0
      %vm2303 = vcmp.lt.s32.totalorder %v2145, 0
      %vm2304 = vcmp.lt.s32.totalorder %v2152, 0
      %vm2305 = vcmp.lt.s32.totalorder %v2159, 0
      %vm2306 = vcmp.lt.s32.totalorder %v2166, 0
      %vm2307 = vcmp.lt.s32.totalorder %v2173, 0
      %vm2308 = vcmp.lt.s32.totalorder %v2180, 0
      %vm2309 = vcmp.lt.s32.totalorder %v2187, 0
      %vm2310 = vcmp.lt.s32.totalorder %v2194, 0
      %vm2311 = vcmp.lt.s32.totalorder %v2201, 0
      %vm2312 = vcmp.lt.s32.totalorder %v2208, 0
      %vm2313 = vcmp.lt.s32.totalorder %v2215, 0
      %vm2314 = vcmp.lt.s32.totalorder %v2222, 0
      %vm2315 = vcmp.lt.s32.totalorder %v2229, 0
      %vm2316 = vcmp.lt.s32.totalorder %v2236, 0
      %vm2317 = vcmp.lt.s32.totalorder %v2243, 0
      %vm2318 = vcmp.lt.s32.totalorder %v2250, 0
      %vm2319 = vcmp.lt.s32.totalorder %v2257, 0
      %vm2320 = vcmp.lt.s32.totalorder %v2264, 0
      %vm2321 = vmand %vm2293, %vm2265
      %vm2322 = vmand %vm2294, %vm2266
      %vm2323 = vmand %vm2295, %vm2267
      %vm2324 = vmand %vm2296, %vm2268
      %vm2325 = vmand %vm2297, %vm2269
      %vm2326 = vmand %vm2298, %vm2270
      %vm2327 = vmand %vm2299, %vm2271
      %vm2328 = vmand %vm2300, %vm2272
      %vm2329 = vmand %vm2301, %vm2273
      %vm2330 = vmand %vm2302, %vm2274
      %vm2331 = vmand %vm2303, %vm2275
      %vm2332 = vmand %vm2304, %vm2276
      %vm2333 = vmand %vm2305, %vm2277
      %vm2334 = vmand %vm2306, %vm2278
      %vm2335 = vmand %vm2307, %vm2279
      %vm2336 = vmand %vm2308, %vm2280
      %vm2337 = vmand %vm2309, %vm2281
      %vm2338 = vmand %vm2310, %vm2282
      %vm2339 = vmand %vm2311, %vm2283
      %vm2340 = vmand %vm2312, %vm2284
      %vm2341 = vmand %vm2313, %vm2285
      %vm2342 = vmand %vm2314, %vm2286
      %vm2343 = vmand %vm2315, %vm2287
      %vm2344 = vmand %vm2316, %vm2288
      %vm2345 = vmand %vm2317, %vm2289
      %vm2346 = vmand %vm2318, %vm2290
      %vm2347 = vmand %vm2319, %vm2291
      %vm2348 = vmand %vm2320, %vm2292
      %v2349 = vadd.s32 %v2075, 16
      %v2350 = vadd.s32 %v2082, 16
      %v2351 = vadd.s32 %v2089, 16
      %v2352 = vadd.s32 %v2096, 16
      %v2353 = vadd.s32 %v2103, 16
      %v2354 = vadd.s32 %v2110, 16
      %v2355 = vadd.s32 %v2117, 16
      %v2356 = vadd.s32 %v2124, 16
      %v2357 = vadd.s32 %v2131, 16
      %v2358 = vadd.s32 %v2138, 16
      %v2359 = vadd.s32 %v2145, 16
      %v2360 = vadd.s32 %v2152, 16
      %v2361 = vadd.s32 %v2159, 16
      %v2362 = vadd.s32 %v2166, 16
      %v2363 = vadd.s32 %v2173, 16
      %v2364 = vadd.s32 %v2180, 16
      %v2365 = vadd.s32 %v2187, 16
      %v2366 = vadd.s32 %v2194, 16
      %v2367 = vadd.s32 %v2201, 16
      %v2368 = vadd.s32 %v2208, 16
      %v2369 = vadd.s32 %v2215, 16
      %v2370 = vadd.s32 %v2222, 16
      %v2371 = vadd.s32 %v2229, 16
      %v2372 = vadd.s32 %v2236, 16
      %v2373 = vadd.s32 %v2243, 16
      %v2374 = vadd.s32 %v2250, 16
      %v2375 = vadd.s32 %v2257, 16
      %v2376 = vadd.s32 %v2264, 16
      %v2377 = vsel %vm2321, %v2349, %v2075
      %v2378 = vsel %vm2322, %v2350, %v2082
      %v2379 = vsel %vm2323, %v2351, %v2089
      %v2380 = vsel %vm2324, %v2352, %v2096
      %v2381 = vsel %vm2325, %v2353, %v2103
      %v2382 = vsel %vm2326, %v2354, %v2110
      %v2383 = vsel %vm2327, %v2355, %v2117
      %v2384 = vsel %vm2328, %v2356, %v2124
      %v2385 = vsel %vm2329, %v2357, %v2131
      %v2386 = vsel %vm2330, %v2358, %v2138
      %v2387 = vsel %vm2331, %v2359, %v2145
      %v2388 = vsel %vm2332, %v2360, %v2152
      %v2389 = vsel %vm2333, %v2361, %v2159
      %v2390 = vsel %vm2334, %v2362, %v2166
      %v2391 = vsel %vm2335, %v2363, %v2173
      %v2392 = vsel %vm2336, %v2364, %v2180
      %v2393 = vsel %vm2337, %v2365, %v2187
      %v2394 = vsel %vm2338, %v2366, %v2194
      %v2395 = vsel %vm2339, %v2367, %v2201
      %v2396 = vsel %vm2340, %v2368, %v2208
      %v2397 = vsel %vm2341, %v2369, %v2215
      %v2398 = vsel %vm2342, %v2370, %v2222
      %v2399 = vsel %vm2343, %v2371, %v2229
      %v2400 = vsel %vm2344, %v2372, %v2236
      %v2401 = vsel %vm2345, %v2373, %v2243
      %v2402 = vsel %vm2346, %v2374, %v2250
      %v2403 = vsel %vm2347, %v2375, %v2257
      %v2404 = vsel %vm2348, %v2376, %v2264
      %vm2405 = vcmp.lt.s32.totalorder %v2377, 14
      %vm2406 = vcmp.lt.s32.totalorder %v2378, 14
      %vm2407 = vcmp.lt.s32.totalorder %v2379, 14
      %vm2408 = vcmp.lt.s32.totalorder %v2380, 14
      %vm2409 = vcmp.lt.s32.totalorder %v2381, 14
      %vm2410 = vcmp.lt.s32.totalorder %v2382, 14
      %vm2411 = vcmp.lt.s32.totalorder %v2383, 14
      %vm2412 = vcmp.lt.s32.totalorder %v2384, 14
      %vm2413 = vcmp.lt.s32.totalorder %v2385, 14
      %vm2414 = vcmp.lt.s32.totalorder %v2386, 14
      %vm2415 = vcmp.lt.s32.totalorder %v2387, 14
      %vm2416 = vcmp.lt.s32.totalorder %v2388, 14
      %vm2417 = vcmp.lt.s32.totalorder %v2389, 14
      %vm2418 = vcmp.lt.s32.totalorder %v2390, 14
      %vm2419 = vcmp.lt.s32.totalorder %v2391, 14
      %vm2420 = vcmp.lt.s32.totalorder %v2392, 14
      %vm2421 = vcmp.lt.s32.totalorder %v2393, 14
      %vm2422 = vcmp.lt.s32.totalorder %v2394, 14
      %vm2423 = vcmp.lt.s32.totalorder %v2395, 14
      %vm2424 = vcmp.lt.s32.totalorder %v2396, 14
      %vm2425 = vcmp.lt.s32.totalorder %v2397, 14
      %vm2426 = vcmp.lt.s32.totalorder %v2398, 14
      %vm2427 = vcmp.lt.s32.totalorder %v2399, 14
      %vm2428 = vcmp.lt.s32.totalorder %v2400, 14
      %vm2429 = vcmp.lt.s32.totalorder %v2401, 14
      %vm2430 = vcmp.lt.s32.totalorder %v2402, 14
      %vm2431 = vcmp.lt.s32.totalorder %v2403, 14
      %vm2432 = vcmp.lt.s32.totalorder %v2404, 14
      %v2433 = vsel %vm2405, 1, 0
      %v2434 = vsel %vm2406, 1, 0
      %v2435 = vsel %vm2407, 1, 0
      %v2436 = vsel %vm2408, 1, 0
      %v2437 = vsel %vm2409, 1, 0
      %v2438 = vsel %vm2410, 1, 0
      %v2439 = vsel %vm2411, 1, 0
      %v2440 = vsel %vm2412, 1, 0
      %v2441 = vsel %vm2413, 1, 0
      %v2442 = vsel %vm2414, 1, 0
      %v2443 = vsel %vm2415, 1, 0
      %v2444 = vsel %vm2416, 1, 0
      %v2445 = vsel %vm2417, 1, 0
      %v2446 = vsel %vm2418, 1, 0
      %v2447 = vsel %vm2419, 1, 0
      %v2448 = vsel %vm2420, 1, 0
      %v2449 = vsel %vm2421, 1, 0
      %v2450 = vsel %vm2422, 1, 0
      %v2451 = vsel %vm2423, 1, 0
      %v2452 = vsel %vm2424, 1, 0
      %v2453 = vsel %vm2425, 1, 0
      %v2454 = vsel %vm2426, 1, 0
      %v2455 = vsel %vm2427, 1, 0
      %v2456 = vsel %vm2428, 1, 0
      %v2457 = vsel %vm2429, 1, 0
      %v2458 = vsel %vm2430, 1, 0
      %v2459 = vsel %vm2431, 1, 0
      %v2460 = vsel %vm2432, 1, 0
      %v2461 = vcvt.s32.f32 %v2433
      %v2462 = vcvt.s32.f32 %v2434
      %v2463 = vcvt.s32.f32 %v2435
      %v2464 = vcvt.s32.f32 %v2436
      %v2465 = vcvt.s32.f32 %v2437
      %v2466 = vcvt.s32.f32 %v2438
      %v2467 = vcvt.s32.f32 %v2439
      %v2468 = vcvt.s32.f32 %v2440
      %v2469 = vcvt.s32.f32 %v2441
      %v2470 = vcvt.s32.f32 %v2442
      %v2471 = vcvt.s32.f32 %v2443
      %v2472 = vcvt.s32.f32 %v2444
      %v2473 = vcvt.s32.f32 %v2445
      %v2474 = vcvt.s32.f32 %v2446
      %v2475 = vcvt.s32.f32 %v2447
      %v2476 = vcvt.s32.f32 %v2448
      %v2477 = vcvt.s32.f32 %v2449
      %v2478 = vcvt.s32.f32 %v2450
      %v2479 = vcvt.s32.f32 %v2451
      %v2480 = vcvt.s32.f32 %v2452
      %v2481 = vcvt.s32.f32 %v2453
      %v2482 = vcvt.s32.f32 %v2454
      %v2483 = vcvt.s32.f32 %v2455
      %v2484 = vcvt.s32.f32 %v2456
      %v2485 = vcvt.s32.f32 %v2457
      %v2486 = vcvt.s32.f32 %v2458
      %v2487 = vcvt.s32.f32 %v2459
      %v2488 = vcvt.s32.f32 %v2460
      %v2489 = vmax.f32 %v2010, 0.0
      %v2490 = vmax.f32 %v2011, 0.0
      %v2491 = vmax.f32 %v2012, 0.0
      %v2492 = vmax.f32 %v2013, 0.0
      %v2493 = vmax.f32 %v2014, 0.0
      %v2494 = vmax.f32 %v2015, 0.0
      %v2495 = vmax.f32 %v2016, 0.0
      %v2496 = vmax.f32 %v2017, 0.0
      %v2497 = vmax.f32 %v2018, 0.0
      %v2498 = vmax.f32 %v2019, 0.0
      %v2499 = vmax.f32 %v2020, 0.0
      %v2500 = vmax.f32 %v2021, 0.0
      %v2501 = vmax.f32 %v2022, 0.0
      %v2502 = vmax.f32 %v2023, 0.0
      %v2503 = vmax.f32 %v2024, 0.0
      %v2504 = vmax.f32 %v2025, 0.0
      %v2505 = vmax.f32 %v2026, 0.0
      %v2506 = vmax.f32 %v2027, 0.0
      %v2507 = vmax.f32 %v2028, 0.0
      %v2508 = vmax.f32 %v2029, 0.0
      %v2509 = vmax.f32 %v2030, 0.0
      %v2510 = vmax.f32 %v2031, 0.0
      %v2511 = vmax.f32 %v2032, 0.0
      %v2512 = vmax.f32 %v2033, 0.0
      %v2513 = vmax.f32 %v2034, 0.0
      %v2514 = vmax.f32 %v2035, 0.0
      %v2515 = vmax.f32 %v2036, 0.0
      %v2516 = vmax.f32 %v2037, 0.0
      %v2517 = vmul.f32 %v2489, %v2461
      %v2518 = vmul.f32 %v2490, %v2462
      %v2519 = vmul.f32 %v2491, %v2463
      %v2520 = vmul.f32 %v2492, %v2464
      %v2521 = vmul.f32 %v2493, %v2465
      %v2522 = vmul.f32 %v2494, %v2466
      %v2523 = vmul.f32 %v2495, %v2467
      %v2524 = vmul.f32 %v2496, %v2468
      %v2525 = vmul.f32 %v2497, %v2469
      %v2526 = vmul.f32 %v2498, %v2470
      %v2527 = vmul.f32 %v2499, %v2471
      %v2528 = vmul.f32 %v2500, %v2472
      %v2529 = vmul.f32 %v2501, %v2473
      %v2530 = vmul.f32 %v2502, %v2474
      %v2531 = vmul.f32 %v2503, %v2475
      %v2532 = vmul.f32 %v2504, %v2476
      %v2533 = vmul.f32 %v2505, %v2477
      %v2534 = vmul.f32 %v2506, %v2478
      %v2535 = vmul.f32 %v2507, %v2479
      %v2536 = vmul.f32 %v2508, %v2480
      %v2537 = vmul.f32 %v2509, %v2481
      %v2538 = vmul.f32 %v2510, %v2482
      %v2539 = vmul.f32 %v2511, %v2483
      %v2540 = vmul.f32 %v2512, %v2484
      %v2541 = vmul.f32 %v2513, %v2485
      %v2542 = vmul.f32 %v2514, %v2486
      %v2543 = vmul.f32 %v2515, %v2487
      %v2544 = vmul.f32 %v2516, %v2488
      %v2545 = vsel %vm611, %v2517, 0.0
      %v2546 = vsel %vm611, %v2518, 0.0
      %v2547 = vadd.f32 %v2545, %v2546
      %v2548 = vsel %vm611, %v2519, 0.0
      %v2549 = vadd.f32 %v2547, %v2548
      %v2550 = vsel %vm611, %v2520, 0.0
      %v2551 = vadd.f32 %v2549, %v2550
      %v2552 = vsel %vm611, %v2521, 0.0
      %v2553 = vadd.f32 %v2551, %v2552
      %v2554 = vsel %vm611, %v2522, 0.0
      %v2555 = vadd.f32 %v2553, %v2554
      %v2556 = vsel %vm611, %v2523, 0.0
      %v2557 = vadd.f32 %v2555, %v2556
      %v2558 = vsel %vm611, %v2524, 0.0
      %v2559 = vadd.f32 %v2557, %v2558
      %v2560 = vsel %vm611, %v2525, 0.0
      %v2561 = vadd.f32 %v2559, %v2560
      %v2562 = vsel %vm611, %v2526, 0.0
      %v2563 = vadd.f32 %v2561, %v2562
      %v2564 = vsel %vm611, %v2527, 0.0
      %v2565 = vadd.f32 %v2563, %v2564
      %v2566 = vsel %vm611, %v2528, 0.0
      %v2567 = vadd.f32 %v2565, %v2566
      %v2568 = vsel %vm611, %v2529, 0.0
      %v2569 = vadd.f32 %v2567, %v2568
      %v2570 = vsel %vm611, %v2530, 0.0
      %v2571 = vadd.f32 %v2569, %v2570
      %v2572 = vsel %vm611, %v2531, 0.0
      %v2573 = vadd.f32 %v2571, %v2572
      %v2574 = vsel %vm611, %v2532, 0.0
      %v2575 = vadd.f32 %v2573, %v2574
      %v2576 = vsel %vm611, %v2533, 0.0
      %v2577 = vadd.f32 %v2575, %v2576
      %v2578 = vsel %vm611, %v2534, 0.0
      %v2579 = vadd.f32 %v2577, %v2578
      %v2580 = vsel %vm611, %v2535, 0.0
      %v2581 = vadd.f32 %v2579, %v2580
      %v2582 = vsel %vm611, %v2536, 0.0
      %v2583 = vadd.f32 %v2581, %v2582
      %v2584 = vsel %vm611, %v2537, 0.0
      %v2585 = vadd.f32 %v2583, %v2584
      %v2586 = vsel %vm611, %v2538, 0.0
      %v2587 = vadd.f32 %v2585, %v2586
      %v2588 = vsel %vm611, %v2539, 0.0
      %v2589 = vadd.f32 %v2587, %v2588
      %v2590 = vsel %vm611, %v2540, 0.0
      %v2591 = vadd.f32 %v2589, %v2590
      %v2592 = vsel %vm611, %v2541, 0.0
      %v2593 = vadd.f32 %v2591, %v2592
      %v2594 = vsel %vm611, %v2542, 0.0
      %v2595 = vadd.f32 %v2593, %v2594
      %v2596 = vsel %vm611, %v2543, 0.0
      %v2597 = vadd.f32 %v2595, %v2596
      %v2598 = vsel %vm611, %v2544, 0.0
      %v2599 = vadd.f32 %v2597, %v2598
      %v2600 = vrot.slane %v2599, 4
      %v2601 = vadd.f32 %v2599, %v2600
      %v2602 = vrot.slane %v2601, 2
      %v2603 = vadd.f32 %v2601, %v2602
      %v2604 = vrot.slane %v2603, 1
      %v2605 = vadd.f32 %v2603, %v2604
      %v2606 = vmul.f32 %v2517, %v2517
      %v2607 = vmul.f32 %v2518, %v2518
      %v2608 = vmul.f32 %v2519, %v2519
      %v2609 = vmul.f32 %v2520, %v2520
      %v2610 = vmul.f32 %v2521, %v2521
      %v2611 = vmul.f32 %v2522, %v2522
      %v2612 = vmul.f32 %v2523, %v2523
      %v2613 = vmul.f32 %v2524, %v2524
      %v2614 = vmul.f32 %v2525, %v2525
      %v2615 = vmul.f32 %v2526, %v2526
      %v2616 = vmul.f32 %v2527, %v2527
      %v2617 = vmul.f32 %v2528, %v2528
      %v2618 = vmul.f32 %v2529, %v2529
      %v2619 = vmul.f32 %v2530, %v2530
      %v2620 = vmul.f32 %v2531, %v2531
      %v2621 = vmul.f32 %v2532, %v2532
      %v2622 = vmul.f32 %v2533, %v2533
      %v2623 = vmul.f32 %v2534, %v2534
      %v2624 = vmul.f32 %v2535, %v2535
      %v2625 = vmul.f32 %v2536, %v2536
      %v2626 = vmul.f32 %v2537, %v2537
      %v2627 = vmul.f32 %v2538, %v2538
      %v2628 = vmul.f32 %v2539, %v2539
      %v2629 = vmul.f32 %v2540, %v2540
      %v2630 = vmul.f32 %v2541, %v2541
      %v2631 = vmul.f32 %v2542, %v2542
      %v2632 = vmul.f32 %v2543, %v2543
      %v2633 = vmul.f32 %v2544, %v2544
      %v2634 = vsel %vm611, %v2606, 0.0
      %v2635 = vsel %vm611, %v2607, 0.0
      %v2636 = vadd.f32 %v2634, %v2635
      %v2637 = vsel %vm611, %v2608, 0.0
      %v2638 = vadd.f32 %v2636, %v2637
      %v2639 = vsel %vm611, %v2609, 0.0
      %v2640 = vadd.f32 %v2638, %v2639
      %v2641 = vsel %vm611, %v2610, 0.0
      %v2642 = vadd.f32 %v2640, %v2641
      %v2643 = vsel %vm611, %v2611, 0.0
      %v2644 = vadd.f32 %v2642, %v2643
      %v2645 = vsel %vm611, %v2612, 0.0
      %v2646 = vadd.f32 %v2644, %v2645
      %v2647 = vsel %vm611, %v2613, 0.0
      %v2648 = vadd.f32 %v2646, %v2647
      %v2649 = vsel %vm611, %v2614, 0.0
      %v2650 = vadd.f32 %v2648, %v2649
      %v2651 = vsel %vm611, %v2615, 0.0
      %v2652 = vadd.f32 %v2650, %v2651
      %v2653 = vsel %vm611, %v2616, 0.0
      %v2654 = vadd.f32 %v2652, %v2653
      %v2655 = vsel %vm611, %v2617, 0.0
      %v2656 = vadd.f32 %v2654, %v2655
      %v2657 = vsel %vm611, %v2618, 0.0
      %v2658 = vadd.f32 %v2656, %v2657
      %v2659 = vsel %vm611, %v2619, 0.0
      %v2660 = vadd.f32 %v2658, %v2659
      %v2661 = vsel %vm611, %v2620, 0.0
      %v2662 = vadd.f32 %v2660, %v2661
      %v2663 = vsel %vm611, %v2621, 0.0
      %v2664 = vadd.f32 %v2662, %v2663
      %v2665 = vsel %vm611, %v2622, 0.0
      %v2666 = vadd.f32 %v2664, %v2665
      %v2667 = vsel %vm611, %v2623, 0.0
      %v2668 = vadd.f32 %v2666, %v2667
      %v2669 = vsel %vm611, %v2624, 0.0
      %v2670 = vadd.f32 %v2668, %v2669
      %v2671 = vsel %vm611, %v2625, 0.0
      %v2672 = vadd.f32 %v2670, %v2671
      %v2673 = vsel %vm611, %v2626, 0.0
      %v2674 = vadd.f32 %v2672, %v2673
      %v2675 = vsel %vm611, %v2627, 0.0
      %v2676 = vadd.f32 %v2674, %v2675
      %v2677 = vsel %vm611, %v2628, 0.0
      %v2678 = vadd.f32 %v2676, %v2677
      %v2679 = vsel %vm611, %v2629, 0.0
      %v2680 = vadd.f32 %v2678, %v2679
      %v2681 = vsel %vm611, %v2630, 0.0
      %v2682 = vadd.f32 %v2680, %v2681
      %v2683 = vsel %vm611, %v2631, 0.0
      %v2684 = vadd.f32 %v2682, %v2683
      %v2685 = vsel %vm611, %v2632, 0.0
      %v2686 = vadd.f32 %v2684, %v2685
      %v2687 = vsel %vm611, %v2633, 0.0
      %v2688 = vadd.f32 %v2686, %v2687
      %v2689 = vrot.slane %v2688, 4
      %v2690 = vadd.f32 %v2688, %v2689
      %v2691 = vrot.slane %v2690, 2
      %v2692 = vadd.f32 %v2690, %v2691
      %v2693 = vrot.slane %v2692, 1
      %v2694 = vadd.f32 %v2692, %v2693
      %v2695 = vmul.f32 %v2605, 0.0051020407
      %v2696 = vmul.f32 %v2694, 0.0051020407
      %v2697 = vmul.f32 %v2695, %v2695
      %v2698 = vsub.f32 %v2696, %v2697
      %v2699 = vmax.f32 %v2698, 0.0
      %v2700 = vadd.f32 %v2699, 1e-05
      %v2701 = vrsqrt.pop %v2700
      %v2702 = vsub.f32 %v2489, %v2695
      %v2703 = vsub.f32 %v2490, %v2695
      %v2704 = vsub.f32 %v2491, %v2695
      %v2705 = vsub.f32 %v2492, %v2695
      %v2706 = vsub.f32 %v2493, %v2695
      %v2707 = vsub.f32 %v2494, %v2695
      %v2708 = vsub.f32 %v2495, %v2695
      %v2709 = vsub.f32 %v2496, %v2695
      %v2710 = vsub.f32 %v2497, %v2695
      %v2711 = vsub.f32 %v2498, %v2695
      %v2712 = vsub.f32 %v2499, %v2695
      %v2713 = vsub.f32 %v2500, %v2695
      %v2714 = vsub.f32 %v2501, %v2695
      %v2715 = vsub.f32 %v2502, %v2695
      %v2716 = vsub.f32 %v2503, %v2695
      %v2717 = vsub.f32 %v2504, %v2695
      %v2718 = vsub.f32 %v2505, %v2695
      %v2719 = vsub.f32 %v2506, %v2695
      %v2720 = vsub.f32 %v2507, %v2695
      %v2721 = vsub.f32 %v2508, %v2695
      %v2722 = vsub.f32 %v2509, %v2695
      %v2723 = vsub.f32 %v2510, %v2695
      %v2724 = vsub.f32 %v2511, %v2695
      %v2725 = vsub.f32 %v2512, %v2695
      %v2726 = vsub.f32 %v2513, %v2695
      %v2727 = vsub.f32 %v2514, %v2695
      %v2728 = vsub.f32 %v2515, %v2695
      %v2729 = vsub.f32 %v2516, %v2695
      %v2730 = vmul.f32 %v2701, %v2038
      %v2731 = vlaneseq
      %v2732 = vshrl.u32 %v2731, 7
      %v2733 = vsub.s32 0, %v2732
      %v2734 = vrot.slane %v2730, %v2733
      %v2735 = vmul.f32 %v2702, %v2734
      %v2736 = vmul.f32 %v2703, %v2734
      %v2737 = vmul.f32 %v2704, %v2734
      %v2738 = vmul.f32 %v2705, %v2734
      %v2739 = vmul.f32 %v2706, %v2734
      %v2740 = vmul.f32 %v2707, %v2734
      %v2741 = vmul.f32 %v2708, %v2734
      %v2742 = vmul.f32 %v2709, %v2734
      %v2743 = vmul.f32 %v2710, %v2734
      %v2744 = vmul.f32 %v2711, %v2734
      %v2745 = vmul.f32 %v2712, %v2734
      %v2746 = vmul.f32 %v2713, %v2734
      %v2747 = vmul.f32 %v2714, %v2734
      %v2748 = vmul.f32 %v2715, %v2734
      %v2749 = vmul.f32 %v2716, %v2734
      %v2750 = vmul.f32 %v2717, %v2734
      %v2751 = vmul.f32 %v2718, %v2734
      %v2752 = vmul.f32 %v2719, %v2734
      %v2753 = vmul.f32 %v2720, %v2734
      %v2754 = vmul.f32 %v2721, %v2734
      %v2755 = vmul.f32 %v2722, %v2734
      %v2756 = vmul.f32 %v2723, %v2734
      %v2757 = vmul.f32 %v2724, %v2734
      %v2758 = vmul.f32 %v2725, %v2734
      %v2759 = vmul.f32 %v2726, %v2734
      %v2760 = vmul.f32 %v2727, %v2734
      %v2761 = vmul.f32 %v2728, %v2734
      %v2762 = vmul.f32 %v2729, %v2734
      %v2763 = vlaneseq
      %v2764 = vshrl.u32 %v2763, 7
      %v2765 = vsub.s32 0, %v2764
      %v2766 = vrot.slane %v2039, %v2765
      %v2767 = vadd.f32 %v2735, %v2766
      %v2768 = vadd.f32 %v2736, %v2766
      %v2769 = vadd.f32 %v2737, %v2766
      %v2770 = vadd.f32 %v2738, %v2766
      %v2771 = vadd.f32 %v2739, %v2766
      %v2772 = vadd.f32 %v2740, %v2766
      %v2773 = vadd.f32 %v2741, %v2766
      %v2774 = vadd.f32 %v2742, %v2766
      %v2775 = vadd.f32 %v2743, %v2766
      %v2776 = vadd.f32 %v2744, %v2766
      %v2777 = vadd.f32 %v2745, %v2766
      %v2778 = vadd.f32 %v2746, %v2766
      %v2779 = vadd.f32 %v2747, %v2766
      %v2780 = vadd.f32 %v2748, %v2766
      %v2781 = vadd.f32 %v2749, %v2766
      %v2782 = vadd.f32 %v2750, %v2766
      %v2783 = vadd.f32 %v2751, %v2766
      %v2784 = vadd.f32 %v2752, %v2766
      %v2785 = vadd.f32 %v2753, %v2766
      %v2786 = vadd.f32 %v2754, %v2766
      %v2787 = vadd.f32 %v2755, %v2766
      %v2788 = vadd.f32 %v2756, %v2766
      %v2789 = vadd.f32 %v2757, %v2766
      %v2790 = vadd.f32 %v2758, %v2766
      %v2791 = vadd.f32 %v2759, %v2766
      %v2792 = vadd.f32 %v2760, %v2766
      %v2793 = vadd.f32 %v2761, %v2766
      %v2794 = vadd.f32 %v2762, %v2766
      %2795 = vst.msk [vmem:[#allocation4] sm:$0xff] %vm611, %v2767
      %2796 = vst.msk [vmem:[#allocation4 + $0x8] sm:$0xff] %vm611, %v2768
      %2797 = vst.msk [vmem:[#allocation4 + $0x10] sm:$0xff] %vm611, %v2769
      %2798 = vst.msk [vmem:[#allocation4 + $0x18] sm:$0xff] %vm611, %v2770
      %2799 = vst.msk [vmem:[#allocation4 + $0x20] sm:$0xff] %vm611, %v2771
      %2800 = vst.msk [vmem:[#allocation4 + $0x28] sm:$0xff] %vm611, %v2772
      %2801 = vst.msk [vmem:[#allocation4 + $0x30] sm:$0xff] %vm611, %v2773
      %2802 = vst.msk [vmem:[#allocation4 + $0x38] sm:$0xff] %vm611, %v2774
      %2803 = vst.msk [vmem:[#allocation4 + $0x40] sm:$0xff] %vm611, %v2775
      %2804 = vst.msk [vmem:[#allocation4 + $0x48] sm:$0xff] %vm611, %v2776
      %2805 = vst.msk [vmem:[#allocation4 + $0x50] sm:$0xff] %vm611, %v2777
      %2806 = vst.msk [vmem:[#allocation4 + $0x58] sm:$0xff] %vm611, %v2778
      %2807 = vst.msk [vmem:[#allocation4 + $0x60] sm:$0xff] %vm611, %v2779
      %2808 = vst.msk [vmem:[#allocation4 + $0x68] sm:$0xff] %vm611, %v2780
      %2809 = vst.msk [vmem:[#allocation4 + $0x70] sm:$0xff] %vm611, %v2781
      %2810 = vst.msk [vmem:[#allocation4 + $0x78] sm:$0xff] %vm611, %v2782
      %2811 = vst.msk [vmem:[#allocation4 + $0x80] sm:$0xff] %vm611, %v2783
      %2812 = vst.msk [vmem:[#allocation4 + $0x88] sm:$0xff] %vm611, %v2784
      %2813 = vst.msk [vmem:[#allocation4 + $0x90] sm:$0xff] %vm611, %v2785
      %2814 = vst.msk [vmem:[#allocation4 + $0x98] sm:$0xff] %vm611, %v2786
      %2815 = vst.msk [vmem:[#allocation4 + $0xa0] sm:$0xff] %vm611, %v2787
      %2816 = vst.msk [vmem:[#allocation4 + $0xa8] sm:$0xff] %vm611, %v2788
      %2817 = vst.msk [vmem:[#allocation4 + $0xb0] sm:$0xff] %vm611, %v2789
      %2818 = vst.msk [vmem:[#allocation4 + $0xb8] sm:$0xff] %vm611, %v2790
      %2819 = vst.msk [vmem:[#allocation4 + $0xc0] sm:$0xff] %vm611, %v2791
      %2820 = vst.msk [vmem:[#allocation4 + $0xc8] sm:$0xff] %vm611, %v2792
      %2821 = vst.msk [vmem:[#allocation4 + $0xd0] sm:$0xff] %vm611, %v2793
      %2822 = vst.msk [vmem:[#allocation4 + $0xd8] sm:$0xff] %vm611, %v2794
      %2823 = vst.msk [vmem:[#allocation4 + $0xe0] sm:$0xff] %vm611, 0.0
      %v2824 = vpack.c.bf16 %v2768, %v2767
      %v2825 = vpack.c.bf16 %v2770, %v2769
      %v2826 = vpack.c.bf16 %v2772, %v2771
      %v2827 = vpack.c.bf16 %v2774, %v2773
      %v2828 = vpack.c.bf16 %v2776, %v2775
      %v2829 = vpack.c.bf16 %v2778, %v2777
      %v2830 = vpack.c.bf16 %v2780, %v2779
      %v2831 = vpack.c.bf16 %v2782, %v2781
      %v2832 = vpack.c.bf16 %v2784, %v2783
      %v2833 = vpack.c.bf16 %v2786, %v2785
      %v2834 = vpack.c.bf16 %v2788, %v2787
      %v2835 = vpack.c.bf16 %v2790, %v2789
      %v2836 = vpack.c.bf16 %v2792, %v2791
      %v2837 = vpack.c.bf16 %v2794, %v2793
      %2838 = vst.msk [vmem:[#allocation3] sm:$0xff] %vm611, %v2824
      %2839 = vst.msk [vmem:[#allocation3 + $0x8] sm:$0xff] %vm611, %v2825
      %2840 = vst.msk [vmem:[#allocation3 + $0x10] sm:$0xff] %vm611, %v2826
      %2841 = vst.msk [vmem:[#allocation3 + $0x18] sm:$0xff] %vm611, %v2827
      %2842 = vst.msk [vmem:[#allocation3 + $0x20] sm:$0xff] %vm611, %v2828
      %2843 = vst.msk [vmem:[#allocation3 + $0x28] sm:$0xff] %vm611, %v2829
      %2844 = vst.msk [vmem:[#allocation3 + $0x30] sm:$0xff] %vm611, %v2830
      %2845 = vst.msk [vmem:[#allocation3 + $0x38] sm:$0xff] %vm611, %v2831
      %2846 = vst.msk [vmem:[#allocation3 + $0x40] sm:$0xff] %vm611, %v2832
      %2847 = vst.msk [vmem:[#allocation3 + $0x48] sm:$0xff] %vm611, %v2833
      %2848 = vst.msk [vmem:[#allocation3 + $0x50] sm:$0xff] %vm611, %v2834
      %2849 = vst.msk [vmem:[#allocation3 + $0x58] sm:$0xff] %vm611, %v2835
      %2850 = vst.msk [vmem:[#allocation3 + $0x60] sm:$0xff] %vm611, %v2836
      %2851 = vst.msk [vmem:[#allocation3 + $0x68] sm:$0xff] %vm611, %v2837
      %v2852 = vld [vmem:[#allocation4 + $0x1] sm:$0xff]
      %v2853 = vld [vmem:[#allocation4 + $0x9] sm:$0xff]
      %v2854 = vld [vmem:[#allocation4 + $0x11] sm:$0xff]
      %v2855 = vld [vmem:[#allocation4 + $0x19] sm:$0xff]
      %v2856 = vld [vmem:[#allocation4 + $0x21] sm:$0xff]
      %v2857 = vld [vmem:[#allocation4 + $0x29] sm:$0xff]
      %v2858 = vld [vmem:[#allocation4 + $0x31] sm:$0xff]
      %v2859 = vld [vmem:[#allocation4 + $0x39] sm:$0xff]
      %v2860 = vld [vmem:[#allocation4 + $0x41] sm:$0xff]
      %v2861 = vld [vmem:[#allocation4 + $0x49] sm:$0xff]
      %v2862 = vld [vmem:[#allocation4 + $0x51] sm:$0xff]
      %v2863 = vld [vmem:[#allocation4 + $0x59] sm:$0xff]
      %v2864 = vld [vmem:[#allocation4 + $0x61] sm:$0xff]
      %v2865 = vld [vmem:[#allocation4 + $0x69] sm:$0xff]
      %v2866 = vld [vmem:[#allocation4 + $0x71] sm:$0xff]
      %v2867 = vld [vmem:[#allocation4 + $0x79] sm:$0xff]
      %v2868 = vld [vmem:[#allocation4 + $0x81] sm:$0xff]
      %v2869 = vld [vmem:[#allocation4 + $0x89] sm:$0xff]
      %v2870 = vld [vmem:[#allocation4 + $0x91] sm:$0xff]
      %v2871 = vld [vmem:[#allocation4 + $0x99] sm:$0xff]
      %v2872 = vld [vmem:[#allocation4 + $0xa1] sm:$0xff]
      %v2873 = vld [vmem:[#allocation4 + $0xa9] sm:$0xff]
      %v2874 = vld [vmem:[#allocation4 + $0xb1] sm:$0xff]
      %v2875 = vld [vmem:[#allocation4 + $0xb9] sm:$0xff]
      %v2876 = vld [vmem:[#allocation4 + $0xc1] sm:$0xff]
      %v2877 = vld [vmem:[#allocation4 + $0xc9] sm:$0xff]
      %v2878 = vld [vmem:[#allocation4 + $0xd1] sm:$0xff]
      %v2879 = vld [vmem:[#allocation4 + $0xd9] sm:$0xff]
      %v2880 = vpack.c.bf16 %v2853, %v2852
      %v2881 = vpack.c.bf16 %v2855, %v2854
      %v2882 = vpack.c.bf16 %v2857, %v2856
      %v2883 = vpack.c.bf16 %v2859, %v2858
      %v2884 = vpack.c.bf16 %v2861, %v2860
      %v2885 = vpack.c.bf16 %v2863, %v2862
      %v2886 = vpack.c.bf16 %v2865, %v2864
      %v2887 = vpack.c.bf16 %v2867, %v2866
      %v2888 = vpack.c.bf16 %v2869, %v2868
      %v2889 = vpack.c.bf16 %v2871, %v2870
      %v2890 = vpack.c.bf16 %v2873, %v2872
      %v2891 = vpack.c.bf16 %v2875, %v2874
      %v2892 = vpack.c.bf16 %v2877, %v2876
      %v2893 = vpack.c.bf16 %v2879, %v2878
      %2908 = vrot.lane.b32.xlu0 %v2880, 32
      %v2909 = vpop.permute.xlu0 %2908
      %2910 = vrot.lane.b32.xlu0 %v2881, 32
      %v2911 = vpop.permute.xlu0 %2910
      %2912 = vrot.lane.b32.xlu0 %v2882, 32
      %v2913 = vpop.permute.xlu0 %2912
      %2914 = vrot.lane.b32.xlu0 %v2883, 32
      %v2915 = vpop.permute.xlu0 %2914
      %2916 = vrot.lane.b32.xlu0 %v2884, 32
      %v2917 = vpop.permute.xlu0 %2916
      %2918 = vrot.lane.b32.xlu0 %v2885, 32
      %v2919 = vpop.permute.xlu0 %2918
      %2920 = vrot.lane.b32.xlu0 %v2886, 32
      %v2921 = vpop.permute.xlu0 %2920
      %2922 = vrot.lane.b32.xlu0 %v2887, 32
      %v2923 = vpop.permute.xlu0 %2922
      %2924 = vrot.lane.b32.xlu0 %v2888, 32
      %v2925 = vpop.permute.xlu0 %2924
      %2926 = vrot.lane.b32.xlu0 %v2889, 32
      %v2927 = vpop.permute.xlu0 %2926
      %2928 = vrot.lane.b32.xlu0 %v2890, 32
      %v2929 = vpop.permute.xlu0 %2928
      %2930 = vrot.lane.b32.xlu0 %v2891, 32
      %v2931 = vpop.permute.xlu0 %2930
      %2932 = vrot.lane.b32.xlu0 %v2892, 32
      %v2933 = vpop.permute.xlu0 %2932
      %2934 = vrot.lane.b32.xlu0 %v2893, 32
      %v2935 = vpop.permute.xlu0 %2934
      %2950 = vst.msk [vmem:[#allocation3] sm:$0xff] %vm1135, %v2909
      %2951 = vst.msk [vmem:[#allocation3 + $0x8] sm:$0xff] %vm1135, %v2911
      %2952 = vst.msk [vmem:[#allocation3 + $0x10] sm:$0xff] %vm1135, %v2913
      %2953 = vst.msk [vmem:[#allocation3 + $0x18] sm:$0xff] %vm1135, %v2915
      %2954 = vst.msk [vmem:[#allocation3 + $0x20] sm:$0xff] %vm1135, %v2917
      %2955 = vst.msk [vmem:[#allocation3 + $0x28] sm:$0xff] %vm1135, %v2919
      %2956 = vst.msk [vmem:[#allocation3 + $0x30] sm:$0xff] %vm1135, %v2921
      %2957 = vst.msk [vmem:[#allocation3 + $0x38] sm:$0xff] %vm1135, %v2923
      %2958 = vst.msk [vmem:[#allocation3 + $0x40] sm:$0xff] %vm1135, %v2925
      %2959 = vst.msk [vmem:[#allocation3 + $0x48] sm:$0xff] %vm1135, %v2927
      %2960 = vst.msk [vmem:[#allocation3 + $0x50] sm:$0xff] %vm1135, %v2929
      %2961 = vst.msk [vmem:[#allocation3 + $0x58] sm:$0xff] %vm1135, %v2931
      %2962 = vst.msk [vmem:[#allocation3 + $0x60] sm:$0xff] %vm1135, %v2933
      %2963 = vst.msk [vmem:[#allocation3 + $0x68] sm:$0xff] %vm1135, %v2935
      %v2964 = vld [vmem:[#allocation4 + $0x2] sm:$0xff]
      %v2965 = vld [vmem:[#allocation4 + $0xa] sm:$0xff]
      %v2966 = vld [vmem:[#allocation4 + $0x12] sm:$0xff]
      %v2967 = vld [vmem:[#allocation4 + $0x1a] sm:$0xff]
      %v2968 = vld [vmem:[#allocation4 + $0x22] sm:$0xff]
      %v2969 = vld [vmem:[#allocation4 + $0x2a] sm:$0xff]
      %v2970 = vld [vmem:[#allocation4 + $0x32] sm:$0xff]
      %v2971 = vld [vmem:[#allocation4 + $0x3a] sm:$0xff]
      %v2972 = vld [vmem:[#allocation4 + $0x42] sm:$0xff]
      %v2973 = vld [vmem:[#allocation4 + $0x4a] sm:$0xff]
      %v2974 = vld [vmem:[#allocation4 + $0x52] sm:$0xff]
      %v2975 = vld [vmem:[#allocation4 + $0x5a] sm:$0xff]
      %v2976 = vld [vmem:[#allocation4 + $0x62] sm:$0xff]
      %v2977 = vld [vmem:[#allocation4 + $0x6a] sm:$0xff]
      %v2978 = vld [vmem:[#allocation4 + $0x72] sm:$0xff]
      %v2979 = vld [vmem:[#allocation4 + $0x7a] sm:$0xff]
      %v2980 = vld [vmem:[#allocation4 + $0x82] sm:$0xff]
      %v2981 = vld [vmem:[#allocation4 + $0x8a] sm:$0xff]
      %v2982 = vld [vmem:[#allocation4 + $0x92] sm:$0xff]
      %v2983 = vld [vmem:[#allocation4 + $0x9a] sm:$0xff]
      %v2984 = vld [vmem:[#allocation4 + $0xa2] sm:$0xff]
      %v2985 = vld [vmem:[#allocation4 + $0xaa] sm:$0xff]
      %v2986 = vld [vmem:[#allocation4 + $0xb2] sm:$0xff]
      %v2987 = vld [vmem:[#allocation4 + $0xba] sm:$0xff]
      %v2988 = vld [vmem:[#allocation4 + $0xc2] sm:$0xff]
      %v2989 = vld [vmem:[#allocation4 + $0xca] sm:$0xff]
      %v2990 = vld [vmem:[#allocation4 + $0xd2] sm:$0xff]
      %v2991 = vld [vmem:[#allocation4 + $0xda] sm:$0xff]
      %v2992 = vpack.c.bf16 %v2965, %v2964
      %v2993 = vpack.c.bf16 %v2967, %v2966
      %v2994 = vpack.c.bf16 %v2969, %v2968
      %v2995 = vpack.c.bf16 %v2971, %v2970
      %v2996 = vpack.c.bf16 %v2973, %v2972
      %v2997 = vpack.c.bf16 %v2975, %v2974
      %v2998 = vpack.c.bf16 %v2977, %v2976
      %v2999 = vpack.c.bf16 %v2979, %v2978
      %v3000 = vpack.c.bf16 %v2981, %v2980
      %v3001 = vpack.c.bf16 %v2983, %v2982
      %v3002 = vpack.c.bf16 %v2985, %v2984
      %v3003 = vpack.c.bf16 %v2987, %v2986
      %v3004 = vpack.c.bf16 %v2989, %v2988
      %v3005 = vpack.c.bf16 %v2991, %v2990
      %3020 = vrot.lane.b32.xlu0 %v2992, 64
      %v3021 = vpop.permute.xlu0 %3020
      %3022 = vrot.lane.b32.xlu0 %v2993, 64
      %v3023 = vpop.permute.xlu0 %3022
      %3024 = vrot.lane.b32.xlu0 %v2994, 64
      %v3025 = vpop.permute.xlu0 %3024
      %3026 = vrot.lane.b32.xlu0 %v2995, 64
      %v3027 = vpop.permute.xlu0 %3026
      %3028 = vrot.lane.b32.xlu0 %v2996, 64
      %v3029 = vpop.permute.xlu0 %3028
      %3030 = vrot.lane.b32.xlu0 %v2997, 64
      %v3031 = vpop.permute.xlu0 %3030
      %3032 = vrot.lane.b32.xlu0 %v2998, 64
      %v3033 = vpop.permute.xlu0 %3032
      %3034 = vrot.lane.b32.xlu0 %v2999, 64
      %v3035 = vpop.permute.xlu0 %3034
      %3036 = vrot.lane.b32.xlu0 %v3000, 64
      %v3037 = vpop.permute.xlu0 %3036
      %3038 = vrot.lane.b32.xlu0 %v3001, 64
      %v3039 = vpop.permute.xlu0 %3038
      %3040 = vrot.lane.b32.xlu0 %v3002, 64
      %v3041 = vpop.permute.xlu0 %3040
      %3042 = vrot.lane.b32.xlu0 %v3003, 64
      %v3043 = vpop.permute.xlu0 %3042
      %3044 = vrot.lane.b32.xlu0 %v3004, 64
      %v3045 = vpop.permute.xlu0 %3044
      %3046 = vrot.lane.b32.xlu0 %v3005, 64
      %v3047 = vpop.permute.xlu0 %3046
      %3062 = vst.msk [vmem:[#allocation3] sm:$0xff] %vm1264, %v3021
      %3063 = vst.msk [vmem:[#allocation3 + $0x8] sm:$0xff] %vm1264, %v3023
      %3064 = vst.msk [vmem:[#allocation3 + $0x10] sm:$0xff] %vm1264, %v3025
      %3065 = vst.msk [vmem:[#allocation3 + $0x18] sm:$0xff] %vm1264, %v3027
      %3066 = vst.msk [vmem:[#allocation3 + $0x20] sm:$0xff] %vm1264, %v3029
      %3067 = vst.msk [vmem:[#allocation3 + $0x28] sm:$0xff] %vm1264, %v3031
      %3068 = vst.msk [vmem:[#allocation3 + $0x30] sm:$0xff] %vm1264, %v3033
      %3069 = vst.msk [vmem:[#allocation3 + $0x38] sm:$0xff] %vm1264, %v3035
      %3070 = vst.msk [vmem:[#allocation3 + $0x40] sm:$0xff] %vm1264, %v3037
      %3071 = vst.msk [vmem:[#allocation3 + $0x48] sm:$0xff] %vm1264, %v3039
      %3072 = vst.msk [vmem:[#allocation3 + $0x50] sm:$0xff] %vm1264, %v3041
      %3073 = vst.msk [vmem:[#allocation3 + $0x58] sm:$0xff] %vm1264, %v3043
      %3074 = vst.msk [vmem:[#allocation3 + $0x60] sm:$0xff] %vm1264, %v3045
      %3075 = vst.msk [vmem:[#allocation3 + $0x68] sm:$0xff] %vm1264, %v3047
      %v3076 = vld [vmem:[%s3 + $0x6] sm:$0x1]
      %v3077 = vld [vmem:[#allocation3] sm:$0xff]
      %v3078 = vld [vmem:[#allocation3 + $0x8] sm:$0xff]
      %v3079 = vld [vmem:[#allocation3 + $0x10] sm:$0xff]
      %v3080 = vld [vmem:[#allocation3 + $0x18] sm:$0xff]
      %v3081 = vld [vmem:[#allocation3 + $0x20] sm:$0xff]
      %v3082 = vld [vmem:[#allocation3 + $0x28] sm:$0xff]
      %v3083 = vld [vmem:[#allocation3 + $0x30] sm:$0xff]
      %v3084 = vld [vmem:[#allocation3 + $0x38] sm:$0xff]
      %v3085 = vld [vmem:[#allocation3 + $0x40] sm:$0xff]
      %v3086 = vld [vmem:[#allocation3 + $0x48] sm:$0xff]
      %v3087 = vld [vmem:[#allocation3 + $0x50] sm:$0xff]
      %v3088 = vld [vmem:[#allocation3 + $0x58] sm:$0xff]
      %v3089 = vld [vmem:[%s2 + $0xd0] sm:$0xf]
      %v3090 = vld [vmem:[%s2 + $0xd4] sm:$0xf]
      %v3091 = vld [vmem:[%s2 + $0xd8] sm:$0xf]
      %v3092 = vld [vmem:[%s2 + $0xdc] sm:$0xf]
      %v3093 = vld [vmem:[%s2 + $0xe0] sm:$0xf]
      %v3094 = vld [vmem:[%s2 + $0xe4] sm:$0xf]
      %v3095 = vld [vmem:[%s2 + $0xe8] sm:$0xf]
      %v3096 = vld [vmem:[%s2 + $0xec] sm:$0xf]
      %v3097 = vld [vmem:[%s2 + $0xf0] sm:$0xf]
      %v3098 = vld [vmem:[%s2 + $0xf4] sm:$0xf]
      %v3099 = vld [vmem:[%s2 + $0xf8] sm:$0xf]
      %v3100 = vld [vmem:[%s2 + $0xfc] sm:$0xf]
      %v3101 = vld [vmem:[#allocation3 + $0x60] sm:$0xff]
      %v3102 = vld [vmem:[%s2 + $0x100] sm:$0xf]
      %v3103 = vld [vmem:[%s2 + $0x104] sm:$0xf]
      %v3104 = vld [vmem:[%s2 + $0x108] sm:$0xf]
      %v3105 = vld [vmem:[%s2 + $0x10c] sm:$0xf]
      %v3106 = vld [vmem:[%s2 + $0x110] sm:$0xf]
      %v3107 = vld [vmem:[%s2 + $0x114] sm:$0xf]
      %v3108 = vld [vmem:[%s2 + $0x118] sm:$0xf]
      %v3109 = vld [vmem:[%s2 + $0x11c] sm:$0xf]
      %v3110 = vld [vmem:[%s2 + $0x120] sm:$0xf]
      %v3111 = vld [vmem:[%s2 + $0x124] sm:$0xf]
      %v3112 = vld [vmem:[%s2 + $0x128] sm:$0xf]
      %v3113 = vld [vmem:[%s2 + $0x12c] sm:$0xf]
      %v3126 = vunpack.c.l.b16 %v3102
      %v3127 = vunpack.c.l.b16 %v3103
      %v3128 = vunpack.c.l.b16 %v3104
      %v3129 = vunpack.c.l.b16 %v3105
      %v3130 = vunpack.c.l.b16 %v3106
      %v3131 = vunpack.c.l.b16 %v3107
      %v3132 = vunpack.c.l.b16 %v3108
      %v3133 = vunpack.c.l.b16 %v3109
      %v3134 = vunpack.c.l.b16 %v3110
      %v3135 = vunpack.c.l.b16 %v3111
      %v3136 = vunpack.c.l.b16 %v3112
      %v3137 = vunpack.c.l.b16 %v3113
      %v3138 = vpack.c.b16 %v3127, %v3126
      %v3139 = vpack.c.b16 %v3129, %v3128
      %v3140 = vpack.c.b16 %v3131, %v3130
      %v3141 = vpack.c.b16 %v3133, %v3132
      %v3142 = vpack.c.b16 %v3135, %v3134
      %v3143 = vpack.c.b16 %v3137, %v3136
      %v3151 = vsel %vm1357, %v3078, 0
      %v3154 = vsel %vm1357, %v3079, 0
      %v3157 = vsel %vm1357, %v3080, 0
      %v3160 = vsel %vm1357, %v3081, 0
      %v3163 = vsel %vm1357, %v3082, 0
      %v3166 = vsel %vm1357, %v3083, 0
      %v3169 = vsel %vm1357, %v3084, 0
      %v3172 = vsel %vm1357, %v3085, 0
      %v3175 = vsel %vm1357, %v3086, 0
      %v3178 = vsel %vm1357, %v3087, 0
      %v3181 = vsel %vm1357, %v3088, 0
      %v3184 = vsel %vm1357, %v3101, 0
      %3186 = vmatprep.subr.bf16.mxu0 0
      %3187 = vmatpush1.bf16.msra.mxu0 %v3138
      %3188 = vmatprep.subr.bf16.mxu0 0
      %3189 = vmatpush1.bf16.msra.mxu0 %v3139
      %3190 = vmatprep.subr.bf16.mxu0 0
      %3191 = vmatpush1.bf16.msra.mxu0 %v3140
      %3192 = vmatprep.subr.bf16.mxu0 0
      %3193 = vmatpush1.bf16.msra.mxu0 %v3141
      %3194 = vmatprep.subr.bf16.mxu0 0
      %3195 = vmatpush1.bf16.msra.mxu0 %v3142
      %3196 = vmatprep.subr.bf16.mxu0 0
      %3197 = vmatpush1.bf16.msra.mxu0 %v3143
      %3198 = vmatprep.subr.bf16.mxu0 0
      %3199 = vmatpush1.bf16.msra.mxu0 0
      %3200 = vmatprep.subr.bf16.mxu0 0
      %3201 = vmatpush1.bf16.msra.mxu0 0
      %3202 = vmatprep.subr.bf16.mxu0 0
      %3203 = vmatpush1.bf16.msra.mxu0 0
      %3204 = vmatprep.subr.bf16.mxu0 0
      %3205 = vmatpush1.bf16.msra.mxu0 0
      %3206 = vmatprep.subr.bf16.mxu0 0
      %3207 = vmatpush1.bf16.msra.mxu0 0
      %3208 = vmatprep.subr.bf16.mxu0 0
      %3209 = vmatpush1.bf16.msra.mxu0 0
      %3210 = vmatprep.subr.bf16.mxu0 0
      %3211 = vmatpush1.bf16.msra.mxu0 0
      %3212 = vmatprep.subr.bf16.mxu0 0
      %3213 = vmatpush1.bf16.msra.mxu0 0
      %3214 = vmatprep.subr.bf16.mxu0 0
      %3215 = vmatpush1.bf16.msra.mxu0 0
      %3216 = vmatprep.subr.bf16.mxu0 0
      %3217 = vmatpush1.bf16.msra.mxu0 0
      %3218 = vmatprep.mubr.bf16.mxu0 0
      %3219 = vmatmul.mubr.bf16.gmra.mrb[0].mxu0 %v3151
      %v3220 = vpop.f32.mrb[0].mxu0
      %v3221 = vadd.f32 0.0, %v3220
      %v3222 = vpop.f32.mrb[0].mxu0
      %v3223 = vpop.f32.mrb[0].mxu0
      %v3224 = vadd.f32 0.0, %v3223
      %v3225 = vpop.f32.mrb[0].mxu0
      %3226 = vmatprep.mubr.bf16.mxu0 0
      %3227 = vmatmul.mubr.bf16.gmra.mrb[0].mxu0 %v3154
      %v3228 = vpop.f32.mrb[0].mxu0
      %v3229 = vadd.f32 0.0, %v3228
      %v3230 = vpop.f32.mrb[0].mxu0
      %v3231 = vpop.f32.mrb[0].mxu0
      %v3232 = vadd.f32 0.0, %v3231
      %v3233 = vpop.f32.mrb[0].mxu0
      %3234 = vmatprep.mubr.bf16.mxu0 0
      %3235 = vmatmul.mubr.bf16.gmra.mrb[0].mxu0 %v3157
      %v3236 = vpop.f32.mrb[0].mxu0
      %v3237 = vadd.f32 0.0, %v3236
      %v3238 = vpop.f32.mrb[0].mxu0
      %v3239 = vpop.f32.mrb[0].mxu0
      %v3240 = vadd.f32 0.0, %v3239
      %v3241 = vpop.f32.mrb[0].mxu0
      %3242 = vmatprep.mubr.bf16.mxu0 0
      %3243 = vmatmul.mubr.bf16.gmra.mrb[0].mxu0 %v3160
      %v3244 = vpop.f32.mrb[0].mxu0
      %v3245 = vadd.f32 0.0, %v3244
      %v3246 = vpop.f32.mrb[0].mxu0
      %v3247 = vpop.f32.mrb[0].mxu0
      %v3248 = vadd.f32 0.0, %v3247
      %v3249 = vpop.f32.mrb[0].mxu0
      %3250 = vmatprep.mubr.bf16.mxu0 0
      %3251 = vmatmul.mubr.bf16.gmra.mrb[0].mxu0 %v3163
      %v3252 = vpop.f32.mrb[0].mxu0
      %v3253 = vadd.f32 0.0, %v3252
      %v3254 = vpop.f32.mrb[0].mxu0
      %v3255 = vpop.f32.mrb[0].mxu0
      %v3256 = vadd.f32 0.0, %v3255
      %v3257 = vpop.f32.mrb[0].mxu0
      %3258 = vmatprep.mubr.bf16.mxu0 0
      %3259 = vmatmul.mubr.bf16.gmra.mrb[0].mxu0 %v3166
      %v3260 = vpop.f32.mrb[0].mxu0
      %v3261 = vadd.f32 0.0, %v3260
      %v3262 = vpop.f32.mrb[0].mxu0
      %v3263 = vpop.f32.mrb[0].mxu0
      %v3264 = vadd.f32 0.0, %v3263
      %v3265 = vpop.f32.mrb[0].mxu0
      %3266 = vmatprep.mubr.bf16.mxu0 0
      %3267 = vmatmul.mubr.bf16.gmra.mrb[0].mxu0 %v3169
      %v3268 = vpop.f32.mrb[0].mxu0
      %v3269 = vadd.f32 0.0, %v3268
      %v3270 = vpop.f32.mrb[0].mxu0
      %v3271 = vpop.f32.mrb[0].mxu0
      %v3272 = vadd.f32 0.0, %v3271
      %v3273 = vpop.f32.mrb[0].mxu0
      %3274 = vmatprep.mubr.bf16.mxu0 0
      %3275 = vmatmul.mubr.bf16.gmra.mrb[0].mxu0 %v3172
      %v3276 = vpop.f32.mrb[0].mxu0
      %v3277 = vadd.f32 0.0, %v3276
      %v3278 = vpop.f32.mrb[0].mxu0
      %v3279 = vpop.f32.mrb[0].mxu0
      %v3280 = vadd.f32 0.0, %v3279
      %v3281 = vpop.f32.mrb[0].mxu0
      %3282 = vmatprep.mubr.bf16.mxu0 0
      %3283 = vmatmul.mubr.bf16.gmra.mrb[0].mxu0 %v3175
      %v3284 = vpop.f32.mrb[0].mxu0
      %v3285 = vadd.f32 0.0, %v3284
      %v3286 = vpop.f32.mrb[0].mxu0
      %v3287 = vpop.f32.mrb[0].mxu0
      %v3288 = vadd.f32 0.0, %v3287
      %v3289 = vpop.f32.mrb[0].mxu0
      %3290 = vmatprep.mubr.bf16.mxu0 0
      %3291 = vmatmul.mubr.bf16.gmra.mrb[0].mxu0 %v3178
      %v3292 = vpop.f32.mrb[0].mxu0
      %v3293 = vadd.f32 0.0, %v3292
      %v3294 = vpop.f32.mrb[0].mxu0
      %v3295 = vpop.f32.mrb[0].mxu0
      %v3296 = vadd.f32 0.0, %v3295
      %v3297 = vpop.f32.mrb[0].mxu0
      %3298 = vmatprep.mubr.bf16.mxu0 0
      %3299 = vmatmul.mubr.bf16.gmra.mrb[0].mxu0 %v3181
      %v3300 = vpop.f32.mrb[0].mxu0
      %v3301 = vadd.f32 0.0, %v3300
      %v3302 = vpop.f32.mrb[0].mxu0
      %v3303 = vpop.f32.mrb[0].mxu0
      %v3304 = vadd.f32 0.0, %v3303
      %v3305 = vpop.f32.mrb[0].mxu0
      %3306 = vmatprep.mubr.bf16.mxu0 0
      %3307 = vmatmul.mubr.bf16.gmra.mrb[0].mxu0 %v3184
      %v3308 = vpop.f32.mrb[0].mxu0
      %v3309 = vadd.f32 0.0, %v3308
      %v3310 = vpop.f32.mrb[0].mxu0
      %v3311 = vpop.f32.mrb[0].mxu0
      %v3312 = vadd.f32 0.0, %v3311
      %v3313 = vpop.f32.mrb[0].mxu0
      %3314 = vdwg.mxu0
      %v3327 = vunpack.c.l.b16 %v3089
      %v3328 = vunpack.c.l.b16 %v3090
      %v3329 = vunpack.c.l.b16 %v3091
      %v3330 = vunpack.c.l.b16 %v3092
      %v3331 = vunpack.c.l.b16 %v3093
      %v3332 = vunpack.c.l.b16 %v3094
      %v3333 = vunpack.c.l.b16 %v3095
      %v3334 = vunpack.c.l.b16 %v3096
      %v3335 = vunpack.c.l.b16 %v3097
      %v3336 = vunpack.c.l.b16 %v3098
      %v3337 = vunpack.c.l.b16 %v3099
      %v3338 = vunpack.c.l.b16 %v3100
      %v3339 = vpack.c.b16 %v3328, %v3327
      %v3340 = vpack.c.b16 %v3330, %v3329
      %v3341 = vpack.c.b16 %v3332, %v3331
      %v3342 = vpack.c.b16 %v3334, %v3333
      %v3343 = vpack.c.b16 %v3336, %v3335
      %v3344 = vpack.c.b16 %v3338, %v3337
      %v3352 = vsel %vm1357, %v3077, 0
      %3354 = vmatprep.subr.bf16.mxu0 0
      %3355 = vmatpush1.bf16.msra.mxu0 %v3339
      %3356 = vmatprep.subr.bf16.mxu0 0
      %3357 = vmatpush1.bf16.msra.mxu0 %v3340
      %3358 = vmatprep.subr.bf16.mxu0 0
      %3359 = vmatpush1.bf16.msra.mxu0 %v3341
      %3360 = vmatprep.subr.bf16.mxu0 0
      %3361 = vmatpush1.bf16.msra.mxu0 %v3342
      %3362 = vmatprep.subr.bf16.mxu0 0
      %3363 = vmatpush1.bf16.msra.mxu0 %v3343
      %3364 = vmatprep.subr.bf16.mxu0 0
      %3365 = vmatpush1.bf16.msra.mxu0 %v3344
      %3366 = vmatprep.subr.bf16.mxu0 0
      %3367 = vmatpush1.bf16.msra.mxu0 0
      %3368 = vmatprep.subr.bf16.mxu0 0
      %3369 = vmatpush1.bf16.msra.mxu0 0
      %3370 = vmatprep.subr.bf16.mxu0 0
      %3371 = vmatpush1.bf16.msra.mxu0 0
      %3372 = vmatprep.subr.bf16.mxu0 0
      %3373 = vmatpush1.bf16.msra.mxu0 0
      %3374 = vmatprep.subr.bf16.mxu0 0
      %3375 = vmatpush1.bf16.msra.mxu0 0
      %3376 = vmatprep.subr.bf16.mxu0 0
      %3377 = vmatpush1.bf16.msra.mxu0 0
      %3378 = vmatprep.subr.bf16.mxu0 0
      %3379 = vmatpush1.bf16.msra.mxu0 0
      %3380 = vmatprep.subr.bf16.mxu0 0
      %3381 = vmatpush1.bf16.msra.mxu0 0
      %3382 = vmatprep.subr.bf16.mxu0 0
      %3383 = vmatpush1.bf16.msra.mxu0 0
      %3384 = vmatprep.subr.bf16.mxu0 0
      %3385 = vmatpush1.bf16.msra.mxu0 0
      %3386 = vmatprep.mubr.bf16.mxu0 0
      %3387 = vmatmul.mubr.bf16.gmra.mrb[0].mxu0 %v3352
      %v3388 = vpop.f32.mrb[0].mxu0
      %v3389 = vadd.f32 %v3221, %v3388
      %v3390 = vpop.f32.mrb[0].mxu0
      %v3391 = vpop.f32.mrb[0].mxu0
      %v3392 = vadd.f32 %v3224, %v3391
      %v3393 = vpop.f32.mrb[0].mxu0
      %3394 = vmatprep.mubr.bf16.mxu0 0
      %3395 = vmatmul.mubr.bf16.gmra.mrb[0].mxu0 %v3151
      %v3396 = vpop.f32.mrb[0].mxu0
      %v3397 = vadd.f32 %v3229, %v3396
      %v3398 = vpop.f32.mrb[0].mxu0
      %v3399 = vpop.f32.mrb[0].mxu0
      %v3400 = vadd.f32 %v3232, %v3399
      %v3401 = vpop.f32.mrb[0].mxu0
      %3402 = vmatprep.mubr.bf16.mxu0 0
      %3403 = vmatmul.mubr.bf16.gmra.mrb[0].mxu0 %v3154
      %v3404 = vpop.f32.mrb[0].mxu0
      %v3405 = vadd.f32 %v3237, %v3404
      %v3406 = vpop.f32.mrb[0].mxu0
      %v3407 = vpop.f32.mrb[0].mxu0
      %v3408 = vadd.f32 %v3240, %v3407
      %v3409 = vpop.f32.mrb[0].mxu0
      %3410 = vmatprep.mubr.bf16.mxu0 0
      %3411 = vmatmul.mubr.bf16.gmra.mrb[0].mxu0 %v3157
      %v3412 = vpop.f32.mrb[0].mxu0
      %v3413 = vadd.f32 %v3245, %v3412
      %v3414 = vpop.f32.mrb[0].mxu0
      %v3415 = vpop.f32.mrb[0].mxu0
      %v3416 = vadd.f32 %v3248, %v3415
      %v3417 = vpop.f32.mrb[0].mxu0
      %3418 = vmatprep.mubr.bf16.mxu0 0
      %3419 = vmatmul.mubr.bf16.gmra.mrb[0].mxu0 %v3160
      %v3420 = vpop.f32.mrb[0].mxu0
      %v3421 = vadd.f32 %v3253, %v3420
      %v3422 = vpop.f32.mrb[0].mxu0
      %v3423 = vpop.f32.mrb[0].mxu0
      %v3424 = vadd.f32 %v3256, %v3423
      %v3425 = vpop.f32.mrb[0].mxu0
      %3426 = vmatprep.mubr.bf16.mxu0 0
      %3427 = vmatmul.mubr.bf16.gmra.mrb[0].mxu0 %v3163
      %v3428 = vpop.f32.mrb[0].mxu0
      %v3429 = vadd.f32 %v3261, %v3428
      %v3430 = vpop.f32.mrb[0].mxu0
      %v3431 = vpop.f32.mrb[0].mxu0
      %v3432 = vadd.f32 %v3264, %v3431
      %v3433 = vpop.f32.mrb[0].mxu0
      %3434 = vmatprep.mubr.bf16.mxu0 0
      %3435 = vmatmul.mubr.bf16.gmra.mrb[0].mxu0 %v3166
      %v3436 = vpop.f32.mrb[0].mxu0
      %v3437 = vadd.f32 %v3269, %v3436
      %v3438 = vpop.f32.mrb[0].mxu0
      %v3439 = vpop.f32.mrb[0].mxu0
      %v3440 = vadd.f32 %v3272, %v3439
      %v3441 = vpop.f32.mrb[0].mxu0
      %3442 = vmatprep.mubr.bf16.mxu0 0
      %3443 = vmatmul.mubr.bf16.gmra.mrb[0].mxu0 %v3169
      %v3444 = vpop.f32.mrb[0].mxu0
      %v3445 = vadd.f32 %v3277, %v3444
      %v3446 = vpop.f32.mrb[0].mxu0
      %v3447 = vpop.f32.mrb[0].mxu0
      %v3448 = vadd.f32 %v3280, %v3447
      %v3449 = vpop.f32.mrb[0].mxu0
      %3450 = vmatprep.mubr.bf16.mxu0 0
      %3451 = vmatmul.mubr.bf16.gmra.mrb[0].mxu0 %v3172
      %v3452 = vpop.f32.mrb[0].mxu0
      %v3453 = vadd.f32 %v3285, %v3452
      %v3454 = vpop.f32.mrb[0].mxu0
      %v3455 = vpop.f32.mrb[0].mxu0
      %v3456 = vadd.f32 %v3288, %v3455
      %v3457 = vpop.f32.mrb[0].mxu0
      %3458 = vmatprep.mubr.bf16.mxu0 0
      %3459 = vmatmul.mubr.bf16.gmra.mrb[0].mxu0 %v3175
      %v3460 = vpop.f32.mrb[0].mxu0
      %v3461 = vadd.f32 %v3293, %v3460
      %v3462 = vpop.f32.mrb[0].mxu0
      %v3463 = vpop.f32.mrb[0].mxu0
      %v3464 = vadd.f32 %v3296, %v3463
      %v3465 = vpop.f32.mrb[0].mxu0
      %3466 = vmatprep.mubr.bf16.mxu0 0
      %3467 = vmatmul.mubr.bf16.gmra.mrb[0].mxu0 %v3178
      %v3468 = vpop.f32.mrb[0].mxu0
      %v3469 = vadd.f32 %v3301, %v3468
      %v3470 = vpop.f32.mrb[0].mxu0
      %v3471 = vpop.f32.mrb[0].mxu0
      %v3472 = vadd.f32 %v3304, %v3471
      %v3473 = vpop.f32.mrb[0].mxu0
      %3474 = vmatprep.mubr.bf16.mxu0 0
      %3475 = vmatmul.mubr.bf16.gmra.mrb[0].mxu0 %v3181
      %v3476 = vpop.f32.mrb[0].mxu0
      %v3477 = vadd.f32 %v3309, %v3476
      %v3478 = vpop.f32.mrb[0].mxu0
      %v3479 = vpop.f32.mrb[0].mxu0
      %v3480 = vadd.f32 %v3312, %v3479
      %v3481 = vpop.f32.mrb[0].mxu0
      %3482 = vdwg.mxu0
      %v3483 = vld [vmem:[#allocation3 + $0x10] sm:$0xff]
      %v3484 = vld [vmem:[#allocation3 + $0x18] sm:$0xff]
      %v3485 = vld [vmem:[#allocation3 + $0x20] sm:$0xff]
      %v3486 = vld [vmem:[#allocation3 + $0x28] sm:$0xff]
      %v3487 = vld [vmem:[#allocation3 + $0x30] sm:$0xff]
      %v3488 = vld [vmem:[#allocation3 + $0x38] sm:$0xff]
      %v3489 = vld [vmem:[#allocation3 + $0x40] sm:$0xff]
      %v3490 = vld [vmem:[#allocation3 + $0x48] sm:$0xff]
      %v3491 = vld [vmem:[#allocation3 + $0x50] sm:$0xff]
      %v3492 = vld [vmem:[#allocation3 + $0x58] sm:$0xff]
      %v3493 = vld [vmem:[#allocation3 + $0x60] sm:$0xff]
      %v3494 = vld [vmem:[#allocation3 + $0x68] sm:$0xff]
      %v3495 = vld [vmem:[%s2 + $0x130] sm:$0xf]
      %v3496 = vld [vmem:[%s2 + $0x134] sm:$0xf]
      %v3497 = vld [vmem:[%s2 + $0x138] sm:$0xf]
      %v3498 = vld [vmem:[%s2 + $0x13c] sm:$0xf]
      %v3499 = vld [vmem:[%s2 + $0x140] sm:$0xf]
      %v3500 = vld [vmem:[%s2 + $0x144] sm:$0xf]
      %v3501 = vld [vmem:[%s2 + $0x148] sm:$0xf]
      %v3502 = vld [vmem:[%s2 + $0x14c] sm:$0xf]
      %v3503 = vld [vmem:[%s2 + $0x150] sm:$0xf]
      %v3504 = vld [vmem:[%s2 + $0x154] sm:$0xf]
      %v3505 = vld [vmem:[%s2 + $0x158] sm:$0xf]
      %v3506 = vld [vmem:[%s2 + $0x15c] sm:$0xf]
      %v3519 = vunpack.c.l.b16 %v3495
      %v3520 = vunpack.c.l.b16 %v3496
      %v3521 = vunpack.c.l.b16 %v3497
      %v3522 = vunpack.c.l.b16 %v3498
      %v3523 = vunpack.c.l.b16 %v3499
      %v3524 = vunpack.c.l.b16 %v3500
      %v3525 = vunpack.c.l.b16 %v3501
      %v3526 = vunpack.c.l.b16 %v3502
      %v3527 = vunpack.c.l.b16 %v3503
      %v3528 = vunpack.c.l.b16 %v3504
      %v3529 = vunpack.c.l.b16 %v3505
      %v3530 = vunpack.c.l.b16 %v3506
      %v3531 = vpack.c.b16 %v3520, %v3519
      %v3532 = vpack.c.b16 %v3522, %v3521
      %v3533 = vpack.c.b16 %v3524, %v3523
      %v3534 = vpack.c.b16 %v3526, %v3525
      %v3535 = vpack.c.b16 %v3528, %v3527
      %v3536 = vpack.c.b16 %v3530, %v3529
      %v3544 = vsel %vm1357, %v3483, 0
      %v3547 = vsel %vm1357, %v3484, 0
      %v3550 = vsel %vm1357, %v3485, 0
      %v3553 = vsel %vm1357, %v3486, 0
      %v3556 = vsel %vm1357, %v3487, 0
      %v3559 = vsel %vm1357, %v3488, 0
      %v3562 = vsel %vm1357, %v3489, 0
      %v3565 = vsel %vm1357, %v3490, 0
      %v3568 = vsel %vm1357, %v3491, 0
      %v3571 = vsel %vm1357, %v3492, 0
      %v3574 = vsel %vm1357, %v3493, 0
      %v3577 = vsel %vm1357, %v3494, 0
      %3579 = vmatprep.subr.bf16.mxu0 0
      %3580 = vmatpush1.bf16.msra.mxu0 %v3531
      %3581 = vmatprep.subr.bf16.mxu0 0
      %3582 = vmatpush1.bf16.msra.mxu0 %v3532
      %3583 = vmatprep.subr.bf16.mxu0 0
      %3584 = vmatpush1.bf16.msra.mxu0 %v3533
      %3585 = vmatprep.subr.bf16.mxu0 0
      %3586 = vmatpush1.bf16.msra.mxu0 %v3534
      %3587 = vmatprep.subr.bf16.mxu0 0
      %3588 = vmatpush1.bf16.msra.mxu0 %v3535
      %3589 = vmatprep.subr.bf16.mxu0 0
      %3590 = vmatpush1.bf16.msra.mxu0 %v3536
      %3591 = vmatprep.subr.bf16.mxu0 0
      %3592 = vmatpush1.bf16.msra.mxu0 0
      %3593 = vmatprep.subr.bf16.mxu0 0
      %3594 = vmatpush1.bf16.msra.mxu0 0
      %3595 = vmatprep.subr.bf16.mxu0 0
      %3596 = vmatpush1.bf16.msra.mxu0 0
      %3597 = vmatprep.subr.bf16.mxu0 0
      %3598 = vmatpush1.bf16.msra.mxu0 0
      %3599 = vmatprep.subr.bf16.mxu0 0
      %3600 = vmatpush1.bf16.msra.mxu0 0
      %3601 = vmatprep.subr.bf16.mxu0 0
      %3602 = vmatpush1.bf16.msra.mxu0 0
      %3603 = vmatprep.subr.bf16.mxu0 0
      %3604 = vmatpush1.bf16.msra.mxu0 0
      %3605 = vmatprep.subr.bf16.mxu0 0
      %3606 = vmatpush1.bf16.msra.mxu0 0
      %3607 = vmatprep.subr.bf16.mxu0 0
      %3608 = vmatpush1.bf16.msra.mxu0 0
      %3609 = vmatprep.subr.bf16.mxu0 0
      %3610 = vmatpush1.bf16.msra.mxu0 0
      %3611 = vmatprep.mubr.bf16.mxu0 0
      %3612 = vmatmul.mubr.bf16.gmra.mrb[0].mxu0 %v3544
      %v3613 = vpop.f32.mrb[0].mxu0
      %v3614 = vadd.f32 0.0, %v3613
      %v3615 = vpop.f32.mrb[0].mxu0
      %v3616 = vpop.f32.mrb[0].mxu0
      %v3617 = vadd.f32 0.0, %v3616
      %v3618 = vpop.f32.mrb[0].mxu0
      %3619 = vmatprep.mubr.bf16.mxu0 0
      %3620 = vmatmul.mubr.bf16.gmra.mrb[0].mxu0 %v3547
      %v3621 = vpop.f32.mrb[0].mxu0
      %v3622 = vadd.f32 0.0, %v3621
      %v3623 = vpop.f32.mrb[0].mxu0
      %v3624 = vpop.f32.mrb[0].mxu0
      %v3625 = vadd.f32 0.0, %v3624
      %v3626 = vpop.f32.mrb[0].mxu0
      %3627 = vmatprep.mubr.bf16.mxu0 0
      %3628 = vmatmul.mubr.bf16.gmra.mrb[0].mxu0 %v3550
      %v3629 = vpop.f32.mrb[0].mxu0
      %v3630 = vadd.f32 0.0, %v3629
      %v3631 = vpop.f32.mrb[0].mxu0
      %v3632 = vpop.f32.mrb[0].mxu0
      %v3633 = vadd.f32 0.0, %v3632
      %v3634 = vpop.f32.mrb[0].mxu0
      %3635 = vmatprep.mubr.bf16.mxu0 0
      %3636 = vmatmul.mubr.bf16.gmra.mrb[0].mxu0 %v3553
      %v3637 = vpop.f32.mrb[0].mxu0
      %v3638 = vadd.f32 0.0, %v3637
      %v3639 = vpop.f32.mrb[0].mxu0
      %v3640 = vpop.f32.mrb[0].mxu0
      %v3641 = vadd.f32 0.0, %v3640
      %v3642 = vpop.f32.mrb[0].mxu0
      %3643 = vmatprep.mubr.bf16.mxu0 0
      %3644 = vmatmul.mubr.bf16.gmra.mrb[0].mxu0 %v3556
      %v3645 = vpop.f32.mrb[0].mxu0
      %v3646 = vadd.f32 0.0, %v3645
      %v3647 = vpop.f32.mrb[0].mxu0
      %v3648 = vpop.f32.mrb[0].mxu0
      %v3649 = vadd.f32 0.0, %v3648
      %v3650 = vpop.f32.mrb[0].mxu0
      %3651 = vmatprep.mubr.bf16.mxu0 0
      %3652 = vmatmul.mubr.bf16.gmra.mrb[0].mxu0 %v3559
      %v3653 = vpop.f32.mrb[0].mxu0
      %v3654 = vadd.f32 0.0, %v3653
      %v3655 = vpop.f32.mrb[0].mxu0
      %v3656 = vpop.f32.mrb[0].mxu0
      %v3657 = vadd.f32 0.0, %v3656
      %v3658 = vpop.f32.mrb[0].mxu0
      %3659 = vmatprep.mubr.bf16.mxu0 0
      %3660 = vmatmul.mubr.bf16.gmra.mrb[0].mxu0 %v3562
      %v3661 = vpop.f32.mrb[0].mxu0
      %v3662 = vadd.f32 0.0, %v3661
      %v3663 = vpop.f32.mrb[0].mxu0
      %v3664 = vpop.f32.mrb[0].mxu0
      %v3665 = vadd.f32 0.0, %v3664
      %v3666 = vpop.f32.mrb[0].mxu0
      %3667 = vmatprep.mubr.bf16.mxu0 0
      %3668 = vmatmul.mubr.bf16.gmra.mrb[0].mxu0 %v3565
      %v3669 = vpop.f32.mrb[0].mxu0
      %v3670 = vadd.f32 0.0, %v3669
      %v3671 = vpop.f32.mrb[0].mxu0
      %v3672 = vpop.f32.mrb[0].mxu0
      %v3673 = vadd.f32 0.0, %v3672
      %v3674 = vpop.f32.mrb[0].mxu0
      %3675 = vmatprep.mubr.bf16.mxu0 0
      %3676 = vmatmul.mubr.bf16.gmra.mrb[0].mxu0 %v3568
      %v3677 = vpop.f32.mrb[0].mxu0
      %v3678 = vadd.f32 0.0, %v3677
      %v3679 = vpop.f32.mrb[0].mxu0
      %v3680 = vpop.f32.mrb[0].mxu0
      %v3681 = vadd.f32 0.0, %v3680
      %v3682 = vpop.f32.mrb[0].mxu0
      %3683 = vmatprep.mubr.bf16.mxu0 0
      %3684 = vmatmul.mubr.bf16.gmra.mrb[0].mxu0 %v3571
      %v3685 = vpop.f32.mrb[0].mxu0
      %v3686 = vadd.f32 0.0, %v3685
      %v3687 = vpop.f32.mrb[0].mxu0
      %v3688 = vpop.f32.mrb[0].mxu0
      %v3689 = vadd.f32 0.0, %v3688
      %v3690 = vpop.f32.mrb[0].mxu0
      %3691 = vmatprep.mubr.bf16.mxu0 0
      %3692 = vmatmul.mubr.bf16.gmra.mrb[0].mxu0 %v3574
      %v3693 = vpop.f32.mrb[0].mxu0
      %v3694 = vadd.f32 0.0, %v3693
      %v3695 = vpop.f32.mrb[0].mxu0
      %v3696 = vpop.f32.mrb[0].mxu0
      %v3697 = vadd.f32 0.0, %v3696
      %v3698 = vpop.f32.mrb[0].mxu0
      %3699 = vmatprep.mubr.bf16.mxu0 0
      %3700 = vmatmul.mubr.bf16.gmra.mrb[0].mxu0 %v3577
      %v3701 = vpop.f32.mrb[0].mxu0
      %v3702 = vadd.f32 0.0, %v3701
      %v3703 = vpop.f32.mrb[0].mxu0
      %v3704 = vpop.f32.mrb[0].mxu0
      %v3705 = vadd.f32 0.0, %v3704
      %v3706 = vpop.f32.mrb[0].mxu0
      %3707 = vdwg.mxu0
      %v3708 = vadd.f32 %v3389, %v3614
      %v3709 = vadd.f32 %v3392, %v3617
      %v3710 = vadd.f32 %v3397, %v3622
      %v3711 = vadd.f32 %v3400, %v3625
      %v3712 = vadd.f32 %v3405, %v3630
      %v3713 = vadd.f32 %v3408, %v3633
      %v3714 = vadd.f32 %v3413, %v3638
      %v3715 = vadd.f32 %v3416, %v3641
      %v3716 = vadd.f32 %v3421, %v3646
      %v3717 = vadd.f32 %v3424, %v3649
      %v3718 = vadd.f32 %v3429, %v3654
      %v3719 = vadd.f32 %v3432, %v3657
      %v3720 = vadd.f32 %v3437, %v3662
      %v3721 = vadd.f32 %v3440, %v3665
      %v3722 = vadd.f32 %v3445, %v3670
      %v3723 = vadd.f32 %v3448, %v3673
      %v3724 = vadd.f32 %v3453, %v3678
      %v3725 = vadd.f32 %v3456, %v3681
      %v3726 = vadd.f32 %v3461, %v3686
      %v3727 = vadd.f32 %v3464, %v3689
      %v3728 = vadd.f32 %v3469, %v3694
      %v3729 = vadd.f32 %v3472, %v3697
      %v3730 = vadd.f32 %v3477, %v3702
      %v3731 = vadd.f32 %v3480, %v3705
      %v3732 = vlaneseq
      %v3733 = vshrl.u32 %v3732, 7
      %v3734 = vsub.s32 0, %v3733
      %v3735 = vrot.slane %v3076, %v3734
      %v3736 = vadd.f32 %v3708, %v3735
      %v3737 = vadd.f32 %v3709, %v3735
      %v3738 = vadd.f32 %v3710, %v3735
      %v3739 = vadd.f32 %v3711, %v3735
      %v3740 = vadd.f32 %v3712, %v3735
      %v3741 = vadd.f32 %v3713, %v3735
      %v3742 = vadd.f32 %v3714, %v3735
      %v3743 = vadd.f32 %v3715, %v3735
      %v3744 = vadd.f32 %v3716, %v3735
      %v3745 = vadd.f32 %v3717, %v3735
      %v3746 = vadd.f32 %v3718, %v3735
      %v3747 = vadd.f32 %v3719, %v3735
      %v3748 = vadd.f32 %v3720, %v3735
      %v3749 = vadd.f32 %v3721, %v3735
      %v3750 = vadd.f32 %v3722, %v3735
      %v3751 = vadd.f32 %v3723, %v3735
      %v3752 = vadd.f32 %v3724, %v3735
      %v3753 = vadd.f32 %v3725, %v3735
      %v3754 = vadd.f32 %v3726, %v3735
      %v3755 = vadd.f32 %v3727, %v3735
      %v3756 = vadd.f32 %v3728, %v3735
      %v3757 = vadd.f32 %v3729, %v3735
      %v3758 = vadd.f32 %v3730, %v3735
      %v3759 = vadd.f32 %v3731, %v3735
      %v3760 = vld [vmem:[%s3 + $0x7] sm:$0x1]
      %v3761 = vld [vmem:[%s3 + $0x8] sm:$0x1]
      %vm3762 = vcmp.lt.s32.totalorder %v2377, 12
      %vm3763 = vcmp.lt.s32.totalorder %v2378, 12
      %vm3764 = vcmp.lt.s32.totalorder %v2379, 12
      %vm3765 = vcmp.lt.s32.totalorder %v2380, 12
      %vm3766 = vcmp.lt.s32.totalorder %v2381, 12
      %vm3767 = vcmp.lt.s32.totalorder %v2382, 12
      %vm3768 = vcmp.lt.s32.totalorder %v2383, 12
      %vm3769 = vcmp.lt.s32.totalorder %v2384, 12
      %vm3770 = vcmp.lt.s32.totalorder %v2385, 12
      %vm3771 = vcmp.lt.s32.totalorder %v2386, 12
      %vm3772 = vcmp.lt.s32.totalorder %v2387, 12
      %vm3773 = vcmp.lt.s32.totalorder %v2388, 12
      %vm3774 = vcmp.lt.s32.totalorder %v2389, 12
      %vm3775 = vcmp.lt.s32.totalorder %v2390, 12
      %vm3776 = vcmp.lt.s32.totalorder %v2391, 12
      %vm3777 = vcmp.lt.s32.totalorder %v2392, 12
      %vm3778 = vcmp.lt.s32.totalorder %v2393, 12
      %vm3779 = vcmp.lt.s32.totalorder %v2394, 12
      %vm3780 = vcmp.lt.s32.totalorder %v2395, 12
      %vm3781 = vcmp.lt.s32.totalorder %v2396, 12
      %vm3782 = vcmp.lt.s32.totalorder %v2397, 12
      %vm3783 = vcmp.lt.s32.totalorder %v2398, 12
      %vm3784 = vcmp.lt.s32.totalorder %v2399, 12
      %vm3785 = vcmp.lt.s32.totalorder %v2400, 12
      %v3786 = vsel %vm3762, 1, 0
      %v3787 = vsel %vm3763, 1, 0
      %v3788 = vsel %vm3764, 1, 0
      %v3789 = vsel %vm3765, 1, 0
      %v3790 = vsel %vm3766, 1, 0
      %v3791 = vsel %vm3767, 1, 0
      %v3792 = vsel %vm3768, 1, 0
      %v3793 = vsel %vm3769, 1, 0
      %v3794 = vsel %vm3770, 1, 0
      %v3795 = vsel %vm3771, 1, 0
      %v3796 = vsel %vm3772, 1, 0
      %v3797 = vsel %vm3773, 1, 0
      %v3798 = vsel %vm3774, 1, 0
      %v3799 = vsel %vm3775, 1, 0
      %v3800 = vsel %vm3776, 1, 0
      %v3801 = vsel %vm3777, 1, 0
      %v3802 = vsel %vm3778, 1, 0
      %v3803 = vsel %vm3779, 1, 0
      %v3804 = vsel %vm3780, 1, 0
      %v3805 = vsel %vm3781, 1, 0
      %v3806 = vsel %vm3782, 1, 0
      %v3807 = vsel %vm3783, 1, 0
      %v3808 = vsel %vm3784, 1, 0
      %v3809 = vsel %vm3785, 1, 0
      %v3810 = vcvt.s32.f32 %v3786
      %v3811 = vcvt.s32.f32 %v3787
      %v3812 = vcvt.s32.f32 %v3788
      %v3813 = vcvt.s32.f32 %v3789
      %v3814 = vcvt.s32.f32 %v3790
      %v3815 = vcvt.s32.f32 %v3791
      %v3816 = vcvt.s32.f32 %v3792
      %v3817 = vcvt.s32.f32 %v3793
      %v3818 = vcvt.s32.f32 %v3794
      %v3819 = vcvt.s32.f32 %v3795
      %v3820 = vcvt.s32.f32 %v3796
      %v3821 = vcvt.s32.f32 %v3797
      %v3822 = vcvt.s32.f32 %v3798
      %v3823 = vcvt.s32.f32 %v3799
      %v3824 = vcvt.s32.f32 %v3800
      %v3825 = vcvt.s32.f32 %v3801
      %v3826 = vcvt.s32.f32 %v3802
      %v3827 = vcvt.s32.f32 %v3803
      %v3828 = vcvt.s32.f32 %v3804
      %v3829 = vcvt.s32.f32 %v3805
      %v3830 = vcvt.s32.f32 %v3806
      %v3831 = vcvt.s32.f32 %v3807
      %v3832 = vcvt.s32.f32 %v3808
      %v3833 = vcvt.s32.f32 %v3809
      %v3834 = vmax.f32 %v3736, 0.0
      %v3835 = vmax.f32 %v3737, 0.0
      %v3836 = vmax.f32 %v3738, 0.0
      %v3837 = vmax.f32 %v3739, 0.0
      %v3838 = vmax.f32 %v3740, 0.0
      %v3839 = vmax.f32 %v3741, 0.0
      %v3840 = vmax.f32 %v3742, 0.0
      %v3841 = vmax.f32 %v3743, 0.0
      %v3842 = vmax.f32 %v3744, 0.0
      %v3843 = vmax.f32 %v3745, 0.0
      %v3844 = vmax.f32 %v3746, 0.0
      %v3845 = vmax.f32 %v3747, 0.0
      %v3846 = vmax.f32 %v3748, 0.0
      %v3847 = vmax.f32 %v3749, 0.0
      %v3848 = vmax.f32 %v3750, 0.0
      %v3849 = vmax.f32 %v3751, 0.0
      %v3850 = vmax.f32 %v3752, 0.0
      %v3851 = vmax.f32 %v3753, 0.0
      %v3852 = vmax.f32 %v3754, 0.0
      %v3853 = vmax.f32 %v3755, 0.0
      %v3854 = vmax.f32 %v3756, 0.0
      %v3855 = vmax.f32 %v3757, 0.0
      %v3856 = vmax.f32 %v3758, 0.0
      %v3857 = vmax.f32 %v3759, 0.0
      %v3858 = vmul.f32 %v3834, %v3810
      %v3859 = vmul.f32 %v3835, %v3811
      %v3860 = vmul.f32 %v3836, %v3812
      %v3861 = vmul.f32 %v3837, %v3813
      %v3862 = vmul.f32 %v3838, %v3814
      %v3863 = vmul.f32 %v3839, %v3815
      %v3864 = vmul.f32 %v3840, %v3816
      %v3865 = vmul.f32 %v3841, %v3817
      %v3866 = vmul.f32 %v3842, %v3818
      %v3867 = vmul.f32 %v3843, %v3819
      %v3868 = vmul.f32 %v3844, %v3820
      %v3869 = vmul.f32 %v3845, %v3821
      %v3870 = vmul.f32 %v3846, %v3822
      %v3871 = vmul.f32 %v3847, %v3823
      %v3872 = vmul.f32 %v3848, %v3824
      %v3873 = vmul.f32 %v3849, %v3825
      %v3874 = vmul.f32 %v3850, %v3826
      %v3875 = vmul.f32 %v3851, %v3827
      %v3876 = vmul.f32 %v3852, %v3828
      %v3877 = vmul.f32 %v3853, %v3829
      %v3878 = vmul.f32 %v3854, %v3830
      %v3879 = vmul.f32 %v3855, %v3831
      %v3880 = vmul.f32 %v3856, %v3832
      %v3881 = vmul.f32 %v3857, %v3833
      %v3882 = vsel %vm611, %v3858, 0.0
      %v3883 = vsel %vm611, %v3859, 0.0
      %v3884 = vadd.f32 %v3882, %v3883
      %v3885 = vsel %vm611, %v3860, 0.0
      %v3886 = vadd.f32 %v3884, %v3885
      %v3887 = vsel %vm611, %v3861, 0.0
      %v3888 = vadd.f32 %v3886, %v3887
      %v3889 = vsel %vm611, %v3862, 0.0
      %v3890 = vadd.f32 %v3888, %v3889
      %v3891 = vsel %vm611, %v3863, 0.0
      %v3892 = vadd.f32 %v3890, %v3891
      %v3893 = vsel %vm611, %v3864, 0.0
      %v3894 = vadd.f32 %v3892, %v3893
      %v3895 = vsel %vm611, %v3865, 0.0
      %v3896 = vadd.f32 %v3894, %v3895
      %v3897 = vsel %vm611, %v3866, 0.0
      %v3898 = vadd.f32 %v3896, %v3897
      %v3899 = vsel %vm611, %v3867, 0.0
      %v3900 = vadd.f32 %v3898, %v3899
      %v3901 = vsel %vm611, %v3868, 0.0
      %v3902 = vadd.f32 %v3900, %v3901
      %v3903 = vsel %vm611, %v3869, 0.0
      %v3904 = vadd.f32 %v3902, %v3903
      %v3905 = vsel %vm611, %v3870, 0.0
      %v3906 = vadd.f32 %v3904, %v3905
      %v3907 = vsel %vm611, %v3871, 0.0
      %v3908 = vadd.f32 %v3906, %v3907
      %v3909 = vsel %vm611, %v3872, 0.0
      %v3910 = vadd.f32 %v3908, %v3909
      %v3911 = vsel %vm611, %v3873, 0.0
      %v3912 = vadd.f32 %v3910, %v3911
      %v3913 = vsel %vm611, %v3874, 0.0
      %v3914 = vadd.f32 %v3912, %v3913
      %v3915 = vsel %vm611, %v3875, 0.0
      %v3916 = vadd.f32 %v3914, %v3915
      %v3917 = vsel %vm611, %v3876, 0.0
      %v3918 = vadd.f32 %v3916, %v3917
      %v3919 = vsel %vm611, %v3877, 0.0
      %v3920 = vadd.f32 %v3918, %v3919
      %v3921 = vsel %vm611, %v3878, 0.0
      %v3922 = vadd.f32 %v3920, %v3921
      %v3923 = vsel %vm611, %v3879, 0.0
      %v3924 = vadd.f32 %v3922, %v3923
      %v3925 = vsel %vm611, %v3880, 0.0
      %v3926 = vadd.f32 %v3924, %v3925
      %v3927 = vsel %vm611, %v3881, 0.0
      %v3928 = vadd.f32 %v3926, %v3927
      %v3929 = vrot.slane %v3928, 4
      %v3930 = vadd.f32 %v3928, %v3929
      %v3931 = vrot.slane %v3930, 2
      %v3932 = vadd.f32 %v3930, %v3931
      %v3933 = vrot.slane %v3932, 1
      %v3934 = vadd.f32 %v3932, %v3933
      %v3935 = vmul.f32 %v3858, %v3858
      %v3936 = vmul.f32 %v3859, %v3859
      %v3937 = vmul.f32 %v3860, %v3860
      %v3938 = vmul.f32 %v3861, %v3861
      %v3939 = vmul.f32 %v3862, %v3862
      %v3940 = vmul.f32 %v3863, %v3863
      %v3941 = vmul.f32 %v3864, %v3864
      %v3942 = vmul.f32 %v3865, %v3865
      %v3943 = vmul.f32 %v3866, %v3866
      %v3944 = vmul.f32 %v3867, %v3867
      %v3945 = vmul.f32 %v3868, %v3868
      %v3946 = vmul.f32 %v3869, %v3869
      %v3947 = vmul.f32 %v3870, %v3870
      %v3948 = vmul.f32 %v3871, %v3871
      %v3949 = vmul.f32 %v3872, %v3872
      %v3950 = vmul.f32 %v3873, %v3873
      %v3951 = vmul.f32 %v3874, %v3874
      %v3952 = vmul.f32 %v3875, %v3875
      %v3953 = vmul.f32 %v3876, %v3876
      %v3954 = vmul.f32 %v3877, %v3877
      %v3955 = vmul.f32 %v3878, %v3878
      %v3956 = vmul.f32 %v3879, %v3879
      %v3957 = vmul.f32 %v3880, %v3880
      %v3958 = vmul.f32 %v3881, %v3881
      %v3959 = vsel %vm611, %v3935, 0.0
      %v3960 = vsel %vm611, %v3936, 0.0
      %v3961 = vadd.f32 %v3959, %v3960
      %v3962 = vsel %vm611, %v3937, 0.0
      %v3963 = vadd.f32 %v3961, %v3962
      %v3964 = vsel %vm611, %v3938, 0.0
      %v3965 = vadd.f32 %v3963, %v3964
      %v3966 = vsel %vm611, %v3939, 0.0
      %v3967 = vadd.f32 %v3965, %v3966
      %v3968 = vsel %vm611, %v3940, 0.0
      %v3969 = vadd.f32 %v3967, %v3968
      %v3970 = vsel %vm611, %v3941, 0.0
      %v3971 = vadd.f32 %v3969, %v3970
      %v3972 = vsel %vm611, %v3942, 0.0
      %v3973 = vadd.f32 %v3971, %v3972
      %v3974 = vsel %vm611, %v3943, 0.0
      %v3975 = vadd.f32 %v3973, %v3974
      %v3976 = vsel %vm611, %v3944, 0.0
      %v3977 = vadd.f32 %v3975, %v3976
      %v3978 = vsel %vm611, %v3945, 0.0
      %v3979 = vadd.f32 %v3977, %v3978
      %v3980 = vsel %vm611, %v3946, 0.0
      %v3981 = vadd.f32 %v3979, %v3980
      %v3982 = vsel %vm611, %v3947, 0.0
      %v3983 = vadd.f32 %v3981, %v3982
      %v3984 = vsel %vm611, %v3948, 0.0
      %v3985 = vadd.f32 %v3983, %v3984
      %v3986 = vsel %vm611, %v3949, 0.0
      %v3987 = vadd.f32 %v3985, %v3986
      %v3988 = vsel %vm611, %v3950, 0.0
      %v3989 = vadd.f32 %v3987, %v3988
      %v3990 = vsel %vm611, %v3951, 0.0
      %v3991 = vadd.f32 %v3989, %v3990
      %v3992 = vsel %vm611, %v3952, 0.0
      %v3993 = vadd.f32 %v3991, %v3992
      %v3994 = vsel %vm611, %v3953, 0.0
      %v3995 = vadd.f32 %v3993, %v3994
      %v3996 = vsel %vm611, %v3954, 0.0
      %v3997 = vadd.f32 %v3995, %v3996
      %v3998 = vsel %vm611, %v3955, 0.0
      %v3999 = vadd.f32 %v3997, %v3998
      %v4000 = vsel %vm611, %v3956, 0.0
      %v4001 = vadd.f32 %v3999, %v4000
      %v4002 = vsel %vm611, %v3957, 0.0
      %v4003 = vadd.f32 %v4001, %v4002
      %v4004 = vsel %vm611, %v3958, 0.0
      %v4005 = vadd.f32 %v4003, %v4004
      %v4006 = vrot.slane %v4005, 4
      %v4007 = vadd.f32 %v4005, %v4006
      %v4008 = vrot.slane %v4007, 2
      %v4009 = vadd.f32 %v4007, %v4008
      %v4010 = vrot.slane %v4009, 1
      %v4011 = vadd.f32 %v4009, %v4010
      %v4012 = vmul.f32 %v3934, 0.0069444445
      %v4013 = vmul.f32 %v4011, 0.0069444445
      %v4014 = vmul.f32 %v4012, %v4012
      %v4015 = vsub.f32 %v4013, %v4014
      %v4016 = vmax.f32 %v4015, 0.0
      %v4017 = vadd.f32 %v4016, 1e-05
      %v4018 = vrsqrt.pop %v4017
      %v4019 = vsub.f32 %v3834, %v4012
      %v4020 = vsub.f32 %v3835, %v4012
      %v4021 = vsub.f32 %v3836, %v4012
      %v4022 = vsub.f32 %v3837, %v4012
      %v4023 = vsub.f32 %v3838, %v4012
      %v4024 = vsub.f32 %v3839, %v4012
      %v4025 = vsub.f32 %v3840, %v4012
      %v4026 = vsub.f32 %v3841, %v4012
      %v4027 = vsub.f32 %v3842, %v4012
      %v4028 = vsub.f32 %v3843, %v4012
      %v4029 = vsub.f32 %v3844, %v4012
      %v4030 = vsub.f32 %v3845, %v4012
      %v4031 = vsub.f32 %v3846, %v4012
      %v4032 = vsub.f32 %v3847, %v4012
      %v4033 = vsub.f32 %v3848, %v4012
      %v4034 = vsub.f32 %v3849, %v4012
      %v4035 = vsub.f32 %v3850, %v4012
      %v4036 = vsub.f32 %v3851, %v4012
      %v4037 = vsub.f32 %v3852, %v4012
      %v4038 = vsub.f32 %v3853, %v4012
      %v4039 = vsub.f32 %v3854, %v4012
      %v4040 = vsub.f32 %v3855, %v4012
      %v4041 = vsub.f32 %v3856, %v4012
      %v4042 = vsub.f32 %v3857, %v4012
      %v4043 = vmul.f32 %v4018, %v3760
      %v4044 = vlaneseq
      %v4045 = vshrl.u32 %v4044, 7
      %v4046 = vsub.s32 0, %v4045
      %v4047 = vrot.slane %v4043, %v4046
      %v4048 = vmul.f32 %v4019, %v4047
      %v4049 = vmul.f32 %v4020, %v4047
      %v4050 = vmul.f32 %v4021, %v4047
      %v4051 = vmul.f32 %v4022, %v4047
      %v4052 = vmul.f32 %v4023, %v4047
      %v4053 = vmul.f32 %v4024, %v4047
      %v4054 = vmul.f32 %v4025, %v4047
      %v4055 = vmul.f32 %v4026, %v4047
      %v4056 = vmul.f32 %v4027, %v4047
      %v4057 = vmul.f32 %v4028, %v4047
      %v4058 = vmul.f32 %v4029, %v4047
      %v4059 = vmul.f32 %v4030, %v4047
      %v4060 = vmul.f32 %v4031, %v4047
      %v4061 = vmul.f32 %v4032, %v4047
      %v4062 = vmul.f32 %v4033, %v4047
      %v4063 = vmul.f32 %v4034, %v4047
      %v4064 = vmul.f32 %v4035, %v4047
      %v4065 = vmul.f32 %v4036, %v4047
      %v4066 = vmul.f32 %v4037, %v4047
      %v4067 = vmul.f32 %v4038, %v4047
      %v4068 = vmul.f32 %v4039, %v4047
      %v4069 = vmul.f32 %v4040, %v4047
      %v4070 = vmul.f32 %v4041, %v4047
      %v4071 = vmul.f32 %v4042, %v4047
      %v4072 = vlaneseq
      %v4073 = vshrl.u32 %v4072, 7
      %v4074 = vsub.s32 0, %v4073
      %v4075 = vrot.slane %v3761, %v4074
      %v4076 = vadd.f32 %v4048, %v4075
      %v4077 = vadd.f32 %v4049, %v4075
      %v4078 = vadd.f32 %v4050, %v4075
      %v4079 = vadd.f32 %v4051, %v4075
      %v4080 = vadd.f32 %v4052, %v4075
      %v4081 = vadd.f32 %v4053, %v4075
      %v4082 = vadd.f32 %v4054, %v4075
      %v4083 = vadd.f32 %v4055, %v4075
      %v4084 = vadd.f32 %v4056, %v4075
      %v4085 = vadd.f32 %v4057, %v4075
      %v4086 = vadd.f32 %v4058, %v4075
      %v4087 = vadd.f32 %v4059, %v4075
      %v4088 = vadd.f32 %v4060, %v4075
      %v4089 = vadd.f32 %v4061, %v4075
      %v4090 = vadd.f32 %v4062, %v4075
      %v4091 = vadd.f32 %v4063, %v4075
      %v4092 = vadd.f32 %v4064, %v4075
      %v4093 = vadd.f32 %v4065, %v4075
      %v4094 = vadd.f32 %v4066, %v4075
      %v4095 = vadd.f32 %v4067, %v4075
      %v4096 = vadd.f32 %v4068, %v4075
      %v4097 = vadd.f32 %v4069, %v4075
      %v4098 = vadd.f32 %v4070, %v4075
      %v4099 = vadd.f32 %v4071, %v4075
      %4100 = vst.msk [vmem:[%s217] sm:$0xff] %vm611, %v4076
      %4101 = vst.msk [vmem:[%s217 + $0x8] sm:$0xff] %vm611, %v4077
      %4102 = vst.msk [vmem:[%s217 + $0x10] sm:$0xff] %vm611, %v4078
      %4103 = vst.msk [vmem:[%s217 + $0x18] sm:$0xff] %vm611, %v4079
      %4104 = vst.msk [vmem:[%s217 + $0x20] sm:$0xff] %vm611, %v4080
      %4105 = vst.msk [vmem:[%s217 + $0x28] sm:$0xff] %vm611, %v4081
      %4106 = vst.msk [vmem:[%s217 + $0x30] sm:$0xff] %vm611, %v4082
      %4107 = vst.msk [vmem:[%s217 + $0x38] sm:$0xff] %vm611, %v4083
      %4108 = vst.msk [vmem:[%s217 + $0x40] sm:$0xff] %vm611, %v4084
      %4109 = vst.msk [vmem:[%s217 + $0x48] sm:$0xff] %vm611, %v4085
      %4110 = vst.msk [vmem:[%s217 + $0x50] sm:$0xff] %vm611, %v4086
      %4111 = vst.msk [vmem:[%s217 + $0x58] sm:$0xff] %vm611, %v4087
      %4112 = vst.msk [vmem:[%s217 + $0x60] sm:$0xff] %vm611, %v4088
      %4113 = vst.msk [vmem:[%s217 + $0x68] sm:$0xff] %vm611, %v4089
      %4114 = vst.msk [vmem:[%s217 + $0x70] sm:$0xff] %vm611, %v4090
      %4115 = vst.msk [vmem:[%s217 + $0x78] sm:$0xff] %vm611, %v4091
      %4116 = vst.msk [vmem:[%s217 + $0x80] sm:$0xff] %vm611, %v4092
      %4117 = vst.msk [vmem:[%s217 + $0x88] sm:$0xff] %vm611, %v4093
      %4118 = vst.msk [vmem:[%s217 + $0x90] sm:$0xff] %vm611, %v4094
      %4119 = vst.msk [vmem:[%s217 + $0x98] sm:$0xff] %vm611, %v4095
      %4120 = vst.msk [vmem:[%s217 + $0xa0] sm:$0xff] %vm611, %v4096
      %4121 = vst.msk [vmem:[%s217 + $0xa8] sm:$0xff] %vm611, %v4097
      %4122 = vst.msk [vmem:[%s217 + $0xb0] sm:$0xff] %vm611, %v4098
      %4123 = vst.msk [vmem:[%s217 + $0xb8] sm:$0xff] %vm611, %v4099
      %p4124 = scmp.lt.s32.totalorder %s15, 1
      %s4125 = scalar_select %p4124, %s15, 1
      %s4126 = smul.addr %s4125, 24
      %s4127 = smul.addr %s4126, 8
      %s4128 = scalar_lea.vmem %s4, %s4127
      // Predicated region
      $region37: #{up_block_forward.1} parent=35 // pred_check
        %p4129 = pneg %p127
      $region38: #{up_block_forward.1} parent=35 // pred_check_branch
        %4131 = sbr.rel (%p4129) target = $region40
      $region39: #{up_block_forward.1} parent=35 // pred_region
        _
      $region40: #{up_block_forward.1} parent=35 // pred_fallthru
        _
    $region36: #{up_block_forward.1} parent=5 // pred_fallthru
      _
    %p4132 = scmp.le.s32.totalorder 2, %s10
    // Predicated region
    $region41: #{up_block_forward.1} parent=5 // pred_check
      %p4133 = pneg %p4132
    $region42: #{up_block_forward.1} parent=5 // pred_check_branch
      %4135 = sbr.rel (%p4133) target = $region44
    $region43: #{up_block_forward.1} parent=5 // pred_region
      %s4136 = ssub.s32 %s10, 2
      // Predicated region
      $region45: #{up_block_forward.1} parent=43 // pred_check
        %p4137 = pneg %p133
      $region46: #{up_block_forward.1} parent=43 // pred_check_branch
        %4139 = sbr.rel (%p4137) target = $region48
      $region47: #{up_block_forward.1} parent=43 // pred_region
        %p4140 = scmp.lt.s32.totalorder %s16, 1
        %s4141 = scalar_select %p4140, %s16, 1
        %s4142 = smul.addr %s4141, 24
        %s4143 = smul.addr %s4142, 8
        %s4144 = scalar_lea.vmem %s4, %s4143
      $region48: #{up_block_forward.1} parent=43 // pred_fallthru
        _
    $region44: #{up_block_forward.1} parent=5 // pred_fallthru
      _
  $region6: #{up_block_forward.1} parent=0 // loop_footer
    %s14 = sadd.s32 1, %s10
  $region7: #{up_block_forward.1} parent=0 // loop_footer_branch
    %9 = sbr.rel target = $region3
  $region8: #{up_block_forward.1} parent=0 // loop_exit
    _

</llo_original>
